<compile_context>
chip_gen: v7x
topology: tpu7x:2x2x1
jax: 0.10.0
libtpu: 0.0.40
codegen_flags: <defaults>
</compile_context>

<pallas_src>
import functools

import jax
import jax.numpy as jnp
from jax.experimental import pallas as pl
from jax.experimental.pallas import tpu as pltpu


def transformer_encoder_kernel(
    x_ref, wqkv_ref, bqkv_ref, wo_ref, bo_ref, g1_ref, be1_ref,
    wf1_ref, bf1_ref, wf2_ref, bf2_ref, g2_ref, be2_ref,
    wfin_ref, bfin_ref, o_ref, *, num_heads, eps, neg_slope,
):
    x = x_ref[...].astype(jnp.float32)              # [S, D]
    S, D = x.shape
    hd = D // num_heads
    scale = 1.0 / (hd ** 0.5)

    # ---- fused QKV projection ------------------------------------------
    qkv = jnp.dot(x, wqkv_ref[...], preferred_element_type=jnp.float32)
    qkv = qkv + bqkv_ref[...]                       # [S, 3D]

    # ---- multi-head self-attention (static unroll over heads) ----------
    wo = wo_ref[...]                                # [D, D]
    attn = jnp.zeros((S, D), dtype=jnp.float32)
    for h in range(num_heads):
        lo = h * hd
        qh = qkv[:, lo:lo + hd]                     # [S, hd]
        kh = qkv[:, D + lo:D + lo + hd]             # [S, hd]
        vh = qkv[:, 2 * D + lo:2 * D + lo + hd]     # [S, hd]
        # scores = qh @ kh^T  (RHS-transposed matmul, no explicit transpose)
        scores = jax.lax.dot_general(
            qh, kh, (((1,), (1,)), ((), ())),
            preferred_element_type=jnp.float32) * scale          # [S, S]
        m = jnp.max(scores, axis=-1, keepdims=True)
        p = jnp.exp(scores - m)
        p = p / jnp.sum(p, axis=-1, keepdims=True)
        head = jnp.dot(p, vh, preferred_element_type=jnp.float32)  # [S, hd]
        # out_proj of concatenated heads == sum_h head_h @ Wo[h*hd:(h+1)*hd, :]
        attn = attn + jnp.dot(head, wo[lo:lo + hd, :],
                              preferred_element_type=jnp.float32)
    attn = attn + bo_ref[...]

    # ---- residual + LayerNorm 1 (post-norm) -----------------------------
    y = x + attn
    mu = jnp.mean(y, axis=-1, keepdims=True)
    yc = y - mu
    var = jnp.mean(yc * yc, axis=-1, keepdims=True)
    y = yc * jax.lax.rsqrt(var + eps) * g1_ref[...] + be1_ref[...]

    # ---- feed-forward: Linear -> ReLU -> Linear --------------------------
    hdn = jnp.dot(y, wf1_ref[...], preferred_element_type=jnp.float32)
    hdn = jnp.maximum(hdn + bf1_ref[...], 0.0)                     # [S, DFF]
    ff = jnp.dot(hdn, wf2_ref[...], preferred_element_type=jnp.float32)
    ff = ff + bf2_ref[...]

    # ---- residual + LayerNorm 2 ------------------------------------------
    z = y + ff
    mu2 = jnp.mean(z, axis=-1, keepdims=True)
    zc = z - mu2
    var2 = jnp.mean(zc * zc, axis=-1, keepdims=True)
    z = zc * jax.lax.rsqrt(var2 + eps) * g2_ref[...] + be2_ref[...]

    # ---- LeakyReLU + final Linear -----------------------------------------
    z = jnp.where(z >= 0.0, z, neg_slope * z)
    out = jnp.dot(z, wfin_ref[...], preferred_element_type=jnp.float32)
    out = out + bfin_ref[...]
    o_ref[...] = out.astype(o_ref.dtype)


def transformer_forward(x, edge_index, params, *, num_heads=2,
                        eps=1e-5, neg_slope=0.01):
    # edge_index is accepted for signature parity; PyTorch forward ignores it.
    del edge_index
    (wqkv, bqkv, wo, bo, g1, be1, wf1, bf1, wf2, bf2, g2, be2,
     wfin, bfin) = params
    B, S, D = x.shape
    DFF = wf1.shape[1]
    O = wfin.shape[1]

    kernel = functools.partial(
        transformer_encoder_kernel,
        num_heads=num_heads, eps=eps, neg_slope=neg_slope)

    def const(shape):
        return pl.BlockSpec(shape, lambda b: (0, 0))   # resident weight block

    out = pl.pallas_call(
        kernel,
        out_shape=jax.ShapeDtypeStruct((B, S, O), x.dtype),
        grid_spec=pltpu.PrefetchScalarGridSpec(
            num_scalar_prefetch=0,
            grid=(B,),
            in_specs=[
                pl.BlockSpec((None, S, D), lambda b: (b, 0, 0)),  # x slab per batch
                const((D, 3 * D)),        # fused QKV weight
                const((1, 3 * D)),        # fused QKV bias
                const((D, D)),            # out_proj weight
                const((1, D)),            # out_proj bias
                const((1, D)),            # LayerNorm1 gamma
                const((1, D)),            # LayerNorm1 beta
                const((D, DFF)),          # FFN linear1 weight
                const((1, DFF)),          # FFN linear1 bias
                const((DFF, D)),          # FFN linear2 weight
                const((1, D)),            # FFN linear2 bias
                const((1, D)),            # LayerNorm2 gamma
                const((1, D)),            # LayerNorm2 beta
                const((D, O)),            # final_layer weight
                const((1, O)),            # final_layer bias
            ],
            out_specs=pl.BlockSpec((None, S, O), lambda b: (b, 0, 0)),
        ),
        compiler_params=pltpu.CompilerParams(
            dimension_semantics=("parallel",),
        ),
    )(x, *params)

    # PyTorch applies .squeeze() before final_layer; the Linear acts on the
    # last dim, so squeezing the (B, S) axes of the result is equivalent.
    squeeze_axes = tuple(ax for ax, n in enumerate((B, S)) if n == 1)
    return jnp.squeeze(out, axis=squeeze_axes) if squeeze_axes else out


# ------------------------- pure-JAX reference --------------------------------
def _layer_norm(v, gamma, beta, eps):
    mu = jnp.mean(v, axis=-1, keepdims=True)
    var = jnp.mean((v - mu) ** 2, axis=-1, keepdims=True)
    return (v - mu) * jax.lax.rsqrt(var + eps) * gamma + beta


def reference(x, params, *, num_heads=2, eps=1e-5, neg_slope=0.01):
    (wqkv, bqkv, wo, bo, g1, be1, wf1, bf1, wf2, bf2, g2, be2,
     wfin, bfin) = params
    B, S, D = x.shape
    hd = D // num_heads
    hp = jax.lax.Precision.HIGHEST

    qkv = jnp.einsum('bsd,de->bse', x, wqkv, precision=hp) + bqkv[0]
    q, k, v = qkv[..., :D], qkv[..., D:2 * D], qkv[..., 2 * D:]
    split = lambda t: t.reshape(B, S, num_heads, hd).transpose(0, 2, 1, 3)
    qh, kh, vh = split(q), split(k), split(v)
    scores = jnp.einsum('bhqe,bhke->bhqk', qh, kh, precision=hp) / (hd ** 0.5)
    p = jax.nn.softmax(scores, axis=-1)
    attn = jnp.einsum('bhqk,bhke->bhqe', p, vh, precision=hp)
    attn = attn.transpose(0, 2, 1, 3).reshape(B, S, D)
    attn = jnp.einsum('bsd,de->bse', attn, wo, precision=hp) + bo[0]

    y = _layer_norm(x + attn, g1[0], be1[0], eps)
    ff = jnp.maximum(jnp.einsum('bsd,df->bsf', y, wf1, precision=hp) + bf1[0], 0.0)
    ff = jnp.einsum('bsf,fd->bsd', ff, wf2, precision=hp) + bf2[0]
    z = _layer_norm(y + ff, g2[0], be2[0], eps)
    z = jnp.where(z >= 0.0, z, neg_slope * z)
    out = jnp.einsum('bsd,do->bso', z, wfin, precision=hp) + bfin[0]
    squeeze_axes = tuple(ax for ax, n in enumerate((B, S)) if n == 1)
    return jnp.squeeze(out, axis=squeeze_axes) if squeeze_axes else out


if __name__ == "__main__":
    # Small shapes consistent with the module: Transformer(input=32, hidden=64,
    # output=8, layers=1, heads=2); batch_first input [B, S, D].
    B, S = 2, 8
    D_IN, OUT, HEADS = 32, 8, 2
    DFF = 2048   # nn.TransformerEncoderLayer default dim_feedforward

    key = jax.random.PRNGKey(0)
    ks = jax.random.split(key, 12)

    x = jax.random.normal(ks[0], (B, S, D_IN), dtype=jnp.float32)
    edge_index = jnp.zeros((2, 4), dtype=jnp.int32)   # unused by forward()

    wqkv = 0.10 * jax.random.normal(ks[1], (D_IN, 3 * D_IN), dtype=jnp.float32)
    bqkv = 0.05 * jax.random.normal(ks[2], (1, 3 * D_IN), dtype=jnp.float32)
    wo   = 0.10 * jax.random.normal(ks[3], (D_IN, D_IN), dtype=jnp.float32)
    bo   = 0.05 * jax.random.normal(ks[4], (1, D_IN), dtype=jnp.float32)
    g1   = jnp.ones((1, D_IN), dtype=jnp.float32)
    be1  = jnp.zeros((1, D_IN), dtype=jnp.float32)
    wf1  = 0.05 * jax.random.normal(ks[5], (D_IN, DFF), dtype=jnp.float32)
    bf1  = 0.05 * jax.random.normal(ks[6], (1, DFF), dtype=jnp.float32)
    wf2  = 0.02 * jax.random.normal(ks[7], (DFF, D_IN), dtype=jnp.float32)
    bf2  = 0.05 * jax.random.normal(ks[8], (1, D_IN), dtype=jnp.float32)
    g2   = jnp.ones((1, D_IN), dtype=jnp.float32)
    be2  = jnp.zeros((1, D_IN), dtype=jnp.float32)
    wfin = 0.10 * jax.random.normal(ks[9], (D_IN, OUT), dtype=jnp.float32)
    bfin = 0.05 * jax.random.normal(ks[10], (1, OUT), dtype=jnp.float32)

    params = (wqkv, bqkv, wo, bo, g1, be1, wf1, bf1, wf2, bf2, g2, be2,
              wfin, bfin)

    out = transformer_forward(x, edge_index, params, num_heads=HEADS)
    out = jax.block_until_ready(out)

    ref = reference(x, params, num_heads=HEADS)
    assert out.shape == ref.shape, (out.shape, ref.shape)
    assert jnp.allclose(out, ref, atol=1e-3, rtol=1e-3), (
        float(jnp.max(jnp.abs(out - ref))))
    print("KERNEL_OK")
</pallas_src>

<mosaic_0001>
module attributes {stable_mosaic.version = 11 : i64} {
  func.func @transformer_encoder_kernel(%arg0: i32, %arg1: memref<1x8x32xf32, #tpu.memory_space<vmem>>, %arg2: memref<32x96xf32, #tpu.memory_space<vmem>>, %arg3: memref<1x96xf32, #tpu.memory_space<vmem>>, %arg4: memref<32x32xf32, #tpu.memory_space<vmem>>, %arg5: memref<1x32xf32, #tpu.memory_space<vmem>>, %arg6: memref<1x32xf32, #tpu.memory_space<vmem>>, %arg7: memref<1x32xf32, #tpu.memory_space<vmem>>, %arg8: memref<32x2048xf32, #tpu.memory_space<vmem>>, %arg9: memref<1x2048xf32, #tpu.memory_space<vmem>>, %arg10: memref<2048x32xf32, #tpu.memory_space<vmem>>, %arg11: memref<1x32xf32, #tpu.memory_space<vmem>>, %arg12: memref<1x32xf32, #tpu.memory_space<vmem>>, %arg13: memref<1x32xf32, #tpu.memory_space<vmem>>, %arg14: memref<32x8xf32, #tpu.memory_space<vmem>>, %arg15: memref<1x8xf32, #tpu.memory_space<vmem>>, %arg16: memref<1x8x8xf32, #tpu.memory_space<vmem>>) attributes {dimension_semantics = [#tpu.dimension_semantics<parallel>], iteration_bounds = array<i64: 2>, scalar_prefetch = 0 : i64, scratch_operands = 0 : i64, tpu.core_type = #tpu.core_type<tc>, window_params = [{transform_indices = @transform_0, window_bounds = array<i64: 1, 8, 32>}, {pipeline_mode = #tpu.pipeline_mode<synchronous>, transform_indices = @transform_1, window_bounds = array<i64: 32, 96>}, {pipeline_mode = #tpu.pipeline_mode<synchronous>, transform_indices = @transform_2, window_bounds = array<i64: 1, 96>}, {pipeline_mode = #tpu.pipeline_mode<synchronous>, transform_indices = @transform_3, window_bounds = array<i64: 32, 32>}, {pipeline_mode = #tpu.pipeline_mode<synchronous>, transform_indices = @transform_4, window_bounds = array<i64: 1, 32>}, {pipeline_mode = #tpu.pipeline_mode<synchronous>, transform_indices = @transform_5, window_bounds = array<i64: 1, 32>}, {pipeline_mode = #tpu.pipeline_mode<synchronous>, transform_indices = @transform_6, window_bounds = array<i64: 1, 32>}, {pipeline_mode = #tpu.pipeline_mode<synchronous>, transform_indices = @transform_7, window_bounds = array<i64: 32, 2048>}, {pipeline_mode = #tpu.pipeline_mode<synchronous>, transform_indices = @transform_8, window_bounds = array<i64: 1, 2048>}, {pipeline_mode = #tpu.pipeline_mode<synchronous>, transform_indices = @transform_9, window_bounds = array<i64: 2048, 32>}, {pipeline_mode = #tpu.pipeline_mode<synchronous>, transform_indices = @transform_10, window_bounds = array<i64: 1, 32>}, {pipeline_mode = #tpu.pipeline_mode<synchronous>, transform_indices = @transform_11, window_bounds = array<i64: 1, 32>}, {pipeline_mode = #tpu.pipeline_mode<synchronous>, transform_indices = @transform_12, window_bounds = array<i64: 1, 32>}, {pipeline_mode = #tpu.pipeline_mode<synchronous>, transform_indices = @transform_13, window_bounds = array<i64: 32, 8>}, {pipeline_mode = #tpu.pipeline_mode<synchronous>, transform_indices = @transform_14, window_bounds = array<i64: 1, 8>}, {transform_indices = @transform_15, window_bounds = array<i64: 1, 8, 8>}]} {
    %c0 = arith.constant 0 : index
    %c0_0 = arith.constant 0 : index
    %c0_1 = arith.constant 0 : index
    %0 = vector.load %arg1[%c0, %c0_0, %c0_1] : memref<1x8x32xf32, #tpu.memory_space<vmem>>, vector<1x8x32xf32>
    %1 = vector.shape_cast %0 : vector<1x8x32xf32> to vector<8x32xf32>
    %c0_2 = arith.constant 0 : index
    %c0_3 = arith.constant 0 : index
    %2 = vector.load %arg2[%c0_2, %c0_3] : memref<32x96xf32, #tpu.memory_space<vmem>>, vector<32x96xf32>
    %cst = arith.constant dense<0.000000e+00> : vector<8x96xf32>
    %3 = tpu.matmul %1, %2, %cst {dimension_numbers = #tpu.dot_dimension_numbers<[1], [0], [0], [1], [0, 0, 1, 1], [], []>} : vector<8x32xf32>, vector<32x96xf32>, vector<8x96xf32> -> vector<8x96xf32>
    %c0_4 = arith.constant 0 : index
    %c0_5 = arith.constant 0 : index
    %4 = vector.load %arg3[%c0_4, %c0_5] : memref<1x96xf32, #tpu.memory_space<vmem>>, vector<1x96xf32>
    %5 = vector.broadcast %4 : vector<1x96xf32> to vector<8x96xf32>
    %6 = arith.addf %3, %5 : vector<8x96xf32>
    %c0_6 = arith.constant 0 : index
    %c0_7 = arith.constant 0 : index
    %7 = vector.load %arg4[%c0_6, %c0_7] : memref<32x32xf32, #tpu.memory_space<vmem>>, vector<32x32xf32>
    %cst_8 = arith.constant 0.000000e+00 : f32
    %8 = vector.broadcast %cst_8 : f32 to vector<8x32xf32>
    %9 = vector.extract_strided_slice %6 {offsets = [0, 0], sizes = [8, 16], strides = [1, 1]} : vector<8x96xf32> to vector<8x16xf32>
    %10 = vector.extract_strided_slice %6 {offsets = [0, 32], sizes = [8, 16], strides = [1, 1]} : vector<8x96xf32> to vector<8x16xf32>
    %11 = vector.extract_strided_slice %6 {offsets = [0, 64], sizes = [8, 16], strides = [1, 1]} : vector<8x96xf32> to vector<8x16xf32>
    %cst_9 = arith.constant dense<0.000000e+00> : vector<8x8xf32>
    %12 = tpu.matmul %9, %10, %cst_9 {dimension_numbers = #tpu.dot_dimension_numbers<[1], [1], [0], [0], [0, 0, 1, 0], [], []>} : vector<8x16xf32>, vector<8x16xf32>, vector<8x8xf32> -> vector<8x8xf32>
    %cst_10 = arith.constant 2.500000e-01 : f32
    %13 = vector.broadcast %cst_10 : f32 to vector<8x8xf32>
    %14 = arith.mulf %12, %13 : vector<8x8xf32>
    %cst_11 = arith.constant dense<0xFF800000> : vector<8xf32>
    %15 = vector.multi_reduction <maximumf>, %14, %cst_11 [1] : vector<8x8xf32> to vector<8xf32>
    %16 = vector.shape_cast %15 : vector<8xf32> to vector<8x1xf32>
    %17 = vector.broadcast %16 : vector<8x1xf32> to vector<8x8xf32>
    %18 = arith.subf %14, %17 : vector<8x8xf32>
    %19 = math.exp %18 : vector<8x8xf32>
    %cst_12 = arith.constant dense<0.000000e+00> : vector<8xf32>
    %20 = vector.multi_reduction <add>, %19, %cst_12 [1] : vector<8x8xf32> to vector<8xf32>
    %21 = vector.shape_cast %20 : vector<8xf32> to vector<8x1xf32>
    %22 = vector.broadcast %21 : vector<8x1xf32> to vector<8x8xf32>
    %23 = arith.divf %19, %22 : vector<8x8xf32>
    %cst_13 = arith.constant dense<0.000000e+00> : vector<8x16xf32>
    %24 = tpu.matmul %23, %11, %cst_13 {dimension_numbers = #tpu.dot_dimension_numbers<[1], [0], [0], [1], [0, 0, 1, 1], [], []>} : vector<8x8xf32>, vector<8x16xf32>, vector<8x16xf32> -> vector<8x16xf32>
    %25 = vector.extract_strided_slice %7 {offsets = [0, 0], sizes = [16, 32], strides = [1, 1]} : vector<32x32xf32> to vector<16x32xf32>
    %cst_14 = arith.constant dense<0.000000e+00> : vector<8x32xf32>
    %26 = tpu.matmul %24, %25, %cst_14 {dimension_numbers = #tpu.dot_dimension_numbers<[1], [0], [0], [1], [0, 0, 1, 1], [], []>} : vector<8x16xf32>, vector<16x32xf32>, vector<8x32xf32> -> vector<8x32xf32>
    %27 = arith.addf %8, %26 : vector<8x32xf32>
    %28 = vector.extract_strided_slice %6 {offsets = [0, 16], sizes = [8, 16], strides = [1, 1]} : vector<8x96xf32> to vector<8x16xf32>
    %29 = vector.extract_strided_slice %6 {offsets = [0, 48], sizes = [8, 16], strides = [1, 1]} : vector<8x96xf32> to vector<8x16xf32>
    %30 = vector.extract_strided_slice %6 {offsets = [0, 80], sizes = [8, 16], strides = [1, 1]} : vector<8x96xf32> to vector<8x16xf32>
    %cst_15 = arith.constant dense<0.000000e+00> : vector<8x8xf32>
    %31 = tpu.matmul %28, %29, %cst_15 {dimension_numbers = #tpu.dot_dimension_numbers<[1], [1], [0], [0], [0, 0, 1, 0], [], []>} : vector<8x16xf32>, vector<8x16xf32>, vector<8x8xf32> -> vector<8x8xf32>
    %cst_16 = arith.constant 2.500000e-01 : f32
    %32 = vector.broadcast %cst_16 : f32 to vector<8x8xf32>
    %33 = arith.mulf %31, %32 : vector<8x8xf32>
    %cst_17 = arith.constant dense<0xFF800000> : vector<8xf32>
    %34 = vector.multi_reduction <maximumf>, %33, %cst_17 [1] : vector<8x8xf32> to vector<8xf32>
    %35 = vector.shape_cast %34 : vector<8xf32> to vector<8x1xf32>
    %36 = vector.broadcast %35 : vector<8x1xf32> to vector<8x8xf32>
    %37 = arith.subf %33, %36 : vector<8x8xf32>
    %38 = math.exp %37 : vector<8x8xf32>
    %cst_18 = arith.constant dense<0.000000e+00> : vector<8xf32>
    %39 = vector.multi_reduction <add>, %38, %cst_18 [1] : vector<8x8xf32> to vector<8xf32>
    %40 = vector.shape_cast %39 : vector<8xf32> to vector<8x1xf32>
    %41 = vector.broadcast %40 : vector<8x1xf32> to vector<8x8xf32>
    %42 = arith.divf %38, %41 : vector<8x8xf32>
    %cst_19 = arith.constant dense<0.000000e+00> : vector<8x16xf32>
    %43 = tpu.matmul %42, %30, %cst_19 {dimension_numbers = #tpu.dot_dimension_numbers<[1], [0], [0], [1], [0, 0, 1, 1], [], []>} : vector<8x8xf32>, vector<8x16xf32>, vector<8x16xf32> -> vector<8x16xf32>
    %44 = vector.extract_strided_slice %7 {offsets = [16, 0], sizes = [16, 32], strides = [1, 1]} : vector<32x32xf32> to vector<16x32xf32>
    %cst_20 = arith.constant dense<0.000000e+00> : vector<8x32xf32>
    %45 = tpu.matmul %43, %44, %cst_20 {dimension_numbers = #tpu.dot_dimension_numbers<[1], [0], [0], [1], [0, 0, 1, 1], [], []>} : vector<8x16xf32>, vector<16x32xf32>, vector<8x32xf32> -> vector<8x32xf32>
    %46 = arith.addf %27, %45 : vector<8x32xf32>
    %c0_21 = arith.constant 0 : index
    %c0_22 = arith.constant 0 : index
    %47 = vector.load %arg5[%c0_21, %c0_22] : memref<1x32xf32, #tpu.memory_space<vmem>>, vector<1x32xf32>
    %48 = vector.broadcast %47 : vector<1x32xf32> to vector<8x32xf32>
    %49 = arith.addf %46, %48 : vector<8x32xf32>
    %50 = arith.addf %1, %49 : vector<8x32xf32>
    %cst_23 = arith.constant dense<0.000000e+00> : vector<8xf32>
    %51 = vector.multi_reduction <add>, %50, %cst_23 [1] : vector<8x32xf32> to vector<8xf32>
    %52 = vector.shape_cast %51 : vector<8xf32> to vector<8x1xf32>
    %cst_24 = arith.constant 3.200000e+01 : f32
    %53 = vector.broadcast %cst_24 : f32 to vector<8x1xf32>
    %54 = arith.divf %52, %53 : vector<8x1xf32>
    %55 = vector.broadcast %54 : vector<8x1xf32> to vector<8x32xf32>
    %56 = arith.subf %50, %55 : vector<8x32xf32>
    %57 = arith.mulf %56, %56 : vector<8x32xf32>
    %cst_25 = arith.constant dense<0.000000e+00> : vector<8xf32>
    %58 = vector.multi_reduction <add>, %57, %cst_25 [1] : vector<8x32xf32> to vector<8xf32>
    %59 = vector.shape_cast %58 : vector<8xf32> to vector<8x1xf32>
    %cst_26 = arith.constant 3.200000e+01 : f32
    %60 = vector.broadcast %cst_26 : f32 to vector<8x1xf32>
    %61 = arith.divf %59, %60 : vector<8x1xf32>
    %cst_27 = arith.constant 9.99999974E-6 : f32
    %62 = vector.broadcast %cst_27 : f32 to vector<8x1xf32>
    %63 = arith.addf %61, %62 : vector<8x1xf32>
    %64 = math.rsqrt %63 : vector<8x1xf32>
    %65 = vector.broadcast %64 : vector<8x1xf32> to vector<8x32xf32>
    %66 = arith.mulf %56, %65 : vector<8x32xf32>
    %c0_28 = arith.constant 0 : index
    %c0_29 = arith.constant 0 : index
    %67 = vector.load %arg6[%c0_28, %c0_29] : memref<1x32xf32, #tpu.memory_space<vmem>>, vector<1x32xf32>
    %68 = vector.broadcast %67 : vector<1x32xf32> to vector<8x32xf32>
    %69 = arith.mulf %66, %68 : vector<8x32xf32>
    %c0_30 = arith.constant 0 : index
    %c0_31 = arith.constant 0 : index
    %70 = vector.load %arg7[%c0_30, %c0_31] : memref<1x32xf32, #tpu.memory_space<vmem>>, vector<1x32xf32>
    %71 = vector.broadcast %70 : vector<1x32xf32> to vector<8x32xf32>
    %72 = arith.addf %69, %71 : vector<8x32xf32>
    %c0_32 = arith.constant 0 : index
    %c0_33 = arith.constant 0 : index
    %73 = vector.load %arg8[%c0_32, %c0_33] : memref<32x2048xf32, #tpu.memory_space<vmem>>, vector<32x2048xf32>
    %cst_34 = arith.constant dense<0.000000e+00> : vector<8x2048xf32>
    %74 = tpu.matmul %72, %73, %cst_34 {dimension_numbers = #tpu.dot_dimension_numbers<[1], [0], [0], [1], [0, 0, 1, 1], [], []>} : vector<8x32xf32>, vector<32x2048xf32>, vector<8x2048xf32> -> vector<8x2048xf32>
    %c0_35 = arith.constant 0 : index
    %c0_36 = arith.constant 0 : index
    %75 = vector.load %arg9[%c0_35, %c0_36] : memref<1x2048xf32, #tpu.memory_space<vmem>>, vector<1x2048xf32>
    %76 = vector.broadcast %75 : vector<1x2048xf32> to vector<8x2048xf32>
    %77 = arith.addf %74, %76 : vector<8x2048xf32>
    %cst_37 = arith.constant 0.000000e+00 : f32
    %78 = vector.broadcast %cst_37 : f32 to vector<8x2048xf32>
    %79 = arith.maximumf %77, %78 : vector<8x2048xf32>
    %c0_38 = arith.constant 0 : index
    %c0_39 = arith.constant 0 : index
    %80 = vector.load %arg10[%c0_38, %c0_39] : memref<2048x32xf32, #tpu.memory_space<vmem>>, vector<2048x32xf32>
    %cst_40 = arith.constant dense<0.000000e+00> : vector<8x32xf32>
    %81 = tpu.matmul %79, %80, %cst_40 {dimension_numbers = #tpu.dot_dimension_numbers<[1], [0], [0], [1], [0, 0, 1, 1], [], []>} : vector<8x2048xf32>, vector<2048x32xf32>, vector<8x32xf32> -> vector<8x32xf32>
    %c0_41 = arith.constant 0 : index
    %c0_42 = arith.constant 0 : index
    %82 = vector.load %arg11[%c0_41, %c0_42] : memref<1x32xf32, #tpu.memory_space<vmem>>, vector<1x32xf32>
    %83 = vector.broadcast %82 : vector<1x32xf32> to vector<8x32xf32>
    %84 = arith.addf %81, %83 : vector<8x32xf32>
    %85 = arith.addf %72, %84 : vector<8x32xf32>
    %cst_43 = arith.constant dense<0.000000e+00> : vector<8xf32>
    %86 = vector.multi_reduction <add>, %85, %cst_43 [1] : vector<8x32xf32> to vector<8xf32>
    %87 = vector.shape_cast %86 : vector<8xf32> to vector<8x1xf32>
    %cst_44 = arith.constant 3.200000e+01 : f32
    %88 = vector.broadcast %cst_44 : f32 to vector<8x1xf32>
    %89 = arith.divf %87, %88 : vector<8x1xf32>
    %90 = vector.broadcast %89 : vector<8x1xf32> to vector<8x32xf32>
    %91 = arith.subf %85, %90 : vector<8x32xf32>
    %92 = arith.mulf %91, %91 : vector<8x32xf32>
    %cst_45 = arith.constant dense<0.000000e+00> : vector<8xf32>
    %93 = vector.multi_reduction <add>, %92, %cst_45 [1] : vector<8x32xf32> to vector<8xf32>
    %94 = vector.shape_cast %93 : vector<8xf32> to vector<8x1xf32>
    %cst_46 = arith.constant 3.200000e+01 : f32
    %95 = vector.broadcast %cst_46 : f32 to vector<8x1xf32>
    %96 = arith.divf %94, %95 : vector<8x1xf32>
    %cst_47 = arith.constant 9.99999974E-6 : f32
    %97 = vector.broadcast %cst_47 : f32 to vector<8x1xf32>
    %98 = arith.addf %96, %97 : vector<8x1xf32>
    %99 = math.rsqrt %98 : vector<8x1xf32>
    %100 = vector.broadcast %99 : vector<8x1xf32> to vector<8x32xf32>
    %101 = arith.mulf %91, %100 : vector<8x32xf32>
    %c0_48 = arith.constant 0 : index
    %c0_49 = arith.constant 0 : index
    %102 = vector.load %arg12[%c0_48, %c0_49] : memref<1x32xf32, #tpu.memory_space<vmem>>, vector<1x32xf32>
    %103 = vector.broadcast %102 : vector<1x32xf32> to vector<8x32xf32>
    %104 = arith.mulf %101, %103 : vector<8x32xf32>
    %c0_50 = arith.constant 0 : index
    %c0_51 = arith.constant 0 : index
    %105 = vector.load %arg13[%c0_50, %c0_51] : memref<1x32xf32, #tpu.memory_space<vmem>>, vector<1x32xf32>
    %106 = vector.broadcast %105 : vector<1x32xf32> to vector<8x32xf32>
    %107 = arith.addf %104, %106 : vector<8x32xf32>
    %cst_52 = arith.constant 0.000000e+00 : f32
    %108 = vector.broadcast %cst_52 : f32 to vector<8x32xf32>
    %109 = arith.cmpf oge, %107, %108 : vector<8x32xf32>
    %cst_53 = arith.constant 0.00999999977 : f32
    %110 = vector.broadcast %cst_53 : f32 to vector<8x32xf32>
    %111 = arith.mulf %110, %107 : vector<8x32xf32>
    %112 = arith.select %109, %107, %111 : vector<8x32xi1>, vector<8x32xf32>
    %c0_54 = arith.constant 0 : index
    %c0_55 = arith.constant 0 : index
    %113 = vector.load %arg14[%c0_54, %c0_55] : memref<32x8xf32, #tpu.memory_space<vmem>>, vector<32x8xf32>
    %cst_56 = arith.constant dense<0.000000e+00> : vector<8x8xf32>
    %114 = tpu.matmul %112, %113, %cst_56 {dimension_numbers = #tpu.dot_dimension_numbers<[1], [0], [0], [1], [0, 0, 1, 1], [], []>} : vector<8x32xf32>, vector<32x8xf32>, vector<8x8xf32> -> vector<8x8xf32>
    %c0_57 = arith.constant 0 : index
    %c0_58 = arith.constant 0 : index
    %115 = vector.load %arg15[%c0_57, %c0_58] : memref<1x8xf32, #tpu.memory_space<vmem>>, vector<1x8xf32>
    %116 = vector.broadcast %115 : vector<1x8xf32> to vector<8x8xf32>
    %117 = arith.addf %114, %116 : vector<8x8xf32>
    %c0_59 = arith.constant 0 : index
    %c0_60 = arith.constant 0 : index
    %c0_61 = arith.constant 0 : index
    %118 = vector.load %arg16[%c0_59, %c0_60, %c0_61] : memref<1x8x8xf32, #tpu.memory_space<vmem>>, vector<1x8x8xf32>
    %119 = vector.shape_cast %118 : vector<1x8x8xf32> to vector<8x8xf32>
    %120 = vector.shape_cast %117 : vector<8x8xf32> to vector<1x8x8xf32>
    tpu.vector_store %arg16[%c0_59, %c0_60, %c0_61], %120 {strides = array<i32>} : memref<1x8x8xf32, #tpu.memory_space<vmem>>, vector<1x8x8xf32>,
    return
  }
  func.func @transform_0(%arg0: i32) -> (i32, i32, i32) {
    %c0_i32 = arith.constant 0 : i32
    %c0_i32_0 = arith.constant 0 : i32
    %c0_i32_1 = arith.constant 0 : i32
    return %arg0, %c0_i32, %c0_i32_0 : i32, i32, i32
  }
  func.func @transform_1(%arg0: i32) -> (i32, i32) {
    %c0_i32 = arith.constant 0 : i32
    %c0_i32_0 = arith.constant 0 : i32
    %c0_i32_1 = arith.constant 0 : i32
    return %c0_i32, %c0_i32_0 : i32, i32
  }
  func.func @transform_2(%arg0: i32) -> (i32, i32) {
    %c0_i32 = arith.constant 0 : i32
    %c0_i32_0 = arith.constant 0 : i32
    %c0_i32_1 = arith.constant 0 : i32
    return %c0_i32, %c0_i32_0 : i32, i32
  }
  func.func @transform_3(%arg0: i32) -> (i32, i32) {
    %c0_i32 = arith.constant 0 : i32
    %c0_i32_0 = arith.constant 0 : i32
    %c0_i32_1 = arith.constant 0 : i32
    return %c0_i32, %c0_i32_0 : i32, i32
  }
  func.func @transform_4(%arg0: i32) -> (i32, i32) {
    %c0_i32 = arith.constant 0 : i32
    %c0_i32_0 = arith.constant 0 : i32
    %c0_i32_1 = arith.constant 0 : i32
    return %c0_i32, %c0_i32_0 : i32, i32
  }
  func.func @transform_5(%arg0: i32) -> (i32, i32) {
    %c0_i32 = arith.constant 0 : i32
    %c0_i32_0 = arith.constant 0 : i32
    %c0_i32_1 = arith.constant 0 : i32
    return %c0_i32, %c0_i32_0 : i32, i32
  }
  func.func @transform_6(%arg0: i32) -> (i32, i32) {
    %c0_i32 = arith.constant 0 : i32
    %c0_i32_0 = arith.constant 0 : i32
    %c0_i32_1 = arith.constant 0 : i32
    return %c0_i32, %c0_i32_0 : i32, i32
  }
  func.func @transform_7(%arg0: i32) -> (i32, i32) {
    %c0_i32 = arith.constant 0 : i32
    %c0_i32_0 = arith.constant 0 : i32
    %c0_i32_1 = arith.constant 0 : i32
    return %c0_i32, %c0_i32_0 : i32, i32
  }
  func.func @transform_8(%arg0: i32) -> (i32, i32) {
    %c0_i32 = arith.constant 0 : i32
    %c0_i32_0 = arith.constant 0 : i32
    %c0_i32_1 = arith.constant 0 : i32
    return %c0_i32, %c0_i32_0 : i32, i32
  }
  func.func @transform_9(%arg0: i32) -> (i32, i32) {
    %c0_i32 = arith.constant 0 : i32
    %c0_i32_0 = arith.constant 0 : i32
    %c0_i32_1 = arith.constant 0 : i32
    return %c0_i32, %c0_i32_0 : i32, i32
  }
  func.func @transform_10(%arg0: i32) -> (i32, i32) {
    %c0_i32 = arith.constant 0 : i32
    %c0_i32_0 = arith.constant 0 : i32
    %c0_i32_1 = arith.constant 0 : i32
    return %c0_i32, %c0_i32_0 : i32, i32
  }
  func.func @transform_11(%arg0: i32) -> (i32, i32) {
    %c0_i32 = arith.constant 0 : i32
    %c0_i32_0 = arith.constant 0 : i32
    %c0_i32_1 = arith.constant 0 : i32
    return %c0_i32, %c0_i32_0 : i32, i32
  }
  func.func @transform_12(%arg0: i32) -> (i32, i32) {
    %c0_i32 = arith.constant 0 : i32
    %c0_i32_0 = arith.constant 0 : i32
    %c0_i32_1 = arith.constant 0 : i32
    return %c0_i32, %c0_i32_0 : i32, i32
  }
  func.func @transform_13(%arg0: i32) -> (i32, i32) {
    %c0_i32 = arith.constant 0 : i32
    %c0_i32_0 = arith.constant 0 : i32
    %c0_i32_1 = arith.constant 0 : i32
    return %c0_i32, %c0_i32_0 : i32, i32
  }
  func.func @transform_14(%arg0: i32) -> (i32, i32) {
    %c0_i32 = arith.constant 0 : i32
    %c0_i32_0 = arith.constant 0 : i32
    %c0_i32_1 = arith.constant 0 : i32
    return %c0_i32, %c0_i32_0 : i32, i32
  }
  func.func @transform_15(%arg0: i32) -> (i32, i32, i32) {
    %c0_i32 = arith.constant 0 : i32
    %c0_i32_0 = arith.constant 0 : i32
    %c0_i32_1 = arith.constant 0 : i32
    return %arg0, %c0_i32, %c0_i32_0 : i32, i32, i32
  }
}

</mosaic_0001>

<llo_original>
// kernel: tpu_custom_call.1
$region0: #{tpu_custom_call.1}
  #allocation0 [shape = 'u32[]', space=smem, size = 0x4, offset = 0x4, fixed_abs, tag = 'smem constant byte address 0x4 - core index']
  #allocation1 [shape = 'u32[144,128]{1,0:T(1,128)}', space=vmem, size = 0x12000, scoped, tag = 'internal scratch']
  %s0 = inlined_call_operand.vmem [shape: f32[2,8,32], index: 0, kind: input, shape index: {}]
  %s1 = inlined_call_operand.vmem [shape: f32[32,96], index: 1, kind: input, shape index: {}]
  %s2 = inlined_call_operand.vmem [shape: f32[1,96], index: 2, kind: input, shape index: {}]
  %s3 = inlined_call_operand.vmem [shape: f32[32,32], index: 3, kind: input, shape index: {}]
  %s4 = inlined_call_operand.vmem [shape: f32[1,32], index: 4, kind: input, shape index: {}]
  %s5 = inlined_call_operand.vmem [shape: f32[1,32], index: 5, kind: input, shape index: {}]
  %s6 = inlined_call_operand.vmem [shape: f32[1,32], index: 6, kind: input, shape index: {}]
  %s7 = inlined_call_operand.vmem [shape: f32[32,2048], index: 7, kind: input, shape index: {}]
  %s8 = inlined_call_operand.vmem [shape: f32[1,2048], index: 8, kind: input, shape index: {}]
  %s9 = inlined_call_operand.vmem [shape: f32[2048,32], index: 9, kind: input, shape index: {}]
  %s10 = inlined_call_operand.vmem [shape: f32[1,32], index: 10, kind: input, shape index: {}]
  %s11 = inlined_call_operand.vmem [shape: f32[1,32], index: 11, kind: input, shape index: {}]
  %s12 = inlined_call_operand.vmem [shape: f32[1,32], index: 12, kind: input, shape index: {}]
  %s13 = inlined_call_operand.vmem [shape: f32[32,8], index: 13, kind: input, shape index: {}]
  %s14 = inlined_call_operand.vmem [shape: f32[1,8], index: 14, kind: input, shape index: {}]
  %s15 = inlined_call_operand.hbm [shape: f32[2,8,8], index: 15, kind: output, shape index: {}]
  %s16 = sld [smem:[#allocation0]]
  $region93: #{tpu_custom_call.1} parent=0
    _
  %s18 = ssub.s32 1, %s16
  %s19 = scalar_select 0, %s18, %s16
  $region1: #{tpu_custom_call.1} parent=0
    #allocation2 [shape = 'u8[8192]{0}', space=vmem, size = 0x2000, scoped, tag = 'output window, operand 0']
    #allocation3 [shape = 's32[2]{0}', space=sflag, size = 0x8, scoped, tag = 'scoped memory for tpu_custom_call.1']
    %20 = vsyncpa [#allocation3], 0
    %s21 = scalar_lea.sflag [#allocation3], 1
    %22 = vsyncpa %s21, 0
    loop: start=0, step=1, limit=4
    $region2: #{tpu_custom_call.1} parent=1 // loop_pre_header
      _
    $region3: #{tpu_custom_call.1} parent=1 // loop_header
      %s24 = sphi 0, %s28
      %p25 = scmp.ge.s32.totalorder %s24, 4
      %s34 = sphi 0, %s36
      %s37 = sphi 0, %s34
      %s38 = sphi 0, %s37
      %s54 = sphi 0, %s38
      %s58 = sphi 0, %s58
      %s60 = sphi 0, %s58
      %s61 = sphi 0, %s60
      %s75 = sphi 0, %s61
      %s79 = sphi 0, %s79
      %s81 = sphi 0, %s79
      %s82 = sphi 0, %s81
      %s96 = sphi 0, %s82
      %s100 = sphi 0, %s100
      %s102 = sphi 0, %s100
      %s103 = sphi 0, %s102
      %s117 = sphi 0, %s103
      %s121 = sphi 0, %s121
      %s123 = sphi 0, %s121
      %s124 = sphi 0, %s123
      %s138 = sphi 0, %s124
      %s142 = sphi 0, %s142
      %s144 = sphi 0, %s142
      %s145 = sphi 0, %s144
      %s159 = sphi 0, %s145
      %s163 = sphi 0, %s163
      %s165 = sphi 0, %s163
      %s166 = sphi 0, %s165
      %s180 = sphi 0, %s166
      %s184 = sphi 0, %s184
      %s186 = sphi 0, %s184
      %s187 = sphi 0, %s186
      %s201 = sphi 0, %s187
      %s205 = sphi 0, %s205
      %s207 = sphi 0, %s205
      %s208 = sphi 0, %s207
      %s222 = sphi 0, %s208
      %s226 = sphi 0, %s226
      %s228 = sphi 0, %s226
      %s229 = sphi 0, %s228
      %s243 = sphi 0, %s229
      %s247 = sphi 0, %s247
      %s249 = sphi 0, %s247
      %s250 = sphi 0, %s249
      %s264 = sphi 0, %s250
      %s268 = sphi 0, %s268
      %s270 = sphi 0, %s268
      %s271 = sphi 0, %s270
      %s285 = sphi 0, %s271
      %s289 = sphi 0, %s289
      %s291 = sphi 0, %s289
      %s292 = sphi 0, %s291
      %s306 = sphi 0, %s292
      %s310 = sphi 0, %s310
      %s312 = sphi 0, %s310
      %s313 = sphi 0, %s312
      %s327 = sphi 0, %s313
      %s331 = sphi 0, %s331
      %s333 = sphi 0, %s331
      %s334 = sphi 0, %s333
      %s348 = sphi 0, %s334
      %s354 = sphi 0, %s356
      %s357 = sphi 0, %s354
      %s358 = sphi 0, %s357
      %s374 = sphi 0, %s358
    $region4: #{tpu_custom_call.1} parent=1 // loop_header_branch
      %27 = sbr.rel (%p25) target = $region8
    $region5: #{tpu_custom_call.1} parent=1 // loop_body
      %s29 = ssub.s32 %s24, 1
      %s30 = ssub.s32 %s24, 2
      %s31 = sadd.s32 %s24, 1
      %s32 = ssub.s32 %s24, %s31
      %p33 = scmp.eq.s32.totalorder %s32, 0
      %s35 = sadd.s32 %s34, 1
      %s36 = scalar_select %p33, %s34, %s35
      %p39 = pneg %p33
      %p40 = scmp.eq.s32.totalorder %s24, 1
      %p41 = por %p39, %p40
      %p42 = scmp.ne.s32.totalorder %s34, %s37
      %p43 = scmp.eq.s32.totalorder %s24, 0
      %p44 = por %p42, %p43
      %p45 = scmp.ne.s32.totalorder %s34, %s37
      %p46 = scmp.eq.s32.totalorder %s29, 1
      %p47 = por %p45, %p46
      %p48 = scmp.ne.s32.totalorder %s37, %s38
      %p49 = scmp.eq.s32.totalorder %s29, 0
      %p50 = por %p48, %p49
      %p51 = scmp.ne.s32.totalorder %s37, %s38
      %p52 = scmp.eq.s32.totalorder %s30, 1
      %p53 = por %p51, %p52
      %p55 = scmp.ne.s32.totalorder %s38, %s54
      %p56 = scmp.eq.s32.totalorder %s30, 0
      %p57 = por %p55, %p56
      %s59 = sadd.s32 %s58, 1
      %p62 = scmp.eq.s32.totalorder %s24, 1
      %p63 = scmp.ne.s32.totalorder %s58, %s60
      %p64 = scmp.eq.s32.totalorder %s24, 0
      %p65 = por %p63, %p64
      %p66 = scmp.ne.s32.totalorder %s58, %s60
      %p67 = scmp.eq.s32.totalorder %s29, 1
      %p68 = por %p66, %p67
      %p69 = scmp.ne.s32.totalorder %s60, %s61
      %p70 = scmp.eq.s32.totalorder %s29, 0
      %p71 = por %p69, %p70
      %p72 = scmp.ne.s32.totalorder %s60, %s61
      %p73 = scmp.eq.s32.totalorder %s30, 1
      %p74 = por %p72, %p73
      %p76 = scmp.ne.s32.totalorder %s61, %s75
      %p77 = scmp.eq.s32.totalorder %s30, 0
      %p78 = por %p76, %p77
      %s80 = sadd.s32 %s79, 1
      %p83 = scmp.eq.s32.totalorder %s24, 1
      %p84 = scmp.ne.s32.totalorder %s79, %s81
      %p85 = scmp.eq.s32.totalorder %s24, 0
      %p86 = por %p84, %p85
      %p87 = scmp.ne.s32.totalorder %s79, %s81
      %p88 = scmp.eq.s32.totalorder %s29, 1
      %p89 = por %p87, %p88
      %p90 = scmp.ne.s32.totalorder %s81, %s82
      %p91 = scmp.eq.s32.totalorder %s29, 0
      %p92 = por %p90, %p91
      %p93 = scmp.ne.s32.totalorder %s81, %s82
      %p94 = scmp.eq.s32.totalorder %s30, 1
      %p95 = por %p93, %p94
      %p97 = scmp.ne.s32.totalorder %s82, %s96
      %p98 = scmp.eq.s32.totalorder %s30, 0
      %p99 = por %p97, %p98
      %s101 = sadd.s32 %s100, 1
      %p104 = scmp.eq.s32.totalorder %s24, 1
      %p105 = scmp.ne.s32.totalorder %s100, %s102
      %p106 = scmp.eq.s32.totalorder %s24, 0
      %p107 = por %p105, %p106
      %p108 = scmp.ne.s32.totalorder %s100, %s102
      %p109 = scmp.eq.s32.totalorder %s29, 1
      %p110 = por %p108, %p109
      %p111 = scmp.ne.s32.totalorder %s102, %s103
      %p112 = scmp.eq.s32.totalorder %s29, 0
      %p113 = por %p111, %p112
      %p114 = scmp.ne.s32.totalorder %s102, %s103
      %p115 = scmp.eq.s32.totalorder %s30, 1
      %p116 = por %p114, %p115
      %p118 = scmp.ne.s32.totalorder %s103, %s117
      %p119 = scmp.eq.s32.totalorder %s30, 0
      %p120 = por %p118, %p119
      %s122 = sadd.s32 %s121, 1
      %p125 = scmp.eq.s32.totalorder %s24, 1
      %p126 = scmp.ne.s32.totalorder %s121, %s123
      %p127 = scmp.eq.s32.totalorder %s24, 0
      %p128 = por %p126, %p127
      %p129 = scmp.ne.s32.totalorder %s121, %s123
      %p130 = scmp.eq.s32.totalorder %s29, 1
      %p131 = por %p129, %p130
      %p132 = scmp.ne.s32.totalorder %s123, %s124
      %p133 = scmp.eq.s32.totalorder %s29, 0
      %p134 = por %p132, %p133
      %p135 = scmp.ne.s32.totalorder %s123, %s124
      %p136 = scmp.eq.s32.totalorder %s30, 1
      %p137 = por %p135, %p136
      %p139 = scmp.ne.s32.totalorder %s124, %s138
      %p140 = scmp.eq.s32.totalorder %s30, 0
      %p141 = por %p139, %p140
      %s143 = sadd.s32 %s142, 1
      %p146 = scmp.eq.s32.totalorder %s24, 1
      %p147 = scmp.ne.s32.totalorder %s142, %s144
      %p148 = scmp.eq.s32.totalorder %s24, 0
      %p149 = por %p147, %p148
      %p150 = scmp.ne.s32.totalorder %s142, %s144
      %p151 = scmp.eq.s32.totalorder %s29, 1
      %p152 = por %p150, %p151
      %p153 = scmp.ne.s32.totalorder %s144, %s145
      %p154 = scmp.eq.s32.totalorder %s29, 0
      %p155 = por %p153, %p154
      %p156 = scmp.ne.s32.totalorder %s144, %s145
      %p157 = scmp.eq.s32.totalorder %s30, 1
      %p158 = por %p156, %p157
      %p160 = scmp.ne.s32.totalorder %s145, %s159
      %p161 = scmp.eq.s32.totalorder %s30, 0
      %p162 = por %p160, %p161
      %s164 = sadd.s32 %s163, 1
      %p167 = scmp.eq.s32.totalorder %s24, 1
      %p168 = scmp.ne.s32.totalorder %s163, %s165
      %p169 = scmp.eq.s32.totalorder %s24, 0
      %p170 = por %p168, %p169
      %p171 = scmp.ne.s32.totalorder %s163, %s165
      %p172 = scmp.eq.s32.totalorder %s29, 1
      %p173 = por %p171, %p172
      %p174 = scmp.ne.s32.totalorder %s165, %s166
      %p175 = scmp.eq.s32.totalorder %s29, 0
      %p176 = por %p174, %p175
      %p177 = scmp.ne.s32.totalorder %s165, %s166
      %p178 = scmp.eq.s32.totalorder %s30, 1
      %p179 = por %p177, %p178
      %p181 = scmp.ne.s32.totalorder %s166, %s180
      %p182 = scmp.eq.s32.totalorder %s30, 0
      %p183 = por %p181, %p182
      %s185 = sadd.s32 %s184, 1
      %p188 = scmp.eq.s32.totalorder %s24, 1
      %p189 = scmp.ne.s32.totalorder %s184, %s186
      %p190 = scmp.eq.s32.totalorder %s24, 0
      %p191 = por %p189, %p190
      %p192 = scmp.ne.s32.totalorder %s184, %s186
      %p193 = scmp.eq.s32.totalorder %s29, 1
      %p194 = por %p192, %p193
      %p195 = scmp.ne.s32.totalorder %s186, %s187
      %p196 = scmp.eq.s32.totalorder %s29, 0
      %p197 = por %p195, %p196
      %p198 = scmp.ne.s32.totalorder %s186, %s187
      %p199 = scmp.eq.s32.totalorder %s30, 1
      %p200 = por %p198, %p199
      %p202 = scmp.ne.s32.totalorder %s187, %s201
      %p203 = scmp.eq.s32.totalorder %s30, 0
      %p204 = por %p202, %p203
      %s206 = sadd.s32 %s205, 1
      %p209 = scmp.eq.s32.totalorder %s24, 1
      %p210 = scmp.ne.s32.totalorder %s205, %s207
      %p211 = scmp.eq.s32.totalorder %s24, 0
      %p212 = por %p210, %p211
      %p213 = scmp.ne.s32.totalorder %s205, %s207
      %p214 = scmp.eq.s32.totalorder %s29, 1
      %p215 = por %p213, %p214
      %p216 = scmp.ne.s32.totalorder %s207, %s208
      %p217 = scmp.eq.s32.totalorder %s29, 0
      %p218 = por %p216, %p217
      %p219 = scmp.ne.s32.totalorder %s207, %s208
      %p220 = scmp.eq.s32.totalorder %s30, 1
      %p221 = por %p219, %p220
      %p223 = scmp.ne.s32.totalorder %s208, %s222
      %p224 = scmp.eq.s32.totalorder %s30, 0
      %p225 = por %p223, %p224
      %s227 = sadd.s32 %s226, 1
      %p230 = scmp.eq.s32.totalorder %s24, 1
      %p231 = scmp.ne.s32.totalorder %s226, %s228
      %p232 = scmp.eq.s32.totalorder %s24, 0
      %p233 = por %p231, %p232
      %p234 = scmp.ne.s32.totalorder %s226, %s228
      %p235 = scmp.eq.s32.totalorder %s29, 1
      %p236 = por %p234, %p235
      %p237 = scmp.ne.s32.totalorder %s228, %s229
      %p238 = scmp.eq.s32.totalorder %s29, 0
      %p239 = por %p237, %p238
      %p240 = scmp.ne.s32.totalorder %s228, %s229
      %p241 = scmp.eq.s32.totalorder %s30, 1
      %p242 = por %p240, %p241
      %p244 = scmp.ne.s32.totalorder %s229, %s243
      %p245 = scmp.eq.s32.totalorder %s30, 0
      %p246 = por %p244, %p245
      %s248 = sadd.s32 %s247, 1
      %p251 = scmp.eq.s32.totalorder %s24, 1
      %p252 = scmp.ne.s32.totalorder %s247, %s249
      %p253 = scmp.eq.s32.totalorder %s24, 0
      %p254 = por %p252, %p253
      %p255 = scmp.ne.s32.totalorder %s247, %s249
      %p256 = scmp.eq.s32.totalorder %s29, 1
      %p257 = por %p255, %p256
      %p258 = scmp.ne.s32.totalorder %s249, %s250
      %p259 = scmp.eq.s32.totalorder %s29, 0
      %p260 = por %p258, %p259
      %p261 = scmp.ne.s32.totalorder %s249, %s250
      %p262 = scmp.eq.s32.totalorder %s30, 1
      %p263 = por %p261, %p262
      %p265 = scmp.ne.s32.totalorder %s250, %s264
      %p266 = scmp.eq.s32.totalorder %s30, 0
      %p267 = por %p265, %p266
      %s269 = sadd.s32 %s268, 1
      %p272 = scmp.eq.s32.totalorder %s24, 1
      %p273 = scmp.ne.s32.totalorder %s268, %s270
      %p274 = scmp.eq.s32.totalorder %s24, 0
      %p275 = por %p273, %p274
      %p276 = scmp.ne.s32.totalorder %s268, %s270
      %p277 = scmp.eq.s32.totalorder %s29, 1
      %p278 = por %p276, %p277
      %p279 = scmp.ne.s32.totalorder %s270, %s271
      %p280 = scmp.eq.s32.totalorder %s29, 0
      %p281 = por %p279, %p280
      %p282 = scmp.ne.s32.totalorder %s270, %s271
      %p283 = scmp.eq.s32.totalorder %s30, 1
      %p284 = por %p282, %p283
      %p286 = scmp.ne.s32.totalorder %s271, %s285
      %p287 = scmp.eq.s32.totalorder %s30, 0
      %p288 = por %p286, %p287
      %s290 = sadd.s32 %s289, 1
      %p293 = scmp.eq.s32.totalorder %s24, 1
      %p294 = scmp.ne.s32.totalorder %s289, %s291
      %p295 = scmp.eq.s32.totalorder %s24, 0
      %p296 = por %p294, %p295
      %p297 = scmp.ne.s32.totalorder %s289, %s291
      %p298 = scmp.eq.s32.totalorder %s29, 1
      %p299 = por %p297, %p298
      %p300 = scmp.ne.s32.totalorder %s291, %s292
      %p301 = scmp.eq.s32.totalorder %s29, 0
      %p302 = por %p300, %p301
      %p303 = scmp.ne.s32.totalorder %s291, %s292
      %p304 = scmp.eq.s32.totalorder %s30, 1
      %p305 = por %p303, %p304
      %p307 = scmp.ne.s32.totalorder %s292, %s306
      %p308 = scmp.eq.s32.totalorder %s30, 0
      %p309 = por %p307, %p308
      %s311 = sadd.s32 %s310, 1
      %p314 = scmp.eq.s32.totalorder %s24, 1
      %p315 = scmp.ne.s32.totalorder %s310, %s312
      %p316 = scmp.eq.s32.totalorder %s24, 0
      %p317 = por %p315, %p316
      %p318 = scmp.ne.s32.totalorder %s310, %s312
      %p319 = scmp.eq.s32.totalorder %s29, 1
      %p320 = por %p318, %p319
      %p321 = scmp.ne.s32.totalorder %s312, %s313
      %p322 = scmp.eq.s32.totalorder %s29, 0
      %p323 = por %p321, %p322
      %p324 = scmp.ne.s32.totalorder %s312, %s313
      %p325 = scmp.eq.s32.totalorder %s30, 1
      %p326 = por %p324, %p325
      %p328 = scmp.ne.s32.totalorder %s313, %s327
      %p329 = scmp.eq.s32.totalorder %s30, 0
      %p330 = por %p328, %p329
      %s332 = sadd.s32 %s331, 1
      %p335 = scmp.eq.s32.totalorder %s24, 1
      %p336 = scmp.ne.s32.totalorder %s331, %s333
      %p337 = scmp.eq.s32.totalorder %s24, 0
      %p338 = por %p336, %p337
      %p339 = scmp.ne.s32.totalorder %s331, %s333
      %p340 = scmp.eq.s32.totalorder %s29, 1
      %p341 = por %p339, %p340
      %p342 = scmp.ne.s32.totalorder %s333, %s334
      %p343 = scmp.eq.s32.totalorder %s29, 0
      %p344 = por %p342, %p343
      %p345 = scmp.ne.s32.totalorder %s333, %s334
      %p346 = scmp.eq.s32.totalorder %s30, 1
      %p347 = por %p345, %p346
      %p349 = scmp.ne.s32.totalorder %s334, %s348
      %p350 = scmp.eq.s32.totalorder %s30, 0
      %p351 = por %p349, %p350
      %s352 = ssub.s32 %s24, %s31
      %p353 = scmp.eq.s32.totalorder %s352, 0
      %s355 = sadd.s32 %s354, 1
      %s356 = scalar_select %p353, %s354, %s355
      %p359 = pneg %p353
      %p360 = scmp.eq.s32.totalorder %s24, 1
      %p361 = por %p359, %p360
      %p362 = scmp.ne.s32.totalorder %s354, %s357
      %p363 = scmp.eq.s32.totalorder %s24, 0
      %p364 = por %p362, %p363
      %p365 = scmp.ne.s32.totalorder %s354, %s357
      %p366 = scmp.eq.s32.totalorder %s29, 1
      %p367 = por %p365, %p366
      %p368 = scmp.ne.s32.totalorder %s357, %s358
      %p369 = scmp.eq.s32.totalorder %s29, 0
      %p370 = por %p368, %p369
      %p371 = scmp.ne.s32.totalorder %s357, %s358
      %p372 = scmp.eq.s32.totalorder %s30, 1
      %p373 = por %p371, %p372
      %p375 = scmp.ne.s32.totalorder %s358, %s374
      %p376 = scmp.eq.s32.totalorder %s30, 0
      %p377 = por %p375, %p376
      %p378 = scmp.le.s32.totalorder 1, %s24
      %p379 = scmp.lt.s32.totalorder %s24, 3
      %p380 = pnand %p378, %p379
      %p381 = pneg %p380
      // Predicated region
      $region9: #{tpu_custom_call.1} parent=5 // pred_check
        _
      $region10: #{tpu_custom_call.1} parent=5 // pred_check_branch
        %383 = sbr.rel (%p380) target = $region12
      $region11: #{tpu_custom_call.1} parent=5 // pred_region
        %s384 = ssub.s32 %s24, 1
        // Predicated region
        $region13: #{tpu_custom_call.1} parent=11 // pred_check
          %p385 = pneg %p71
        $region14: #{tpu_custom_call.1} parent=11 // pred_check_branch
          %387 = sbr.rel (%p385) target = $region16
        $region15: #{tpu_custom_call.1} parent=11 // pred_region
          _
        $region16: #{tpu_custom_call.1} parent=11 // pred_fallthru
          _
        // Predicated region
        $region17: #{tpu_custom_call.1} parent=11 // pred_check
          %p388 = pneg %p92
        $region18: #{tpu_custom_call.1} parent=11 // pred_check_branch
          %390 = sbr.rel (%p388) target = $region20
        $region19: #{tpu_custom_call.1} parent=11 // pred_region
          _
        $region20: #{tpu_custom_call.1} parent=11 // pred_fallthru
          _
        // Predicated region
        $region21: #{tpu_custom_call.1} parent=11 // pred_check
          %p391 = pneg %p113
        $region22: #{tpu_custom_call.1} parent=11 // pred_check_branch
          %393 = sbr.rel (%p391) target = $region24
        $region23: #{tpu_custom_call.1} parent=11 // pred_region
          _
        $region24: #{tpu_custom_call.1} parent=11 // pred_fallthru
          _
        // Predicated region
        $region25: #{tpu_custom_call.1} parent=11 // pred_check
          %p394 = pneg %p134
        $region26: #{tpu_custom_call.1} parent=11 // pred_check_branch
          %396 = sbr.rel (%p394) target = $region28
        $region27: #{tpu_custom_call.1} parent=11 // pred_region
          _
        $region28: #{tpu_custom_call.1} parent=11 // pred_fallthru
          _
        // Predicated region
        $region29: #{tpu_custom_call.1} parent=11 // pred_check
          %p397 = pneg %p155
        $region30: #{tpu_custom_call.1} parent=11 // pred_check_branch
          %399 = sbr.rel (%p397) target = $region32
        $region31: #{tpu_custom_call.1} parent=11 // pred_region
          _
        $region32: #{tpu_custom_call.1} parent=11 // pred_fallthru
          _
        // Predicated region
        $region33: #{tpu_custom_call.1} parent=11 // pred_check
          %p400 = pneg %p176
        $region34: #{tpu_custom_call.1} parent=11 // pred_check_branch
          %402 = sbr.rel (%p400) target = $region36
        $region35: #{tpu_custom_call.1} parent=11 // pred_region
          _
        $region36: #{tpu_custom_call.1} parent=11 // pred_fallthru
          _
        // Predicated region
        $region37: #{tpu_custom_call.1} parent=11 // pred_check
          %p403 = pneg %p197
        $region38: #{tpu_custom_call.1} parent=11 // pred_check_branch
          %405 = sbr.rel (%p403) target = $region40
        $region39: #{tpu_custom_call.1} parent=11 // pred_region
          _
        $region40: #{tpu_custom_call.1} parent=11 // pred_fallthru
          _
        // Predicated region
        $region41: #{tpu_custom_call.1} parent=11 // pred_check
          %p406 = pneg %p218
        $region42: #{tpu_custom_call.1} parent=11 // pred_check_branch
          %408 = sbr.rel (%p406) target = $region44
        $region43: #{tpu_custom_call.1} parent=11 // pred_region
          _
        $region44: #{tpu_custom_call.1} parent=11 // pred_fallthru
          _
        // Predicated region
        $region45: #{tpu_custom_call.1} parent=11 // pred_check
          %p409 = pneg %p239
        $region46: #{tpu_custom_call.1} parent=11 // pred_check_branch
          %411 = sbr.rel (%p409) target = $region48
        $region47: #{tpu_custom_call.1} parent=11 // pred_region
          _
        $region48: #{tpu_custom_call.1} parent=11 // pred_fallthru
          _
        // Predicated region
        $region49: #{tpu_custom_call.1} parent=11 // pred_check
          %p412 = pneg %p260
        $region50: #{tpu_custom_call.1} parent=11 // pred_check_branch
          %414 = sbr.rel (%p412) target = $region52
        $region51: #{tpu_custom_call.1} parent=11 // pred_region
          _
        $region52: #{tpu_custom_call.1} parent=11 // pred_fallthru
          _
        // Predicated region
        $region53: #{tpu_custom_call.1} parent=11 // pred_check
          %p415 = pneg %p281
        $region54: #{tpu_custom_call.1} parent=11 // pred_check_branch
          %417 = sbr.rel (%p415) target = $region56
        $region55: #{tpu_custom_call.1} parent=11 // pred_region
          _
        $region56: #{tpu_custom_call.1} parent=11 // pred_fallthru
          _
        // Predicated region
        $region57: #{tpu_custom_call.1} parent=11 // pred_check
          %p418 = pneg %p302
        $region58: #{tpu_custom_call.1} parent=11 // pred_check_branch
          %420 = sbr.rel (%p418) target = $region60
        $region59: #{tpu_custom_call.1} parent=11 // pred_region
          _
        $region60: #{tpu_custom_call.1} parent=11 // pred_fallthru
          _
        // Predicated region
        $region61: #{tpu_custom_call.1} parent=11 // pred_check
          %p421 = pneg %p323
        $region62: #{tpu_custom_call.1} parent=11 // pred_check_branch
          %423 = sbr.rel (%p421) target = $region64
        $region63: #{tpu_custom_call.1} parent=11 // pred_region
          _
        $region64: #{tpu_custom_call.1} parent=11 // pred_fallthru
          _
        // Predicated region
        $region65: #{tpu_custom_call.1} parent=11 // pred_check
          %p424 = pneg %p344
        $region66: #{tpu_custom_call.1} parent=11 // pred_check_branch
          %426 = sbr.rel (%p424) target = $region68
        $region67: #{tpu_custom_call.1} parent=11 // pred_region
          _
        $region68: #{tpu_custom_call.1} parent=11 // pred_fallthru
          _
      $region12: #{tpu_custom_call.1} parent=5 // pred_fallthru
        _
      %p427 = scmp.lt.s32.totalorder %s24, 2
      // Predicated region
      $region69: #{tpu_custom_call.1} parent=5 // pred_check
        %p428 = pneg %p427
      $region70: #{tpu_custom_call.1} parent=5 // pred_check_branch
        %430 = sbr.rel (%p428) target = $region72
      $region71: #{tpu_custom_call.1} parent=5 // pred_region
        // Predicated region
        $region73: #{tpu_custom_call.1} parent=71 // pred_check
          %p431 = pneg %p44
        $region74: #{tpu_custom_call.1} parent=71 // pred_check_branch
          %433 = sbr.rel (%p431) target = $region76
        $region75: #{tpu_custom_call.1} parent=71 // pred_region
          %p434 = scmp.lt.s32.totalorder %s24, 1
          %s435 = scalar_select %p434, %s24, 1
          %s436 = smul.addr %s435, 8
          %s437 = scalar_lea.vmem %s0, %s436
        $region76: #{tpu_custom_call.1} parent=71 // pred_fallthru
          _
      $region72: #{tpu_custom_call.1} parent=5 // pred_fallthru
        _
      %p438 = scmp.le.s32.totalorder 1, %s24
      %p439 = scmp.lt.s32.totalorder %s24, 3
      %p440 = pnand %p438, %p439
      %p441 = pneg %p440
      // Predicated region
      $region77: #{tpu_custom_call.1} parent=5 // pred_check
        _
      $region78: #{tpu_custom_call.1} parent=5 // pred_check_branch
        %443 = sbr.rel (%p440) target = $region80
      $region79: #{tpu_custom_call.1} parent=5 // pred_region
        %s444 = ssub.s32 %s24, 1
        %p445 = scmp.lt.s32.totalorder %s29, 1
        %s446 = scalar_select %p445, %s29, 1
        %s447 = smul.addr %s446, 8
        %s448 = scalar_lea.vmem %s0, %s447
        %p449 = pneg %p50
        %p450 = pneg %p47
        %p451 = pneg %p71
        %p452 = pneg %p68
        %p453 = pneg %p92
        %p454 = pneg %p89
        %p455 = pneg %p113
        %p456 = pneg %p110
        %p457 = pneg %p134
        %p458 = pneg %p131
        %p459 = pneg %p155
        %p460 = pneg %p152
        %p461 = pneg %p176
        %p462 = pneg %p173
        %p463 = pneg %p197
        %p464 = pneg %p194
        %p465 = pneg %p218
        %p466 = pneg %p215
        %p467 = pneg %p239
        %p468 = pneg %p236
        %p469 = pneg %p260
        %p470 = pneg %p257
        %p471 = pneg %p281
        %p472 = pneg %p278
        %p473 = pneg %p302
        %p474 = pneg %p299
        %p475 = pneg %p323
        %p476 = pneg %p320
        %p477 = pneg %p344
        %p478 = pneg %p341
        %p479 = pneg %p370
        %p480 = pneg %p367
        %s481 = sand.u32 %s357, 1
        %s482 = scalar_lea.sflag [#allocation3], %s481
        %s483 = sand.u32 %s357, 1
        %s484 = smul.addr %s483, 8
        %s485 = scalar_lea.vmem [#allocation2], %s484
        %p486 = scmp.lt.s32.totalorder %s29, 1
        %s487 = scalar_select %p486, %s29, 1
        %s488 = smul.addr %s487, 8
        %s489 = scalar_lea.vmem %s0, %s488
        %v490 = vld [vmem:[%s489] sm:$0xff]
        %v491 = vld [vmem:[%s1] sm:$0xff]
        %v492 = vld [vmem:[%s1 + $0x8] sm:$0xff]
        %v493 = vld [vmem:[%s1 + $0x10] sm:$0xff]
        %v494 = vld [vmem:[%s1 + $0x18] sm:$0xff]
        %v495 = vld [vmem:[%s2] sm:$0x1]
        %v497 = vlaneseq
        %v498 = vshrl.u32 %v497, 7
        %v499 = vsub.s32 0, %v498
        %v500 = vrot.slane %v495, %v499
        %vm502 = vcmask 261120
        %v504 = vsel %vm502, %v490, 0
        %506 = vmatprep.subr.mxu0 0.0
        %507 = vmatpush1.msra.mxu0 %v491
        %508 = vmatprep.subr.mxu0 0.0
        %509 = vmatpush1.msra.mxu0 %v492
        %510 = vmatprep.subr.mxu0 0.0
        %511 = vmatpush1.msra.mxu0 %v493
        %512 = vmatprep.subr.mxu0 0.0
        %513 = vmatpush1.msra.mxu0 %v494
        %514 = vmatprep.subr.mxu0 0.0
        %515 = vmatpush1.msra.mxu0 0.0
        %516 = vmatprep.subr.mxu0 0.0
        %517 = vmatpush1.msra.mxu0 0.0
        %518 = vmatprep.subr.mxu0 0.0
        %519 = vmatpush1.msra.mxu0 0.0
        %520 = vmatprep.subr.mxu0 0.0
        %521 = vmatpush1.msra.mxu0 0.0
        %522 = vmatprep.subr.mxu0 0.0
        %523 = vmatpush1.msra.mxu0 0.0
        %524 = vmatprep.subr.mxu0 0.0
        %525 = vmatpush1.msra.mxu0 0.0
        %526 = vmatprep.subr.mxu0 0.0
        %527 = vmatpush1.msra.mxu0 0.0
        %528 = vmatprep.subr.mxu0 0.0
        %529 = vmatpush1.msra.mxu0 0.0
        %530 = vmatprep.subr.mxu0 0.0
        %531 = vmatpush1.msra.mxu0 0.0
        %532 = vmatprep.subr.mxu0 0.0
        %533 = vmatpush1.msra.mxu0 0.0
        %534 = vmatprep.subr.mxu0 0.0
        %535 = vmatpush1.msra.mxu0 0.0
        %536 = vmatprep.subr.mxu0 0.0
        %537 = vmatpush1.msra.mxu0 0.0
        %538 = vmatprep.subr.mxu0 0.0
        %539 = vmatpush1.msra.mxu0 0.0
        %540 = vmatprep.subr.mxu0 0.0
        %541 = vmatpush1.msra.mxu0 0.0
        %542 = vmatprep.subr.mxu0 0.0
        %543 = vmatpush1.msra.mxu0 0.0
        %544 = vmatprep.subr.mxu0 0.0
        %545 = vmatpush1.msra.mxu0 0.0
        %546 = vmatprep.subr.mxu0 0.0
        %547 = vmatpush1.msra.mxu0 0.0
        %548 = vmatprep.subr.mxu0 0.0
        %549 = vmatpush1.msra.mxu0 0.0
        %550 = vmatprep.subr.mxu0 0.0
        %551 = vmatpush1.msra.mxu0 0.0
        %552 = vmatprep.subr.mxu0 0.0
        %553 = vmatpush1.msra.mxu0 0.0
        %554 = vmatprep.subr.mxu0 0.0
        %555 = vmatpush1.msra.mxu0 0.0
        %556 = vmatprep.subr.mxu0 0.0
        %557 = vmatpush1.msra.mxu0 0.0
        %558 = vmatprep.subr.mxu0 0.0
        %559 = vmatpush1.msra.mxu0 0.0
        %560 = vmatprep.subr.mxu0 0.0
        %561 = vmatpush1.msra.mxu0 0.0
        %562 = vmatprep.subr.mxu0 0.0
        %563 = vmatpush1.msra.mxu0 0.0
        %564 = vmatprep.subr.mxu0 0.0
        %565 = vmatpush1.msra.mxu0 0.0
        %566 = vmatprep.subr.mxu0 0.0
        %567 = vmatpush1.msra.mxu0 0.0
        %568 = vmatprep.subr.mxu0 0.0
        %569 = vmatpush1.msra.mxu0 0.0
        %570 = vmatprep.mubr.f32.mxu0 0.0
        %571 = vmatmul.mubr.f32.gmra.mrb[0].mxu0 %v504
        %v572 = vpop.f32.mrb[0].mxu0
        %v573 = vadd.f32 %v500, %v572
        %v574 = vpop.f32.mrb[0].mxu0
        %575 = vdwg.mxu0
        %v576 = vld [vmem:[%s3] sm:$0xff]
        %v577 = vld [vmem:[%s3 + $0x8] sm:$0xff]
        %v578 = vld [vmem:[%s3 + $0x10] sm:$0xff]
        %v579 = vld [vmem:[%s3 + $0x18] sm:$0xff]
        %581 = vrot.lane.b32.xlu0 %v573, 96
        %v582 = vpop.permute.xlu0 %581
        %vm583 = vcmask 130048
        %v584 = vsel %vm583, %v573, 0
        %v586 = vsel %vm583, %v582, 0
        %588 = vmatprep.subr.mxu0 0.0
        %589 = vmatpush1.xpose.msra.mxu0 %v586
        %590 = vmatprep.subr.mxu0 0.0
        %591 = vmatpush1.xpose.msra.mxu0 0.0
        %592 = vmatprep.subr.mxu0 0.0
        %593 = vmatpush1.xpose.msra.mxu0 0.0
        %594 = vmatprep.subr.mxu0 0.0
        %595 = vmatpush1.xpose.msra.mxu0 0.0
        %596 = vmatprep.subr.mxu0 0.0
        %597 = vmatpush1.xpose.msra.mxu0 0.0
        %598 = vmatprep.subr.mxu0 0.0
        %599 = vmatpush1.xpose.msra.mxu0 0.0
        %600 = vmatprep.subr.mxu0 0.0
        %601 = vmatpush1.xpose.msra.mxu0 0.0
        %602 = vmatprep.subr.mxu0 0.0
        %603 = vmatpush1.xpose.msra.mxu0 0.0
        %604 = vmatprep.subr.mxu0 0.0
        %605 = vmatpush1.xpose.msra.mxu0 0.0
        %606 = vmatprep.subr.mxu0 0.0
        %607 = vmatpush1.xpose.msra.mxu0 0.0
        %608 = vmatprep.subr.mxu0 0.0
        %609 = vmatpush1.xpose.msra.mxu0 0.0
        %610 = vmatprep.subr.mxu0 0.0
        %611 = vmatpush1.xpose.msra.mxu0 0.0
        %612 = vmatprep.subr.mxu0 0.0
        %613 = vmatpush1.xpose.msra.mxu0 0.0
        %614 = vmatprep.subr.mxu0 0.0
        %615 = vmatpush1.xpose.msra.mxu0 0.0
        %616 = vmatprep.subr.mxu0 0.0
        %617 = vmatpush1.xpose.msra.mxu0 0.0
        %618 = vmatprep.subr.mxu0 0.0
        %619 = vmatpush1.xpose.msra.mxu0 0.0
        %620 = vmatprep.subr.mxu0 0.0
        %621 = vmatpush1.xpose.msra.mxu0 0.0
        %622 = vmatprep.subr.mxu0 0.0
        %623 = vmatpush1.xpose.msra.mxu0 0.0
        %624 = vmatprep.subr.mxu0 0.0
        %625 = vmatpush1.xpose.msra.mxu0 0.0
        %626 = vmatprep.subr.mxu0 0.0
        %627 = vmatpush1.xpose.msra.mxu0 0.0
        %628 = vmatprep.subr.mxu0 0.0
        %629 = vmatpush1.xpose.msra.mxu0 0.0
        %630 = vmatprep.subr.mxu0 0.0
        %631 = vmatpush1.xpose.msra.mxu0 0.0
        %632 = vmatprep.subr.mxu0 0.0
        %633 = vmatpush1.xpose.msra.mxu0 0.0
        %634 = vmatprep.subr.mxu0 0.0
        %635 = vmatpush1.xpose.msra.mxu0 0.0
        %636 = vmatprep.subr.mxu0 0.0
        %637 = vmatpush1.xpose.msra.mxu0 0.0
        %638 = vmatprep.subr.mxu0 0.0
        %639 = vmatpush1.xpose.msra.mxu0 0.0
        %640 = vmatprep.subr.mxu0 0.0
        %641 = vmatpush1.xpose.msra.mxu0 0.0
        %642 = vmatprep.subr.mxu0 0.0
        %643 = vmatpush1.xpose.msra.mxu0 0.0
        %644 = vmatprep.subr.mxu0 0.0
        %645 = vmatpush1.xpose.msra.mxu0 0.0
        %646 = vmatprep.subr.mxu0 0.0
        %647 = vmatpush1.xpose.msra.mxu0 0.0
        %648 = vmatprep.subr.mxu0 0.0
        %649 = vmatpush1.xpose.msra.mxu0 0.0
        %650 = vmatprep.subr.mxu0 0.0
        %651 = vmatpush1.xpose.msra.mxu0 0.0
        %652 = vmatprep.mubr.f32.mxu0 0.0
        %653 = vmatmul.mubr.f32.gmra.mrb[0].mxu0 %v584
        %v654 = vpop.f32.mrb[0].mxu0
        %v655 = vadd.f32 0.0, %v654
        %v656 = vpop.f32.mrb[0].mxu0
        %657 = vdwg.mxu0
        %v658 = vmul.f32 %v655, 0.25
        %vm659 = vcmask 64512
        %v660 = vsel %vm659, %v658, -inf
        %661 = vmax.xlane.f32.xlu0 %v660
        %v662 = vpop.xlane.xlu0 %661
        %v663 = vsub.f32 %v658, %v662
        %v664 = vmul.f32 %v663, 1.442695
        %v665 = vpow.pop %v664
        %v666 = vsel %vm659, %v665, 0.0
        %667 = vadd.xlane.f32.xlu0 %v666
        %v668 = vpop.xlane.xlu0 %667
        %v669 = vrcp.pop %v668
        %v670 = vmul.f32 %v665, %v669
        %671 = vrot.lane.b32.xlu0 %v573, 64
        %v672 = vpop.permute.xlu0 %671
        %v675 = vsel %vm659, %v670, 0
        %677 = vmatprep.subr.mxu0 0.0
        %678 = vmatpush1.msra.mxu0 %v672
        %679 = vmatprep.subr.mxu0 0.0
        %680 = vmatpush1.msra.mxu0 0.0
        %681 = vmatprep.subr.mxu0 0.0
        %682 = vmatpush1.msra.mxu0 0.0
        %683 = vmatprep.subr.mxu0 0.0
        %684 = vmatpush1.msra.mxu0 0.0
        %685 = vmatprep.subr.mxu0 0.0
        %686 = vmatpush1.msra.mxu0 0.0
        %687 = vmatprep.subr.mxu0 0.0
        %688 = vmatpush1.msra.mxu0 0.0
        %689 = vmatprep.subr.mxu0 0.0
        %690 = vmatpush1.msra.mxu0 0.0
        %691 = vmatprep.subr.mxu0 0.0
        %692 = vmatpush1.msra.mxu0 0.0
        %693 = vmatprep.subr.mxu0 0.0
        %694 = vmatpush1.msra.mxu0 0.0
        %695 = vmatprep.subr.mxu0 0.0
        %696 = vmatpush1.msra.mxu0 0.0
        %697 = vmatprep.subr.mxu0 0.0
        %698 = vmatpush1.msra.mxu0 0.0
        %699 = vmatprep.subr.mxu0 0.0
        %700 = vmatpush1.msra.mxu0 0.0
        %701 = vmatprep.subr.mxu0 0.0
        %702 = vmatpush1.msra.mxu0 0.0
        %703 = vmatprep.subr.mxu0 0.0
        %704 = vmatpush1.msra.mxu0 0.0
        %705 = vmatprep.subr.mxu0 0.0
        %706 = vmatpush1.msra.mxu0 0.0
        %707 = vmatprep.subr.mxu0 0.0
        %708 = vmatpush1.msra.mxu0 0.0
        %709 = vmatprep.subr.mxu0 0.0
        %710 = vmatpush1.msra.mxu0 0.0
        %711 = vmatprep.subr.mxu0 0.0
        %712 = vmatpush1.msra.mxu0 0.0
        %713 = vmatprep.subr.mxu0 0.0
        %714 = vmatpush1.msra.mxu0 0.0
        %715 = vmatprep.subr.mxu0 0.0
        %716 = vmatpush1.msra.mxu0 0.0
        %717 = vmatprep.subr.mxu0 0.0
        %718 = vmatpush1.msra.mxu0 0.0
        %719 = vmatprep.subr.mxu0 0.0
        %720 = vmatpush1.msra.mxu0 0.0
        %721 = vmatprep.subr.mxu0 0.0
        %722 = vmatpush1.msra.mxu0 0.0
        %723 = vmatprep.subr.mxu0 0.0
        %724 = vmatpush1.msra.mxu0 0.0
        %725 = vmatprep.subr.mxu0 0.0
        %726 = vmatpush1.msra.mxu0 0.0
        %727 = vmatprep.subr.mxu0 0.0
        %728 = vmatpush1.msra.mxu0 0.0
        %729 = vmatprep.subr.mxu0 0.0
        %730 = vmatpush1.msra.mxu0 0.0
        %731 = vmatprep.subr.mxu0 0.0
        %732 = vmatpush1.msra.mxu0 0.0
        %733 = vmatprep.subr.mxu0 0.0
        %734 = vmatpush1.msra.mxu0 0.0
        %735 = vmatprep.subr.mxu0 0.0
        %736 = vmatpush1.msra.mxu0 0.0
        %737 = vmatprep.subr.mxu0 0.0
        %738 = vmatpush1.msra.mxu0 0.0
        %739 = vmatprep.subr.mxu0 0.0
        %740 = vmatpush1.msra.mxu0 0.0
        %741 = vmatprep.mubr.f32.mxu0 0.0
        %742 = vmatmul.mubr.f32.gmra.mrb[0].mxu0 %v675
        %v743 = vpop.f32.mrb[0].mxu0
        %v744 = vadd.f32 0.0, %v743
        %v745 = vpop.f32.mrb[0].mxu0
        %746 = vdwg.mxu0
        %747 = vrot.lane.b32.xlu0 %v573, 112
        %v748 = vpop.permute.xlu0 %747
        %749 = vrot.lane.b32.xlu0 %v573, 80
        %v750 = vpop.permute.xlu0 %749
        %v751 = vsel %vm583, %v748, 0
        %v753 = vsel %vm583, %v750, 0
        %755 = vmatprep.subr.mxu0 0.0
        %756 = vmatpush1.xpose.msra.mxu0 %v753
        %757 = vmatprep.subr.mxu0 0.0
        %758 = vmatpush1.xpose.msra.mxu0 0.0
        %759 = vmatprep.subr.mxu0 0.0
        %760 = vmatpush1.xpose.msra.mxu0 0.0
        %761 = vmatprep.subr.mxu0 0.0
        %762 = vmatpush1.xpose.msra.mxu0 0.0
        %763 = vmatprep.subr.mxu0 0.0
        %764 = vmatpush1.xpose.msra.mxu0 0.0
        %765 = vmatprep.subr.mxu0 0.0
        %766 = vmatpush1.xpose.msra.mxu0 0.0
        %767 = vmatprep.subr.mxu0 0.0
        %768 = vmatpush1.xpose.msra.mxu0 0.0
        %769 = vmatprep.subr.mxu0 0.0
        %770 = vmatpush1.xpose.msra.mxu0 0.0
        %771 = vmatprep.subr.mxu0 0.0
        %772 = vmatpush1.xpose.msra.mxu0 0.0
        %773 = vmatprep.subr.mxu0 0.0
        %774 = vmatpush1.xpose.msra.mxu0 0.0
        %775 = vmatprep.subr.mxu0 0.0
        %776 = vmatpush1.xpose.msra.mxu0 0.0
        %777 = vmatprep.subr.mxu0 0.0
        %778 = vmatpush1.xpose.msra.mxu0 0.0
        %779 = vmatprep.subr.mxu0 0.0
        %780 = vmatpush1.xpose.msra.mxu0 0.0
        %781 = vmatprep.subr.mxu0 0.0
        %782 = vmatpush1.xpose.msra.mxu0 0.0
        %783 = vmatprep.subr.mxu0 0.0
        %784 = vmatpush1.xpose.msra.mxu0 0.0
        %785 = vmatprep.subr.mxu0 0.0
        %786 = vmatpush1.xpose.msra.mxu0 0.0
        %787 = vmatprep.subr.mxu0 0.0
        %788 = vmatpush1.xpose.msra.mxu0 0.0
        %789 = vmatprep.subr.mxu0 0.0
        %790 = vmatpush1.xpose.msra.mxu0 0.0
        %791 = vmatprep.subr.mxu0 0.0
        %792 = vmatpush1.xpose.msra.mxu0 0.0
        %793 = vmatprep.subr.mxu0 0.0
        %794 = vmatpush1.xpose.msra.mxu0 0.0
        %795 = vmatprep.subr.mxu0 0.0
        %796 = vmatpush1.xpose.msra.mxu0 0.0
        %797 = vmatprep.subr.mxu0 0.0
        %798 = vmatpush1.xpose.msra.mxu0 0.0
        %799 = vmatprep.subr.mxu0 0.0
        %800 = vmatpush1.xpose.msra.mxu0 0.0
        %801 = vmatprep.subr.mxu0 0.0
        %802 = vmatpush1.xpose.msra.mxu0 0.0
        %803 = vmatprep.subr.mxu0 0.0
        %804 = vmatpush1.xpose.msra.mxu0 0.0
        %805 = vmatprep.subr.mxu0 0.0
        %806 = vmatpush1.xpose.msra.mxu0 0.0
        %807 = vmatprep.subr.mxu0 0.0
        %808 = vmatpush1.xpose.msra.mxu0 0.0
        %809 = vmatprep.subr.mxu0 0.0
        %810 = vmatpush1.xpose.msra.mxu0 0.0
        %811 = vmatprep.subr.mxu0 0.0
        %812 = vmatpush1.xpose.msra.mxu0 0.0
        %813 = vmatprep.subr.mxu0 0.0
        %814 = vmatpush1.xpose.msra.mxu0 0.0
        %815 = vmatprep.subr.mxu0 0.0
        %816 = vmatpush1.xpose.msra.mxu0 0.0
        %817 = vmatprep.subr.mxu0 0.0
        %818 = vmatpush1.xpose.msra.mxu0 0.0
        %819 = vmatprep.mubr.f32.mxu0 0.0
        %820 = vmatmul.mubr.f32.gmra.mrb[0].mxu0 %v751
        %v821 = vpop.f32.mrb[0].mxu0
        %v822 = vadd.f32 0.0, %v821
        %v823 = vpop.f32.mrb[0].mxu0
        %824 = vdwg.mxu0
        %v825 = vmul.f32 %v822, 0.25
        %v826 = vsel %vm659, %v825, -inf
        %827 = vmax.xlane.f32.xlu0 %v826
        %v828 = vpop.xlane.xlu0 %827
        %v829 = vsub.f32 %v825, %v828
        %v830 = vmul.f32 %v829, 1.442695
        %v831 = vpow.pop %v830
        %v832 = vsel %vm659, %v831, 0.0
        %833 = vadd.xlane.f32.xlu0 %v832
        %v834 = vpop.xlane.xlu0 %833
        %v835 = vrcp.pop %v834
        %v836 = vmul.f32 %v831, %v835
        %837 = vrot.lane.b32.xlu0 %v573, 48
        %v838 = vpop.permute.xlu0 %837
        %v841 = vsel %vm659, %v836, 0
        %843 = vmatprep.subr.mxu0 0.0
        %844 = vmatpush1.msra.mxu0 %v838
        %845 = vmatprep.subr.mxu0 0.0
        %846 = vmatpush1.msra.mxu0 0.0
        %847 = vmatprep.subr.mxu0 0.0
        %848 = vmatpush1.msra.mxu0 0.0
        %849 = vmatprep.subr.mxu0 0.0
        %850 = vmatpush1.msra.mxu0 0.0
        %851 = vmatprep.subr.mxu0 0.0
        %852 = vmatpush1.msra.mxu0 0.0
        %853 = vmatprep.subr.mxu0 0.0
        %854 = vmatpush1.msra.mxu0 0.0
        %855 = vmatprep.subr.mxu0 0.0
        %856 = vmatpush1.msra.mxu0 0.0
        %857 = vmatprep.subr.mxu0 0.0
        %858 = vmatpush1.msra.mxu0 0.0
        %859 = vmatprep.subr.mxu0 0.0
        %860 = vmatpush1.msra.mxu0 0.0
        %861 = vmatprep.subr.mxu0 0.0
        %862 = vmatpush1.msra.mxu0 0.0
        %863 = vmatprep.subr.mxu0 0.0
        %864 = vmatpush1.msra.mxu0 0.0
        %865 = vmatprep.subr.mxu0 0.0
        %866 = vmatpush1.msra.mxu0 0.0
        %867 = vmatprep.subr.mxu0 0.0
        %868 = vmatpush1.msra.mxu0 0.0
        %869 = vmatprep.subr.mxu0 0.0
        %870 = vmatpush1.msra.mxu0 0.0
        %871 = vmatprep.subr.mxu0 0.0
        %872 = vmatpush1.msra.mxu0 0.0
        %873 = vmatprep.subr.mxu0 0.0
        %874 = vmatpush1.msra.mxu0 0.0
        %875 = vmatprep.subr.mxu0 0.0
        %876 = vmatpush1.msra.mxu0 0.0
        %877 = vmatprep.subr.mxu0 0.0
        %878 = vmatpush1.msra.mxu0 0.0
        %879 = vmatprep.subr.mxu0 0.0
        %880 = vmatpush1.msra.mxu0 0.0
        %881 = vmatprep.subr.mxu0 0.0
        %882 = vmatpush1.msra.mxu0 0.0
        %883 = vmatprep.subr.mxu0 0.0
        %884 = vmatpush1.msra.mxu0 0.0
        %885 = vmatprep.subr.mxu0 0.0
        %886 = vmatpush1.msra.mxu0 0.0
        %887 = vmatprep.subr.mxu0 0.0
        %888 = vmatpush1.msra.mxu0 0.0
        %889 = vmatprep.subr.mxu0 0.0
        %890 = vmatpush1.msra.mxu0 0.0
        %891 = vmatprep.subr.mxu0 0.0
        %892 = vmatpush1.msra.mxu0 0.0
        %893 = vmatprep.subr.mxu0 0.0
        %894 = vmatpush1.msra.mxu0 0.0
        %895 = vmatprep.subr.mxu0 0.0
        %896 = vmatpush1.msra.mxu0 0.0
        %897 = vmatprep.subr.mxu0 0.0
        %898 = vmatpush1.msra.mxu0 0.0
        %899 = vmatprep.subr.mxu0 0.0
        %900 = vmatpush1.msra.mxu0 0.0
        %901 = vmatprep.subr.mxu0 0.0
        %902 = vmatpush1.msra.mxu0 0.0
        %903 = vmatprep.subr.mxu0 0.0
        %904 = vmatpush1.msra.mxu0 0.0
        %905 = vmatprep.subr.mxu0 0.0
        %906 = vmatpush1.msra.mxu0 0.0
        %907 = vmatprep.mubr.f32.mxu0 0.0
        %908 = vmatmul.mubr.f32.gmra.mrb[0].mxu0 %v841
        %v909 = vpop.f32.mrb[0].mxu0
        %v910 = vadd.f32 0.0, %v909
        %v911 = vpop.f32.mrb[0].mxu0
        %912 = vdwg.mxu0
        %v914 = vsel %vm583, %v910, 0
        %916 = vmatprep.subr.mxu0 0.0
        %917 = vmatpush1.msra.mxu0 %v578
        %918 = vmatprep.subr.mxu0 0.0
        %919 = vmatpush1.msra.mxu0 %v579
        %920 = vmatprep.subr.mxu0 0.0
        %921 = vmatpush1.msra.mxu0 0.0
        %922 = vmatprep.subr.mxu0 0.0
        %923 = vmatpush1.msra.mxu0 0.0
        %924 = vmatprep.subr.mxu0 0.0
        %925 = vmatpush1.msra.mxu0 0.0
        %926 = vmatprep.subr.mxu0 0.0
        %927 = vmatpush1.msra.mxu0 0.0
        %928 = vmatprep.subr.mxu0 0.0
        %929 = vmatpush1.msra.mxu0 0.0
        %930 = vmatprep.subr.mxu0 0.0
        %931 = vmatpush1.msra.mxu0 0.0
        %932 = vmatprep.subr.mxu0 0.0
        %933 = vmatpush1.msra.mxu0 0.0
        %934 = vmatprep.subr.mxu0 0.0
        %935 = vmatpush1.msra.mxu0 0.0
        %936 = vmatprep.subr.mxu0 0.0
        %937 = vmatpush1.msra.mxu0 0.0
        %938 = vmatprep.subr.mxu0 0.0
        %939 = vmatpush1.msra.mxu0 0.0
        %940 = vmatprep.subr.mxu0 0.0
        %941 = vmatpush1.msra.mxu0 0.0
        %942 = vmatprep.subr.mxu0 0.0
        %943 = vmatpush1.msra.mxu0 0.0
        %944 = vmatprep.subr.mxu0 0.0
        %945 = vmatpush1.msra.mxu0 0.0
        %946 = vmatprep.subr.mxu0 0.0
        %947 = vmatpush1.msra.mxu0 0.0
        %948 = vmatprep.subr.mxu0 0.0
        %949 = vmatpush1.msra.mxu0 0.0
        %950 = vmatprep.subr.mxu0 0.0
        %951 = vmatpush1.msra.mxu0 0.0
        %952 = vmatprep.subr.mxu0 0.0
        %953 = vmatpush1.msra.mxu0 0.0
        %954 = vmatprep.subr.mxu0 0.0
        %955 = vmatpush1.msra.mxu0 0.0
        %956 = vmatprep.subr.mxu0 0.0
        %957 = vmatpush1.msra.mxu0 0.0
        %958 = vmatprep.subr.mxu0 0.0
        %959 = vmatpush1.msra.mxu0 0.0
        %960 = vmatprep.subr.mxu0 0.0
        %961 = vmatpush1.msra.mxu0 0.0
        %962 = vmatprep.subr.mxu0 0.0
        %963 = vmatpush1.msra.mxu0 0.0
        %964 = vmatprep.subr.mxu0 0.0
        %965 = vmatpush1.msra.mxu0 0.0
        %966 = vmatprep.subr.mxu0 0.0
        %967 = vmatpush1.msra.mxu0 0.0
        %968 = vmatprep.subr.mxu0 0.0
        %969 = vmatpush1.msra.mxu0 0.0
        %970 = vmatprep.subr.mxu0 0.0
        %971 = vmatpush1.msra.mxu0 0.0
        %972 = vmatprep.subr.mxu0 0.0
        %973 = vmatpush1.msra.mxu0 0.0
        %974 = vmatprep.subr.mxu0 0.0
        %975 = vmatpush1.msra.mxu0 0.0
        %976 = vmatprep.subr.mxu0 0.0
        %977 = vmatpush1.msra.mxu0 0.0
        %978 = vmatprep.subr.mxu0 0.0
        %979 = vmatpush1.msra.mxu0 0.0
        %980 = vmatprep.mubr.f32.mxu0 0.0
        %981 = vmatmul.mubr.f32.gmra.mrb[0].mxu0 %v914
        %v982 = vpop.f32.mrb[0].mxu0
        %v983 = vadd.f32 0.0, %v982
        %v984 = vpop.f32.mrb[0].mxu0
        %985 = vdwg.mxu0
        %v987 = vsel %vm583, %v744, 0
        %989 = vmatprep.subr.mxu0 0.0
        %990 = vmatpush1.msra.mxu0 %v576
        %991 = vmatprep.subr.mxu0 0.0
        %992 = vmatpush1.msra.mxu0 %v577
        %993 = vmatprep.subr.mxu0 0.0
        %994 = vmatpush1.msra.mxu0 0.0
        %995 = vmatprep.subr.mxu0 0.0
        %996 = vmatpush1.msra.mxu0 0.0
        %997 = vmatprep.subr.mxu0 0.0
        %998 = vmatpush1.msra.mxu0 0.0
        %999 = vmatprep.subr.mxu0 0.0
        %1000 = vmatpush1.msra.mxu0 0.0
        %1001 = vmatprep.subr.mxu0 0.0
        %1002 = vmatpush1.msra.mxu0 0.0
        %1003 = vmatprep.subr.mxu0 0.0
        %1004 = vmatpush1.msra.mxu0 0.0
        %1005 = vmatprep.subr.mxu0 0.0
        %1006 = vmatpush1.msra.mxu0 0.0
        %1007 = vmatprep.subr.mxu0 0.0
        %1008 = vmatpush1.msra.mxu0 0.0
        %1009 = vmatprep.subr.mxu0 0.0
        %1010 = vmatpush1.msra.mxu0 0.0
        %1011 = vmatprep.subr.mxu0 0.0
        %1012 = vmatpush1.msra.mxu0 0.0
        %1013 = vmatprep.subr.mxu0 0.0
        %1014 = vmatpush1.msra.mxu0 0.0
        %1015 = vmatprep.subr.mxu0 0.0
        %1016 = vmatpush1.msra.mxu0 0.0
        %1017 = vmatprep.subr.mxu0 0.0
        %1018 = vmatpush1.msra.mxu0 0.0
        %1019 = vmatprep.subr.mxu0 0.0
        %1020 = vmatpush1.msra.mxu0 0.0
        %1021 = vmatprep.subr.mxu0 0.0
        %1022 = vmatpush1.msra.mxu0 0.0
        %1023 = vmatprep.subr.mxu0 0.0
        %1024 = vmatpush1.msra.mxu0 0.0
        %1025 = vmatprep.subr.mxu0 0.0
        %1026 = vmatpush1.msra.mxu0 0.0
        %1027 = vmatprep.subr.mxu0 0.0
        %1028 = vmatpush1.msra.mxu0 0.0
        %1029 = vmatprep.subr.mxu0 0.0
        %1030 = vmatpush1.msra.mxu0 0.0
        %1031 = vmatprep.subr.mxu0 0.0
        %1032 = vmatpush1.msra.mxu0 0.0
        %1033 = vmatprep.subr.mxu0 0.0
        %1034 = vmatpush1.msra.mxu0 0.0
        %1035 = vmatprep.subr.mxu0 0.0
        %1036 = vmatpush1.msra.mxu0 0.0
        %1037 = vmatprep.subr.mxu0 0.0
        %1038 = vmatpush1.msra.mxu0 0.0
        %1039 = vmatprep.subr.mxu0 0.0
        %1040 = vmatpush1.msra.mxu0 0.0
        %1041 = vmatprep.subr.mxu0 0.0
        %1042 = vmatpush1.msra.mxu0 0.0
        %1043 = vmatprep.subr.mxu0 0.0
        %1044 = vmatpush1.msra.mxu0 0.0
        %1045 = vmatprep.subr.mxu0 0.0
        %1046 = vmatpush1.msra.mxu0 0.0
        %1047 = vmatprep.subr.mxu0 0.0
        %1048 = vmatpush1.msra.mxu0 0.0
        %1049 = vmatprep.subr.mxu0 0.0
        %1050 = vmatpush1.msra.mxu0 0.0
        %1051 = vmatprep.subr.mxu0 0.0
        %1052 = vmatpush1.msra.mxu0 0.0
        %1053 = vmatprep.mubr.f32.mxu0 0.0
        %1054 = vmatmul.mubr.f32.gmra.mrb[0].mxu0 %v987
        %v1055 = vpop.f32.mrb[0].mxu0
        %v1056 = vadd.f32 %v983, %v1055
        %v1057 = vpop.f32.mrb[0].mxu0
        %1058 = vdwg.mxu0
        %v1059 = vld [vmem:[%s4] sm:$0x1]
        %v1061 = vlaneseq
        %v1062 = vshrl.u32 %v1061, 7
        %v1063 = vsub.s32 0, %v1062
        %v1064 = vrot.slane %v1059, %v1063
        %v1066 = vadd.f32 %v1056, %v1064
        %v1067 = vadd.f32 %v490, %v1066
        %v1068 = vsel %vm502, %v1067, 0.0
        %1069 = vadd.xlane.f32.xlu0 %v1068
        %v1070 = vpop.xlane.xlu0 %1069
        %v1071 = vrcp.pop 32.0
        %v1072 = vmul.f32 %v1070, %v1071
        %v1073 = vsub.f32 %v1067, %v1072
        %v1074 = vmul.f32 %v1073, %v1073
        %v1075 = vsel %vm502, %v1074, 0.0
        %1076 = vadd.xlane.f32.xlu0 %v1075
        %v1077 = vpop.xlane.xlu0 %1076
        %v1078 = vmul.f32 %v1077, %v1071
        %v1079 = vadd.f32 %v1078, 1e-05
        %v1080 = vrsqrt.pop %v1079
        %v1081 = vmul.f32 %v1073, %v1080
        %v1082 = vld [vmem:[%s5] sm:$0x1]
        %v1084 = vlaneseq
        %v1085 = vshrl.u32 %v1084, 7
        %v1086 = vsub.s32 0, %v1085
        %v1087 = vrot.slane %v1082, %v1086
        %v1089 = vmul.f32 %v1081, %v1087
        %v1090 = vld [vmem:[%s6] sm:$0x1]
        %v1092 = vlaneseq
        %v1093 = vshrl.u32 %v1092, 7
        %v1094 = vsub.s32 0, %v1093
        %v1095 = vrot.slane %v1090, %v1094
        %v1097 = vadd.f32 %v1089, %v1095
        %v1098 = vld [vmem:[%s7] sm:$0xff]
        %v1099 = vld [vmem:[%s7 + $0x8] sm:$0xff]
        %v1100 = vld [vmem:[%s7 + $0x10] sm:$0xff]
        %v1101 = vld [vmem:[%s7 + $0x18] sm:$0xff]
        %v1102 = vld [vmem:[%s7 + $0x20] sm:$0xff]
        %v1103 = vld [vmem:[%s7 + $0x28] sm:$0xff]
        %v1104 = vld [vmem:[%s7 + $0x30] sm:$0xff]
        %v1105 = vld [vmem:[%s7 + $0x38] sm:$0xff]
        %v1106 = vld [vmem:[%s7 + $0x40] sm:$0xff]
        %v1107 = vld [vmem:[%s7 + $0x48] sm:$0xff]
        %v1108 = vld [vmem:[%s7 + $0x50] sm:$0xff]
        %v1109 = vld [vmem:[%s7 + $0x58] sm:$0xff]
        %v1110 = vld [vmem:[%s7 + $0x60] sm:$0xff]
        %v1111 = vld [vmem:[%s7 + $0x68] sm:$0xff]
        %v1112 = vld [vmem:[%s7 + $0x70] sm:$0xff]
        %v1113 = vld [vmem:[%s7 + $0x78] sm:$0xff]
        %v1114 = vld [vmem:[%s7 + $0x80] sm:$0xff]
        %v1115 = vld [vmem:[%s7 + $0x88] sm:$0xff]
        %v1116 = vld [vmem:[%s7 + $0x90] sm:$0xff]
        %v1117 = vld [vmem:[%s7 + $0x98] sm:$0xff]
        %v1118 = vld [vmem:[%s7 + $0xa0] sm:$0xff]
        %v1119 = vld [vmem:[%s7 + $0xa8] sm:$0xff]
        %v1120 = vld [vmem:[%s7 + $0xb0] sm:$0xff]
        %v1121 = vld [vmem:[%s7 + $0xb8] sm:$0xff]
        %v1122 = vld [vmem:[%s7 + $0xc0] sm:$0xff]
        %v1123 = vld [vmem:[%s7 + $0xc8] sm:$0xff]
        %v1124 = vld [vmem:[%s7 + $0xd0] sm:$0xff]
        %v1125 = vld [vmem:[%s7 + $0xd8] sm:$0xff]
        %v1126 = vld [vmem:[%s7 + $0xe0] sm:$0xff]
        %v1127 = vld [vmem:[%s7 + $0xe8] sm:$0xff]
        %v1128 = vld [vmem:[%s7 + $0xf0] sm:$0xff]
        %v1129 = vld [vmem:[%s7 + $0xf8] sm:$0xff]
        %v1130 = vld [vmem:[%s7 + $0x100] sm:$0xff]
        %v1131 = vld [vmem:[%s7 + $0x108] sm:$0xff]
        %v1132 = vld [vmem:[%s7 + $0x110] sm:$0xff]
        %v1133 = vld [vmem:[%s7 + $0x118] sm:$0xff]
        %v1134 = vld [vmem:[%s7 + $0x120] sm:$0xff]
        %v1135 = vld [vmem:[%s7 + $0x128] sm:$0xff]
        %v1136 = vld [vmem:[%s7 + $0x130] sm:$0xff]
        %v1137 = vld [vmem:[%s7 + $0x138] sm:$0xff]
        %v1138 = vld [vmem:[%s7 + $0x140] sm:$0xff]
        %v1139 = vld [vmem:[%s7 + $0x148] sm:$0xff]
        %v1140 = vld [vmem:[%s7 + $0x150] sm:$0xff]
        %v1141 = vld [vmem:[%s7 + $0x158] sm:$0xff]
        %v1142 = vld [vmem:[%s7 + $0x160] sm:$0xff]
        %v1143 = vld [vmem:[%s7 + $0x168] sm:$0xff]
        %v1144 = vld [vmem:[%s7 + $0x170] sm:$0xff]
        %v1145 = vld [vmem:[%s7 + $0x178] sm:$0xff]
        %v1146 = vld [vmem:[%s7 + $0x180] sm:$0xff]
        %v1147 = vld [vmem:[%s7 + $0x188] sm:$0xff]
        %v1148 = vld [vmem:[%s7 + $0x190] sm:$0xff]
        %v1149 = vld [vmem:[%s7 + $0x198] sm:$0xff]
        %v1150 = vld [vmem:[%s7 + $0x1a0] sm:$0xff]
        %v1151 = vld [vmem:[%s7 + $0x1a8] sm:$0xff]
        %v1152 = vld [vmem:[%s7 + $0x1b0] sm:$0xff]
        %v1153 = vld [vmem:[%s7 + $0x1b8] sm:$0xff]
        %v1154 = vld [vmem:[%s7 + $0x1c0] sm:$0xff]
        %v1155 = vld [vmem:[%s7 + $0x1c8] sm:$0xff]
        %v1156 = vld [vmem:[%s7 + $0x1d0] sm:$0xff]
        %v1157 = vld [vmem:[%s7 + $0x1d8] sm:$0xff]
        %v1158 = vld [vmem:[%s7 + $0x1e0] sm:$0xff]
        %v1159 = vld [vmem:[%s7 + $0x1e8] sm:$0xff]
        %v1160 = vld [vmem:[%s7 + $0x1f0] sm:$0xff]
        %v1161 = vld [vmem:[%s7 + $0x1f8] sm:$0xff]
        %v1162 = vld [vmem:[%s8] sm:$0xff]
        %v1163 = vld [vmem:[%s8 + $0x8] sm:$0xff]
        %v1166 = vlaneseq
        %v1167 = vshrl.u32 %v1166, 7
        %v1168 = vsub.s32 0, %v1167
        %v1169 = vrot.slane %v1162, %v1168
        %v1170 = vlaneseq
        %v1171 = vshrl.u32 %v1170, 7
        %v1172 = vsub.s32 1, %v1171
        %v1173 = vrot.slane %v1162, %v1172
        %v1174 = vlaneseq
        %v1175 = vshrl.u32 %v1174, 7
        %v1176 = vsub.s32 2, %v1175
        %v1177 = vrot.slane %v1162, %v1176
        %v1178 = vlaneseq
        %v1179 = vshrl.u32 %v1178, 7
        %v1180 = vsub.s32 3, %v1179
        %v1181 = vrot.slane %v1162, %v1180
        %v1182 = vlaneseq
        %v1183 = vshrl.u32 %v1182, 7
        %v1184 = vsub.s32 4, %v1183
        %v1185 = vrot.slane %v1162, %v1184
        %v1186 = vlaneseq
        %v1187 = vshrl.u32 %v1186, 7
        %v1188 = vsub.s32 5, %v1187
        %v1189 = vrot.slane %v1162, %v1188
        %v1190 = vlaneseq
        %v1191 = vshrl.u32 %v1190, 7
        %v1192 = vsub.s32 6, %v1191
        %v1193 = vrot.slane %v1162, %v1192
        %v1194 = vlaneseq
        %v1195 = vshrl.u32 %v1194, 7
        %v1196 = vsub.s32 7, %v1195
        %v1197 = vrot.slane %v1162, %v1196
        %v1198 = vlaneseq
        %v1199 = vshrl.u32 %v1198, 7
        %v1200 = vsub.s32 0, %v1199
        %v1201 = vrot.slane %v1163, %v1200
        %v1202 = vlaneseq
        %v1203 = vshrl.u32 %v1202, 7
        %v1204 = vsub.s32 1, %v1203
        %v1205 = vrot.slane %v1163, %v1204
        %v1206 = vlaneseq
        %v1207 = vshrl.u32 %v1206, 7
        %v1208 = vsub.s32 2, %v1207
        %v1209 = vrot.slane %v1163, %v1208
        %v1210 = vlaneseq
        %v1211 = vshrl.u32 %v1210, 7
        %v1212 = vsub.s32 3, %v1211
        %v1213 = vrot.slane %v1163, %v1212
        %v1214 = vlaneseq
        %v1215 = vshrl.u32 %v1214, 7
        %v1216 = vsub.s32 4, %v1215
        %v1217 = vrot.slane %v1163, %v1216
        %v1218 = vlaneseq
        %v1219 = vshrl.u32 %v1218, 7
        %v1220 = vsub.s32 5, %v1219
        %v1221 = vrot.slane %v1163, %v1220
        %v1222 = vlaneseq
        %v1223 = vshrl.u32 %v1222, 7
        %v1224 = vsub.s32 6, %v1223
        %v1225 = vrot.slane %v1163, %v1224
        %v1226 = vlaneseq
        %v1227 = vshrl.u32 %v1226, 7
        %v1228 = vsub.s32 7, %v1227
        %v1229 = vrot.slane %v1163, %v1228
        %v1247 = vsel %vm502, %v1097, 0
        %1249 = vmatprep.subr.mxu0 %v1099
        %1250 = vmatpush1.msra.mxu0 %v1098
        %1251 = vmatprep.subr.mxu0 %v1115
        %1252 = vmatpush1.msra.mxu0 %v1114
        %1253 = vmatprep.subr.mxu0 %v1131
        %1254 = vmatpush1.msra.mxu0 %v1130
        %1255 = vmatprep.subr.mxu0 %v1147
        %1256 = vmatpush1.msra.mxu0 %v1146
        %1257 = vmatprep.subr.mxu0 0.0
        %1258 = vmatpush1.msra.mxu0 0.0
        %1259 = vmatprep.subr.mxu0 0.0
        %1260 = vmatpush1.msra.mxu0 0.0
        %1261 = vmatprep.subr.mxu0 0.0
        %1262 = vmatpush1.msra.mxu0 0.0
        %1263 = vmatprep.subr.mxu0 0.0
        %1264 = vmatpush1.msra.mxu0 0.0
        %1265 = vmatprep.subr.mxu0 0.0
        %1266 = vmatpush1.msra.mxu0 0.0
        %1267 = vmatprep.subr.mxu0 0.0
        %1268 = vmatpush1.msra.mxu0 0.0
        %1269 = vmatprep.subr.mxu0 0.0
        %1270 = vmatpush1.msra.mxu0 0.0
        %1271 = vmatprep.subr.mxu0 0.0
        %1272 = vmatpush1.msra.mxu0 0.0
        %1273 = vmatprep.subr.mxu0 0.0
        %1274 = vmatpush1.msra.mxu0 0.0
        %1275 = vmatprep.subr.mxu0 0.0
        %1276 = vmatpush1.msra.mxu0 0.0
        %1277 = vmatprep.subr.mxu0 0.0
        %1278 = vmatpush1.msra.mxu0 0.0
        %1279 = vmatprep.subr.mxu0 0.0
        %1280 = vmatpush1.msra.mxu0 0.0
        %1281 = vmatprep.subr.mxu0 0.0
        %1282 = vmatpush1.msra.mxu0 0.0
        %1283 = vmatprep.subr.mxu0 0.0
        %1284 = vmatpush1.msra.mxu0 0.0
        %1285 = vmatprep.subr.mxu0 0.0
        %1286 = vmatpush1.msra.mxu0 0.0
        %1287 = vmatprep.subr.mxu0 0.0
        %1288 = vmatpush1.msra.mxu0 0.0
        %1289 = vmatprep.subr.mxu0 0.0
        %1290 = vmatpush1.msra.mxu0 0.0
        %1291 = vmatprep.subr.mxu0 0.0
        %1292 = vmatpush1.msra.mxu0 0.0
        %1293 = vmatprep.subr.mxu0 0.0
        %1294 = vmatpush1.msra.mxu0 0.0
        %1295 = vmatprep.subr.mxu0 0.0
        %1296 = vmatpush1.msra.mxu0 0.0
        %1297 = vmatprep.subr.mxu0 0.0
        %1298 = vmatpush1.msra.mxu0 0.0
        %1299 = vmatprep.subr.mxu0 0.0
        %1300 = vmatpush1.msra.mxu0 0.0
        %1301 = vmatprep.subr.mxu0 0.0
        %1302 = vmatpush1.msra.mxu0 0.0
        %1303 = vmatprep.subr.mxu0 0.0
        %1304 = vmatpush1.msra.mxu0 0.0
        %1305 = vmatprep.subr.mxu0 0.0
        %1306 = vmatpush1.msra.mxu0 0.0
        %1307 = vmatprep.subr.mxu0 0.0
        %1308 = vmatpush1.msra.mxu0 0.0
        %1309 = vmatprep.subr.mxu0 0.0
        %1310 = vmatpush1.msra.mxu0 0.0
        %1311 = vmatprep.subr.mxu0 0.0
        %1312 = vmatpush1.msra.mxu0 0.0
        %1313 = vmatprep.mubr.f32.mxu0 0.0
        %1314 = vmatmul.mubr.f32.gmra.mrb[0].mxu0 %v1247
        %v1315 = vpop.f32.mrb[0].mxu0
        %v1316 = vadd.f32 %v1169, %v1315
        %v1317 = vpop.f32.mrb[0].mxu0
        %v1318 = vadd.f32 %v1173, %v1317
        %1319 = vdwg.mxu0
        %1320 = vmatprep.subr.mxu0 %v1101
        %1321 = vmatpush1.msra.mxu0 %v1100
        %1322 = vmatprep.subr.mxu0 %v1117
        %1323 = vmatpush1.msra.mxu0 %v1116
        %1324 = vmatprep.subr.mxu0 %v1133
        %1325 = vmatpush1.msra.mxu0 %v1132
        %1326 = vmatprep.subr.mxu0 %v1149
        %1327 = vmatpush1.msra.mxu0 %v1148
        %1328 = vmatprep.subr.mxu0 0.0
        %1329 = vmatpush1.msra.mxu0 0.0
        %1330 = vmatprep.subr.mxu0 0.0
        %1331 = vmatpush1.msra.mxu0 0.0
        %1332 = vmatprep.subr.mxu0 0.0
        %1333 = vmatpush1.msra.mxu0 0.0
        %1334 = vmatprep.subr.mxu0 0.0
        %1335 = vmatpush1.msra.mxu0 0.0
        %1336 = vmatprep.subr.mxu0 0.0
        %1337 = vmatpush1.msra.mxu0 0.0
        %1338 = vmatprep.subr.mxu0 0.0
        %1339 = vmatpush1.msra.mxu0 0.0
        %1340 = vmatprep.subr.mxu0 0.0
        %1341 = vmatpush1.msra.mxu0 0.0
        %1342 = vmatprep.subr.mxu0 0.0
        %1343 = vmatpush1.msra.mxu0 0.0
        %1344 = vmatprep.subr.mxu0 0.0
        %1345 = vmatpush1.msra.mxu0 0.0
        %1346 = vmatprep.subr.mxu0 0.0
        %1347 = vmatpush1.msra.mxu0 0.0
        %1348 = vmatprep.subr.mxu0 0.0
        %1349 = vmatpush1.msra.mxu0 0.0
        %1350 = vmatprep.subr.mxu0 0.0
        %1351 = vmatpush1.msra.mxu0 0.0
        %1352 = vmatprep.subr.mxu0 0.0
        %1353 = vmatpush1.msra.mxu0 0.0
        %1354 = vmatprep.subr.mxu0 0.0
        %1355 = vmatpush1.msra.mxu0 0.0
        %1356 = vmatprep.subr.mxu0 0.0
        %1357 = vmatpush1.msra.mxu0 0.0
        %1358 = vmatprep.subr.mxu0 0.0
        %1359 = vmatpush1.msra.mxu0 0.0
        %1360 = vmatprep.subr.mxu0 0.0
        %1361 = vmatpush1.msra.mxu0 0.0
        %1362 = vmatprep.subr.mxu0 0.0
        %1363 = vmatpush1.msra.mxu0 0.0
        %1364 = vmatprep.subr.mxu0 0.0
        %1365 = vmatpush1.msra.mxu0 0.0
        %1366 = vmatprep.subr.mxu0 0.0
        %1367 = vmatpush1.msra.mxu0 0.0
        %1368 = vmatprep.subr.mxu0 0.0
        %1369 = vmatpush1.msra.mxu0 0.0
        %1370 = vmatprep.subr.mxu0 0.0
        %1371 = vmatpush1.msra.mxu0 0.0
        %1372 = vmatprep.subr.mxu0 0.0
        %1373 = vmatpush1.msra.mxu0 0.0
        %1374 = vmatprep.subr.mxu0 0.0
        %1375 = vmatpush1.msra.mxu0 0.0
        %1376 = vmatprep.subr.mxu0 0.0
        %1377 = vmatpush1.msra.mxu0 0.0
        %1378 = vmatprep.subr.mxu0 0.0
        %1379 = vmatpush1.msra.mxu0 0.0
        %1380 = vmatprep.subr.mxu0 0.0
        %1381 = vmatpush1.msra.mxu0 0.0
        %1382 = vmatprep.subr.mxu0 0.0
        %1383 = vmatpush1.msra.mxu0 0.0
        %1384 = vmatprep.mubr.f32.mxu0 0.0
        %1385 = vmatmul.mubr.f32.gmra.mrb[0].mxu0 %v1247
        %v1386 = vpop.f32.mrb[0].mxu0
        %v1387 = vadd.f32 %v1177, %v1386
        %v1388 = vpop.f32.mrb[0].mxu0
        %v1389 = vadd.f32 %v1181, %v1388
        %1390 = vdwg.mxu0
        %1391 = vmatprep.subr.mxu0 %v1103
        %1392 = vmatpush1.msra.mxu0 %v1102
        %1393 = vmatprep.subr.mxu0 %v1119
        %1394 = vmatpush1.msra.mxu0 %v1118
        %1395 = vmatprep.subr.mxu0 %v1135
        %1396 = vmatpush1.msra.mxu0 %v1134
        %1397 = vmatprep.subr.mxu0 %v1151
        %1398 = vmatpush1.msra.mxu0 %v1150
        %1399 = vmatprep.subr.mxu0 0.0
        %1400 = vmatpush1.msra.mxu0 0.0
        %1401 = vmatprep.subr.mxu0 0.0
        %1402 = vmatpush1.msra.mxu0 0.0
        %1403 = vmatprep.subr.mxu0 0.0
        %1404 = vmatpush1.msra.mxu0 0.0
        %1405 = vmatprep.subr.mxu0 0.0
        %1406 = vmatpush1.msra.mxu0 0.0
        %1407 = vmatprep.subr.mxu0 0.0
        %1408 = vmatpush1.msra.mxu0 0.0
        %1409 = vmatprep.subr.mxu0 0.0
        %1410 = vmatpush1.msra.mxu0 0.0
        %1411 = vmatprep.subr.mxu0 0.0
        %1412 = vmatpush1.msra.mxu0 0.0
        %1413 = vmatprep.subr.mxu0 0.0
        %1414 = vmatpush1.msra.mxu0 0.0
        %1415 = vmatprep.subr.mxu0 0.0
        %1416 = vmatpush1.msra.mxu0 0.0
        %1417 = vmatprep.subr.mxu0 0.0
        %1418 = vmatpush1.msra.mxu0 0.0
        %1419 = vmatprep.subr.mxu0 0.0
        %1420 = vmatpush1.msra.mxu0 0.0
        %1421 = vmatprep.subr.mxu0 0.0
        %1422 = vmatpush1.msra.mxu0 0.0
        %1423 = vmatprep.subr.mxu0 0.0
        %1424 = vmatpush1.msra.mxu0 0.0
        %1425 = vmatprep.subr.mxu0 0.0
        %1426 = vmatpush1.msra.mxu0 0.0
        %1427 = vmatprep.subr.mxu0 0.0
        %1428 = vmatpush1.msra.mxu0 0.0
        %1429 = vmatprep.subr.mxu0 0.0
        %1430 = vmatpush1.msra.mxu0 0.0
        %1431 = vmatprep.subr.mxu0 0.0
        %1432 = vmatpush1.msra.mxu0 0.0
        %1433 = vmatprep.subr.mxu0 0.0
        %1434 = vmatpush1.msra.mxu0 0.0
        %1435 = vmatprep.subr.mxu0 0.0
        %1436 = vmatpush1.msra.mxu0 0.0
        %1437 = vmatprep.subr.mxu0 0.0
        %1438 = vmatpush1.msra.mxu0 0.0
        %1439 = vmatprep.subr.mxu0 0.0
        %1440 = vmatpush1.msra.mxu0 0.0
        %1441 = vmatprep.subr.mxu0 0.0
        %1442 = vmatpush1.msra.mxu0 0.0
        %1443 = vmatprep.subr.mxu0 0.0
        %1444 = vmatpush1.msra.mxu0 0.0
        %1445 = vmatprep.subr.mxu0 0.0
        %1446 = vmatpush1.msra.mxu0 0.0
        %1447 = vmatprep.subr.mxu0 0.0
        %1448 = vmatpush1.msra.mxu0 0.0
        %1449 = vmatprep.subr.mxu0 0.0
        %1450 = vmatpush1.msra.mxu0 0.0
        %1451 = vmatprep.subr.mxu0 0.0
        %1452 = vmatpush1.msra.mxu0 0.0
        %1453 = vmatprep.subr.mxu0 0.0
        %1454 = vmatpush1.msra.mxu0 0.0
        %1455 = vmatprep.mubr.f32.mxu0 0.0
        %1456 = vmatmul.mubr.f32.gmra.mrb[0].mxu0 %v1247
        %v1457 = vpop.f32.mrb[0].mxu0
        %v1458 = vadd.f32 %v1185, %v1457
        %v1459 = vpop.f32.mrb[0].mxu0
        %v1460 = vadd.f32 %v1189, %v1459
        %1461 = vdwg.mxu0
        %1462 = vmatprep.subr.mxu0 %v1105
        %1463 = vmatpush1.msra.mxu0 %v1104
        %1464 = vmatprep.subr.mxu0 %v1121
        %1465 = vmatpush1.msra.mxu0 %v1120
        %1466 = vmatprep.subr.mxu0 %v1137
        %1467 = vmatpush1.msra.mxu0 %v1136
        %1468 = vmatprep.subr.mxu0 %v1153
        %1469 = vmatpush1.msra.mxu0 %v1152
        %1470 = vmatprep.subr.mxu0 0.0
        %1471 = vmatpush1.msra.mxu0 0.0
        %1472 = vmatprep.subr.mxu0 0.0
        %1473 = vmatpush1.msra.mxu0 0.0
        %1474 = vmatprep.subr.mxu0 0.0
        %1475 = vmatpush1.msra.mxu0 0.0
        %1476 = vmatprep.subr.mxu0 0.0
        %1477 = vmatpush1.msra.mxu0 0.0
        %1478 = vmatprep.subr.mxu0 0.0
        %1479 = vmatpush1.msra.mxu0 0.0
        %1480 = vmatprep.subr.mxu0 0.0
        %1481 = vmatpush1.msra.mxu0 0.0
        %1482 = vmatprep.subr.mxu0 0.0
        %1483 = vmatpush1.msra.mxu0 0.0
        %1484 = vmatprep.subr.mxu0 0.0
        %1485 = vmatpush1.msra.mxu0 0.0
        %1486 = vmatprep.subr.mxu0 0.0
        %1487 = vmatpush1.msra.mxu0 0.0
        %1488 = vmatprep.subr.mxu0 0.0
        %1489 = vmatpush1.msra.mxu0 0.0
        %1490 = vmatprep.subr.mxu0 0.0
        %1491 = vmatpush1.msra.mxu0 0.0
        %1492 = vmatprep.subr.mxu0 0.0
        %1493 = vmatpush1.msra.mxu0 0.0
        %1494 = vmatprep.subr.mxu0 0.0
        %1495 = vmatpush1.msra.mxu0 0.0
        %1496 = vmatprep.subr.mxu0 0.0
        %1497 = vmatpush1.msra.mxu0 0.0
        %1498 = vmatprep.subr.mxu0 0.0
        %1499 = vmatpush1.msra.mxu0 0.0
        %1500 = vmatprep.subr.mxu0 0.0
        %1501 = vmatpush1.msra.mxu0 0.0
        %1502 = vmatprep.subr.mxu0 0.0
        %1503 = vmatpush1.msra.mxu0 0.0
        %1504 = vmatprep.subr.mxu0 0.0
        %1505 = vmatpush1.msra.mxu0 0.0
        %1506 = vmatprep.subr.mxu0 0.0
        %1507 = vmatpush1.msra.mxu0 0.0
        %1508 = vmatprep.subr.mxu0 0.0
        %1509 = vmatpush1.msra.mxu0 0.0
        %1510 = vmatprep.subr.mxu0 0.0
        %1511 = vmatpush1.msra.mxu0 0.0
        %1512 = vmatprep.subr.mxu0 0.0
        %1513 = vmatpush1.msra.mxu0 0.0
        %1514 = vmatprep.subr.mxu0 0.0
        %1515 = vmatpush1.msra.mxu0 0.0
        %1516 = vmatprep.subr.mxu0 0.0
        %1517 = vmatpush1.msra.mxu0 0.0
        %1518 = vmatprep.subr.mxu0 0.0
        %1519 = vmatpush1.msra.mxu0 0.0
        %1520 = vmatprep.subr.mxu0 0.0
        %1521 = vmatpush1.msra.mxu0 0.0
        %1522 = vmatprep.subr.mxu0 0.0
        %1523 = vmatpush1.msra.mxu0 0.0
        %1524 = vmatprep.subr.mxu0 0.0
        %1525 = vmatpush1.msra.mxu0 0.0
        %1526 = vmatprep.mubr.f32.mxu0 0.0
        %1527 = vmatmul.mubr.f32.gmra.mrb[0].mxu0 %v1247
        %v1528 = vpop.f32.mrb[0].mxu0
        %v1529 = vadd.f32 %v1193, %v1528
        %v1530 = vpop.f32.mrb[0].mxu0
        %v1531 = vadd.f32 %v1197, %v1530
        %1532 = vdwg.mxu0
        %1533 = vmatprep.subr.mxu0 %v1107
        %1534 = vmatpush1.msra.mxu0 %v1106
        %1535 = vmatprep.subr.mxu0 %v1123
        %1536 = vmatpush1.msra.mxu0 %v1122
        %1537 = vmatprep.subr.mxu0 %v1139
        %1538 = vmatpush1.msra.mxu0 %v1138
        %1539 = vmatprep.subr.mxu0 %v1155
        %1540 = vmatpush1.msra.mxu0 %v1154
        %1541 = vmatprep.subr.mxu0 0.0
        %1542 = vmatpush1.msra.mxu0 0.0
        %1543 = vmatprep.subr.mxu0 0.0
        %1544 = vmatpush1.msra.mxu0 0.0
        %1545 = vmatprep.subr.mxu0 0.0
        %1546 = vmatpush1.msra.mxu0 0.0
        %1547 = vmatprep.subr.mxu0 0.0
        %1548 = vmatpush1.msra.mxu0 0.0
        %1549 = vmatprep.subr.mxu0 0.0
        %1550 = vmatpush1.msra.mxu0 0.0
        %1551 = vmatprep.subr.mxu0 0.0
        %1552 = vmatpush1.msra.mxu0 0.0
        %1553 = vmatprep.subr.mxu0 0.0
        %1554 = vmatpush1.msra.mxu0 0.0
        %1555 = vmatprep.subr.mxu0 0.0
        %1556 = vmatpush1.msra.mxu0 0.0
        %1557 = vmatprep.subr.mxu0 0.0
        %1558 = vmatpush1.msra.mxu0 0.0
        %1559 = vmatprep.subr.mxu0 0.0
        %1560 = vmatpush1.msra.mxu0 0.0
        %1561 = vmatprep.subr.mxu0 0.0
        %1562 = vmatpush1.msra.mxu0 0.0
        %1563 = vmatprep.subr.mxu0 0.0
        %1564 = vmatpush1.msra.mxu0 0.0
        %1565 = vmatprep.subr.mxu0 0.0
        %1566 = vmatpush1.msra.mxu0 0.0
        %1567 = vmatprep.subr.mxu0 0.0
        %1568 = vmatpush1.msra.mxu0 0.0
        %1569 = vmatprep.subr.mxu0 0.0
        %1570 = vmatpush1.msra.mxu0 0.0
        %1571 = vmatprep.subr.mxu0 0.0
        %1572 = vmatpush1.msra.mxu0 0.0
        %1573 = vmatprep.subr.mxu0 0.0
        %1574 = vmatpush1.msra.mxu0 0.0
        %1575 = vmatprep.subr.mxu0 0.0
        %1576 = vmatpush1.msra.mxu0 0.0
        %1577 = vmatprep.subr.mxu0 0.0
        %1578 = vmatpush1.msra.mxu0 0.0
        %1579 = vmatprep.subr.mxu0 0.0
        %1580 = vmatpush1.msra.mxu0 0.0
        %1581 = vmatprep.subr.mxu0 0.0
        %1582 = vmatpush1.msra.mxu0 0.0
        %1583 = vmatprep.subr.mxu0 0.0
        %1584 = vmatpush1.msra.mxu0 0.0
        %1585 = vmatprep.subr.mxu0 0.0
        %1586 = vmatpush1.msra.mxu0 0.0
        %1587 = vmatprep.subr.mxu0 0.0
        %1588 = vmatpush1.msra.mxu0 0.0
        %1589 = vmatprep.subr.mxu0 0.0
        %1590 = vmatpush1.msra.mxu0 0.0
        %1591 = vmatprep.subr.mxu0 0.0
        %1592 = vmatpush1.msra.mxu0 0.0
        %1593 = vmatprep.subr.mxu0 0.0
        %1594 = vmatpush1.msra.mxu0 0.0
        %1595 = vmatprep.subr.mxu0 0.0
        %1596 = vmatpush1.msra.mxu0 0.0
        %1597 = vmatprep.mubr.f32.mxu0 0.0
        %1598 = vmatmul.mubr.f32.gmra.mrb[0].mxu0 %v1247
        %v1599 = vpop.f32.mrb[0].mxu0
        %v1600 = vadd.f32 %v1201, %v1599
        %v1601 = vpop.f32.mrb[0].mxu0
        %v1602 = vadd.f32 %v1205, %v1601
        %1603 = vdwg.mxu0
        %1604 = vmatprep.subr.mxu0 %v1109
        %1605 = vmatpush1.msra.mxu0 %v1108
        %1606 = vmatprep.subr.mxu0 %v1125
        %1607 = vmatpush1.msra.mxu0 %v1124
        %1608 = vmatprep.subr.mxu0 %v1141
        %1609 = vmatpush1.msra.mxu0 %v1140
        %1610 = vmatprep.subr.mxu0 %v1157
        %1611 = vmatpush1.msra.mxu0 %v1156
        %1612 = vmatprep.subr.mxu0 0.0
        %1613 = vmatpush1.msra.mxu0 0.0
        %1614 = vmatprep.subr.mxu0 0.0
        %1615 = vmatpush1.msra.mxu0 0.0
        %1616 = vmatprep.subr.mxu0 0.0
        %1617 = vmatpush1.msra.mxu0 0.0
        %1618 = vmatprep.subr.mxu0 0.0
        %1619 = vmatpush1.msra.mxu0 0.0
        %1620 = vmatprep.subr.mxu0 0.0
        %1621 = vmatpush1.msra.mxu0 0.0
        %1622 = vmatprep.subr.mxu0 0.0
        %1623 = vmatpush1.msra.mxu0 0.0
        %1624 = vmatprep.subr.mxu0 0.0
        %1625 = vmatpush1.msra.mxu0 0.0
        %1626 = vmatprep.subr.mxu0 0.0
        %1627 = vmatpush1.msra.mxu0 0.0
        %1628 = vmatprep.subr.mxu0 0.0
        %1629 = vmatpush1.msra.mxu0 0.0
        %1630 = vmatprep.subr.mxu0 0.0
        %1631 = vmatpush1.msra.mxu0 0.0
        %1632 = vmatprep.subr.mxu0 0.0
        %1633 = vmatpush1.msra.mxu0 0.0
        %1634 = vmatprep.subr.mxu0 0.0
        %1635 = vmatpush1.msra.mxu0 0.0
        %1636 = vmatprep.subr.mxu0 0.0
        %1637 = vmatpush1.msra.mxu0 0.0
        %1638 = vmatprep.subr.mxu0 0.0
        %1639 = vmatpush1.msra.mxu0 0.0
        %1640 = vmatprep.subr.mxu0 0.0
        %1641 = vmatpush1.msra.mxu0 0.0
        %1642 = vmatprep.subr.mxu0 0.0
        %1643 = vmatpush1.msra.mxu0 0.0
        %1644 = vmatprep.subr.mxu0 0.0
        %1645 = vmatpush1.msra.mxu0 0.0
        %1646 = vmatprep.subr.mxu0 0.0
        %1647 = vmatpush1.msra.mxu0 0.0
        %1648 = vmatprep.subr.mxu0 0.0
        %1649 = vmatpush1.msra.mxu0 0.0
        %1650 = vmatprep.subr.mxu0 0.0
        %1651 = vmatpush1.msra.mxu0 0.0
        %1652 = vmatprep.subr.mxu0 0.0
        %1653 = vmatpush1.msra.mxu0 0.0
        %1654 = vmatprep.subr.mxu0 0.0
        %1655 = vmatpush1.msra.mxu0 0.0
        %1656 = vmatprep.subr.mxu0 0.0
        %1657 = vmatpush1.msra.mxu0 0.0
        %1658 = vmatprep.subr.mxu0 0.0
        %1659 = vmatpush1.msra.mxu0 0.0
        %1660 = vmatprep.subr.mxu0 0.0
        %1661 = vmatpush1.msra.mxu0 0.0
        %1662 = vmatprep.subr.mxu0 0.0
        %1663 = vmatpush1.msra.mxu0 0.0
        %1664 = vmatprep.subr.mxu0 0.0
        %1665 = vmatpush1.msra.mxu0 0.0
        %1666 = vmatprep.subr.mxu0 0.0
        %1667 = vmatpush1.msra.mxu0 0.0
        %1668 = vmatprep.mubr.f32.mxu0 0.0
        %1669 = vmatmul.mubr.f32.gmra.mrb[0].mxu0 %v1247
        %v1670 = vpop.f32.mrb[0].mxu0
        %v1671 = vadd.f32 %v1209, %v1670
        %v1672 = vpop.f32.mrb[0].mxu0
        %v1673 = vadd.f32 %v1213, %v1672
        %1674 = vdwg.mxu0
        %1675 = vmatprep.subr.mxu0 %v1111
        %1676 = vmatpush1.msra.mxu0 %v1110
        %1677 = vmatprep.subr.mxu0 %v1127
        %1678 = vmatpush1.msra.mxu0 %v1126
        %1679 = vmatprep.subr.mxu0 %v1143
        %1680 = vmatpush1.msra.mxu0 %v1142
        %1681 = vmatprep.subr.mxu0 %v1159
        %1682 = vmatpush1.msra.mxu0 %v1158
        %1683 = vmatprep.subr.mxu0 0.0
        %1684 = vmatpush1.msra.mxu0 0.0
        %1685 = vmatprep.subr.mxu0 0.0
        %1686 = vmatpush1.msra.mxu0 0.0
        %1687 = vmatprep.subr.mxu0 0.0
        %1688 = vmatpush1.msra.mxu0 0.0
        %1689 = vmatprep.subr.mxu0 0.0
        %1690 = vmatpush1.msra.mxu0 0.0
        %1691 = vmatprep.subr.mxu0 0.0
        %1692 = vmatpush1.msra.mxu0 0.0
        %1693 = vmatprep.subr.mxu0 0.0
        %1694 = vmatpush1.msra.mxu0 0.0
        %1695 = vmatprep.subr.mxu0 0.0
        %1696 = vmatpush1.msra.mxu0 0.0
        %1697 = vmatprep.subr.mxu0 0.0
        %1698 = vmatpush1.msra.mxu0 0.0
        %1699 = vmatprep.subr.mxu0 0.0
        %1700 = vmatpush1.msra.mxu0 0.0
        %1701 = vmatprep.subr.mxu0 0.0
        %1702 = vmatpush1.msra.mxu0 0.0
        %1703 = vmatprep.subr.mxu0 0.0
        %1704 = vmatpush1.msra.mxu0 0.0
        %1705 = vmatprep.subr.mxu0 0.0
        %1706 = vmatpush1.msra.mxu0 0.0
        %1707 = vmatprep.subr.mxu0 0.0
        %1708 = vmatpush1.msra.mxu0 0.0
        %1709 = vmatprep.subr.mxu0 0.0
        %1710 = vmatpush1.msra.mxu0 0.0
        %1711 = vmatprep.subr.mxu0 0.0
        %1712 = vmatpush1.msra.mxu0 0.0
        %1713 = vmatprep.subr.mxu0 0.0
        %1714 = vmatpush1.msra.mxu0 0.0
        %1715 = vmatprep.subr.mxu0 0.0
        %1716 = vmatpush1.msra.mxu0 0.0
        %1717 = vmatprep.subr.mxu0 0.0
        %1718 = vmatpush1.msra.mxu0 0.0
        %1719 = vmatprep.subr.mxu0 0.0
        %1720 = vmatpush1.msra.mxu0 0.0
        %1721 = vmatprep.subr.mxu0 0.0
        %1722 = vmatpush1.msra.mxu0 0.0
        %1723 = vmatprep.subr.mxu0 0.0
        %1724 = vmatpush1.msra.mxu0 0.0
        %1725 = vmatprep.subr.mxu0 0.0
        %1726 = vmatpush1.msra.mxu0 0.0
        %1727 = vmatprep.subr.mxu0 0.0
        %1728 = vmatpush1.msra.mxu0 0.0
        %1729 = vmatprep.subr.mxu0 0.0
        %1730 = vmatpush1.msra.mxu0 0.0
        %1731 = vmatprep.subr.mxu0 0.0
        %1732 = vmatpush1.msra.mxu0 0.0
        %1733 = vmatprep.subr.mxu0 0.0
        %1734 = vmatpush1.msra.mxu0 0.0
        %1735 = vmatprep.subr.mxu0 0.0
        %1736 = vmatpush1.msra.mxu0 0.0
        %1737 = vmatprep.subr.mxu0 0.0
        %1738 = vmatpush1.msra.mxu0 0.0
        %1739 = vmatprep.mubr.f32.mxu0 0.0
        %1740 = vmatmul.mubr.f32.gmra.mrb[0].mxu0 %v1247
        %v1741 = vpop.f32.mrb[0].mxu0
        %v1742 = vadd.f32 %v1217, %v1741
        %v1743 = vpop.f32.mrb[0].mxu0
        %v1744 = vadd.f32 %v1221, %v1743
        %1745 = vdwg.mxu0
        %1746 = vmatprep.subr.mxu0 %v1113
        %1747 = vmatpush1.msra.mxu0 %v1112
        %1748 = vmatprep.subr.mxu0 %v1129
        %1749 = vmatpush1.msra.mxu0 %v1128
        %1750 = vmatprep.subr.mxu0 %v1145
        %1751 = vmatpush1.msra.mxu0 %v1144
        %1752 = vmatprep.subr.mxu0 %v1161
        %1753 = vmatpush1.msra.mxu0 %v1160
        %1754 = vmatprep.subr.mxu0 0.0
        %1755 = vmatpush1.msra.mxu0 0.0
        %1756 = vmatprep.subr.mxu0 0.0
        %1757 = vmatpush1.msra.mxu0 0.0
        %1758 = vmatprep.subr.mxu0 0.0
        %1759 = vmatpush1.msra.mxu0 0.0
        %1760 = vmatprep.subr.mxu0 0.0
        %1761 = vmatpush1.msra.mxu0 0.0
        %1762 = vmatprep.subr.mxu0 0.0
        %1763 = vmatpush1.msra.mxu0 0.0
        %1764 = vmatprep.subr.mxu0 0.0
        %1765 = vmatpush1.msra.mxu0 0.0
        %1766 = vmatprep.subr.mxu0 0.0
        %1767 = vmatpush1.msra.mxu0 0.0
        %1768 = vmatprep.subr.mxu0 0.0
        %1769 = vmatpush1.msra.mxu0 0.0
        %1770 = vmatprep.subr.mxu0 0.0
        %1771 = vmatpush1.msra.mxu0 0.0
        %1772 = vmatprep.subr.mxu0 0.0
        %1773 = vmatpush1.msra.mxu0 0.0
        %1774 = vmatprep.subr.mxu0 0.0
        %1775 = vmatpush1.msra.mxu0 0.0
        %1776 = vmatprep.subr.mxu0 0.0
        %1777 = vmatpush1.msra.mxu0 0.0
        %1778 = vmatprep.subr.mxu0 0.0
        %1779 = vmatpush1.msra.mxu0 0.0
        %1780 = vmatprep.subr.mxu0 0.0
        %1781 = vmatpush1.msra.mxu0 0.0
        %1782 = vmatprep.subr.mxu0 0.0
        %1783 = vmatpush1.msra.mxu0 0.0
        %1784 = vmatprep.subr.mxu0 0.0
        %1785 = vmatpush1.msra.mxu0 0.0
        %1786 = vmatprep.subr.mxu0 0.0
        %1787 = vmatpush1.msra.mxu0 0.0
        %1788 = vmatprep.subr.mxu0 0.0
        %1789 = vmatpush1.msra.mxu0 0.0
        %1790 = vmatprep.subr.mxu0 0.0
        %1791 = vmatpush1.msra.mxu0 0.0
        %1792 = vmatprep.subr.mxu0 0.0
        %1793 = vmatpush1.msra.mxu0 0.0
        %1794 = vmatprep.subr.mxu0 0.0
        %1795 = vmatpush1.msra.mxu0 0.0
        %1796 = vmatprep.subr.mxu0 0.0
        %1797 = vmatpush1.msra.mxu0 0.0
        %1798 = vmatprep.subr.mxu0 0.0
        %1799 = vmatpush1.msra.mxu0 0.0
        %1800 = vmatprep.subr.mxu0 0.0
        %1801 = vmatpush1.msra.mxu0 0.0
        %1802 = vmatprep.subr.mxu0 0.0
        %1803 = vmatpush1.msra.mxu0 0.0
        %1804 = vmatprep.subr.mxu0 0.0
        %1805 = vmatpush1.msra.mxu0 0.0
        %1806 = vmatprep.subr.mxu0 0.0
        %1807 = vmatpush1.msra.mxu0 0.0
        %1808 = vmatprep.subr.mxu0 0.0
        %1809 = vmatpush1.msra.mxu0 0.0
        %1810 = vmatprep.mubr.f32.mxu0 0.0
        %1811 = vmatmul.mubr.f32.gmra.mrb[0].mxu0 %v1247
        %v1812 = vpop.f32.mrb[0].mxu0
        %v1813 = vadd.f32 %v1225, %v1812
        %v1814 = vpop.f32.mrb[0].mxu0
        %v1815 = vadd.f32 %v1229, %v1814
        %1816 = vdwg.mxu0
        %v1817 = vmax.f32 %v1316, 0.0
        %v1818 = vmax.f32 %v1318, 0.0
        %v1819 = vmax.f32 %v1387, 0.0
        %v1820 = vmax.f32 %v1389, 0.0
        %v1821 = vmax.f32 %v1458, 0.0
        %v1822 = vmax.f32 %v1460, 0.0
        %v1823 = vmax.f32 %v1529, 0.0
        %v1824 = vmax.f32 %v1531, 0.0
        %v1825 = vmax.f32 %v1600, 0.0
        %v1826 = vmax.f32 %v1602, 0.0
        %v1827 = vmax.f32 %v1671, 0.0
        %v1828 = vmax.f32 %v1673, 0.0
        %v1829 = vmax.f32 %v1742, 0.0
        %v1830 = vmax.f32 %v1744, 0.0
        %v1831 = vmax.f32 %v1813, 0.0
        %v1832 = vmax.f32 %v1815, 0.0
        %v1833 = vld [vmem:[%s9] sm:$0xff]
        %v1834 = vld [vmem:[%s9 + $0x8] sm:$0xff]
        %v1835 = vld [vmem:[%s9 + $0x10] sm:$0xff]
        %v1836 = vld [vmem:[%s9 + $0x18] sm:$0xff]
        %v1837 = vld [vmem:[%s9 + $0x20] sm:$0xff]
        %v1838 = vld [vmem:[%s9 + $0x28] sm:$0xff]
        %v1839 = vld [vmem:[%s9 + $0x30] sm:$0xff]
        %v1840 = vld [vmem:[%s9 + $0x38] sm:$0xff]
        %v1841 = vld [vmem:[%s9 + $0x40] sm:$0xff]
        %v1842 = vld [vmem:[%s9 + $0x48] sm:$0xff]
        %v1843 = vld [vmem:[%s9 + $0x50] sm:$0xff]
        %v1844 = vld [vmem:[%s9 + $0x58] sm:$0xff]
        %v1845 = vld [vmem:[%s9 + $0x60] sm:$0xff]
        %v1846 = vld [vmem:[%s9 + $0x68] sm:$0xff]
        %v1847 = vld [vmem:[%s9 + $0x70] sm:$0xff]
        %v1848 = vld [vmem:[%s9 + $0x78] sm:$0xff]
        %v1849 = vld [vmem:[%s9 + $0x80] sm:$0xff]
        %v1850 = vld [vmem:[%s9 + $0x88] sm:$0xff]
        %v1851 = vld [vmem:[%s9 + $0x90] sm:$0xff]
        %v1852 = vld [vmem:[%s9 + $0x98] sm:$0xff]
        %v1853 = vld [vmem:[%s9 + $0xa0] sm:$0xff]
        %v1854 = vld [vmem:[%s9 + $0xa8] sm:$0xff]
        %v1855 = vld [vmem:[%s9 + $0xb0] sm:$0xff]
        %v1856 = vld [vmem:[%s9 + $0xb8] sm:$0xff]
        %v1857 = vld [vmem:[%s9 + $0xc0] sm:$0xff]
        %v1858 = vld [vmem:[%s9 + $0xc8] sm:$0xff]
        %v1859 = vld [vmem:[%s9 + $0xd0] sm:$0xff]
        %v1860 = vld [vmem:[%s9 + $0xd8] sm:$0xff]
        %v1861 = vld [vmem:[%s9 + $0xe0] sm:$0xff]
        %v1862 = vld [vmem:[%s9 + $0xe8] sm:$0xff]
        %v1863 = vld [vmem:[%s9 + $0xf0] sm:$0xff]
        %v1864 = vld [vmem:[%s9 + $0xf8] sm:$0xff]
        %v1865 = vld [vmem:[%s9 + $0x100] sm:$0xff]
        %v1866 = vld [vmem:[%s9 + $0x108] sm:$0xff]
        %v1867 = vld [vmem:[%s9 + $0x110] sm:$0xff]
        %v1868 = vld [vmem:[%s9 + $0x118] sm:$0xff]
        %v1869 = vld [vmem:[%s9 + $0x120] sm:$0xff]
        %v1870 = vld [vmem:[%s9 + $0x128] sm:$0xff]
        %v1871 = vld [vmem:[%s9 + $0x130] sm:$0xff]
        %v1872 = vld [vmem:[%s9 + $0x138] sm:$0xff]
        %v1873 = vld [vmem:[%s9 + $0x140] sm:$0xff]
        %v1874 = vld [vmem:[%s9 + $0x148] sm:$0xff]
        %v1875 = vld [vmem:[%s9 + $0x150] sm:$0xff]
        %v1876 = vld [vmem:[%s9 + $0x158] sm:$0xff]
        %v1877 = vld [vmem:[%s9 + $0x160] sm:$0xff]
        %v1878 = vld [vmem:[%s9 + $0x168] sm:$0xff]
        %v1879 = vld [vmem:[%s9 + $0x170] sm:$0xff]
        %v1880 = vld [vmem:[%s9 + $0x178] sm:$0xff]
        %v1881 = vld [vmem:[%s9 + $0x180] sm:$0xff]
        %v1882 = vld [vmem:[%s9 + $0x188] sm:$0xff]
        %v1883 = vld [vmem:[%s9 + $0x190] sm:$0xff]
        %v1884 = vld [vmem:[%s9 + $0x198] sm:$0xff]
        %v1885 = vld [vmem:[%s9 + $0x1a0] sm:$0xff]
        %v1886 = vld [vmem:[%s9 + $0x1a8] sm:$0xff]
        %v1887 = vld [vmem:[%s9 + $0x1b0] sm:$0xff]
        %v1888 = vld [vmem:[%s9 + $0x1b8] sm:$0xff]
        %v1889 = vld [vmem:[%s9 + $0x1c0] sm:$0xff]
        %v1890 = vld [vmem:[%s9 + $0x1c8] sm:$0xff]
        %v1891 = vld [vmem:[%s9 + $0x1d0] sm:$0xff]
        %v1892 = vld [vmem:[%s9 + $0x1d8] sm:$0xff]
        %v1893 = vld [vmem:[%s9 + $0x1e0] sm:$0xff]
        %v1894 = vld [vmem:[%s9 + $0x1e8] sm:$0xff]
        %v1895 = vld [vmem:[%s9 + $0x1f0] sm:$0xff]
        %v1896 = vld [vmem:[%s9 + $0x1f8] sm:$0xff]
        %v1897 = vld [vmem:[%s9 + $0x200] sm:$0xff]
        %v1898 = vld [vmem:[%s9 + $0x208] sm:$0xff]
        %v1899 = vld [vmem:[%s9 + $0x210] sm:$0xff]
        %v1900 = vld [vmem:[%s9 + $0x218] sm:$0xff]
        %v1901 = vld [vmem:[%s9 + $0x220] sm:$0xff]
        %v1902 = vld [vmem:[%s9 + $0x228] sm:$0xff]
        %v1903 = vld [vmem:[%s9 + $0x230] sm:$0xff]
        %v1904 = vld [vmem:[%s9 + $0x238] sm:$0xff]
        %v1905 = vld [vmem:[%s9 + $0x240] sm:$0xff]
        %v1906 = vld [vmem:[%s9 + $0x248] sm:$0xff]
        %v1907 = vld [vmem:[%s9 + $0x250] sm:$0xff]
        %v1908 = vld [vmem:[%s9 + $0x258] sm:$0xff]
        %v1909 = vld [vmem:[%s9 + $0x260] sm:$0xff]
        %v1910 = vld [vmem:[%s9 + $0x268] sm:$0xff]
        %v1911 = vld [vmem:[%s9 + $0x270] sm:$0xff]
        %v1912 = vld [vmem:[%s9 + $0x278] sm:$0xff]
        %v1913 = vld [vmem:[%s9 + $0x280] sm:$0xff]
        %v1914 = vld [vmem:[%s9 + $0x288] sm:$0xff]
        %v1915 = vld [vmem:[%s9 + $0x290] sm:$0xff]
        %v1916 = vld [vmem:[%s9 + $0x298] sm:$0xff]
        %v1917 = vld [vmem:[%s9 + $0x2a0] sm:$0xff]
        %v1918 = vld [vmem:[%s9 + $0x2a8] sm:$0xff]
        %v1919 = vld [vmem:[%s9 + $0x2b0] sm:$0xff]
        %v1920 = vld [vmem:[%s9 + $0x2b8] sm:$0xff]
        %v1921 = vld [vmem:[%s9 + $0x2c0] sm:$0xff]
        %v1922 = vld [vmem:[%s9 + $0x2c8] sm:$0xff]
        %v1923 = vld [vmem:[%s9 + $0x2d0] sm:$0xff]
        %v1924 = vld [vmem:[%s9 + $0x2d8] sm:$0xff]
        %v1925 = vld [vmem:[%s9 + $0x2e0] sm:$0xff]
        %v1926 = vld [vmem:[%s9 + $0x2e8] sm:$0xff]
        %v1927 = vld [vmem:[%s9 + $0x2f0] sm:$0xff]
        %v1928 = vld [vmem:[%s9 + $0x2f8] sm:$0xff]
        %v1929 = vld [vmem:[%s9 + $0x300] sm:$0xff]
        %v1930 = vld [vmem:[%s9 + $0x308] sm:$0xff]
        %v1931 = vld [vmem:[%s9 + $0x310] sm:$0xff]
        %v1932 = vld [vmem:[%s9 + $0x318] sm:$0xff]
        %v1933 = vld [vmem:[%s9 + $0x320] sm:$0xff]
        %v1934 = vld [vmem:[%s9 + $0x328] sm:$0xff]
        %v1935 = vld [vmem:[%s9 + $0x330] sm:$0xff]
        %v1936 = vld [vmem:[%s9 + $0x338] sm:$0xff]
        %v1937 = vld [vmem:[%s9 + $0x340] sm:$0xff]
        %v1938 = vld [vmem:[%s9 + $0x348] sm:$0xff]
        %v1939 = vld [vmem:[%s9 + $0x350] sm:$0xff]
        %v1940 = vld [vmem:[%s9 + $0x358] sm:$0xff]
        %v1941 = vld [vmem:[%s9 + $0x360] sm:$0xff]
        %v1942 = vld [vmem:[%s9 + $0x368] sm:$0xff]
        %v1943 = vld [vmem:[%s9 + $0x370] sm:$0xff]
        %v1944 = vld [vmem:[%s9 + $0x378] sm:$0xff]
        %v1945 = vld [vmem:[%s9 + $0x380] sm:$0xff]
        %v1946 = vld [vmem:[%s9 + $0x388] sm:$0xff]
        %v1947 = vld [vmem:[%s9 + $0x390] sm:$0xff]
        %v1948 = vld [vmem:[%s9 + $0x398] sm:$0xff]
        %v1949 = vld [vmem:[%s9 + $0x3a0] sm:$0xff]
        %v1950 = vld [vmem:[%s9 + $0x3a8] sm:$0xff]
        %v1951 = vld [vmem:[%s9 + $0x3b0] sm:$0xff]
        %v1952 = vld [vmem:[%s9 + $0x3b8] sm:$0xff]
        %v1953 = vld [vmem:[%s9 + $0x3c0] sm:$0xff]
        %v1954 = vld [vmem:[%s9 + $0x3c8] sm:$0xff]
        %v1955 = vld [vmem:[%s9 + $0x3d0] sm:$0xff]
        %v1956 = vld [vmem:[%s9 + $0x3d8] sm:$0xff]
        %v1957 = vld [vmem:[%s9 + $0x3e0] sm:$0xff]
        %v1958 = vld [vmem:[%s9 + $0x3e8] sm:$0xff]
        %v1959 = vld [vmem:[%s9 + $0x3f0] sm:$0xff]
        %v1960 = vld [vmem:[%s9 + $0x3f8] sm:$0xff]
        %v1961 = vld [vmem:[%s9 + $0x400] sm:$0xff]
        %v1962 = vld [vmem:[%s9 + $0x408] sm:$0xff]
        %v1963 = vld [vmem:[%s9 + $0x410] sm:$0xff]
        %v1964 = vld [vmem:[%s9 + $0x418] sm:$0xff]
        %v1965 = vld [vmem:[%s9 + $0x420] sm:$0xff]
        %v1966 = vld [vmem:[%s9 + $0x428] sm:$0xff]
        %v1967 = vld [vmem:[%s9 + $0x430] sm:$0xff]
        %v1968 = vld [vmem:[%s9 + $0x438] sm:$0xff]
        %v1969 = vld [vmem:[%s9 + $0x440] sm:$0xff]
        %v1970 = vld [vmem:[%s9 + $0x448] sm:$0xff]
        %v1971 = vld [vmem:[%s9 + $0x450] sm:$0xff]
        %v1972 = vld [vmem:[%s9 + $0x458] sm:$0xff]
        %v1973 = vld [vmem:[%s9 + $0x460] sm:$0xff]
        %v1974 = vld [vmem:[%s9 + $0x468] sm:$0xff]
        %v1975 = vld [vmem:[%s9 + $0x470] sm:$0xff]
        %v1976 = vld [vmem:[%s9 + $0x478] sm:$0xff]
        %v1977 = vld [vmem:[%s9 + $0x480] sm:$0xff]
        %v1978 = vld [vmem:[%s9 + $0x488] sm:$0xff]
        %v1979 = vld [vmem:[%s9 + $0x490] sm:$0xff]
        %v1980 = vld [vmem:[%s9 + $0x498] sm:$0xff]
        %v1981 = vld [vmem:[%s9 + $0x4a0] sm:$0xff]
        %v1982 = vld [vmem:[%s9 + $0x4a8] sm:$0xff]
        %v1983 = vld [vmem:[%s9 + $0x4b0] sm:$0xff]
        %v1984 = vld [vmem:[%s9 + $0x4b8] sm:$0xff]
        %v1985 = vld [vmem:[%s9 + $0x4c0] sm:$0xff]
        %v1986 = vld [vmem:[%s9 + $0x4c8] sm:$0xff]
        %v1987 = vld [vmem:[%s9 + $0x4d0] sm:$0xff]
        %v1988 = vld [vmem:[%s9 + $0x4d8] sm:$0xff]
        %v1989 = vld [vmem:[%s9 + $0x4e0] sm:$0xff]
        %v1990 = vld [vmem:[%s9 + $0x4e8] sm:$0xff]
        %v1991 = vld [vmem:[%s9 + $0x4f0] sm:$0xff]
        %v1992 = vld [vmem:[%s9 + $0x4f8] sm:$0xff]
        %v1993 = vld [vmem:[%s9 + $0x500] sm:$0xff]
        %v1994 = vld [vmem:[%s9 + $0x508] sm:$0xff]
        %v1995 = vld [vmem:[%s9 + $0x510] sm:$0xff]
        %v1996 = vld [vmem:[%s9 + $0x518] sm:$0xff]
        %v1997 = vld [vmem:[%s9 + $0x520] sm:$0xff]
        %v1998 = vld [vmem:[%s9 + $0x528] sm:$0xff]
        %v1999 = vld [vmem:[%s9 + $0x530] sm:$0xff]
        %v2000 = vld [vmem:[%s9 + $0x538] sm:$0xff]
        %v2001 = vld [vmem:[%s9 + $0x540] sm:$0xff]
        %v2002 = vld [vmem:[%s9 + $0x548] sm:$0xff]
        %v2003 = vld [vmem:[%s9 + $0x550] sm:$0xff]
        %v2004 = vld [vmem:[%s9 + $0x558] sm:$0xff]
        %v2005 = vld [vmem:[%s9 + $0x560] sm:$0xff]
        %v2006 = vld [vmem:[%s9 + $0x568] sm:$0xff]
        %v2007 = vld [vmem:[%s9 + $0x570] sm:$0xff]
        %v2008 = vld [vmem:[%s9 + $0x578] sm:$0xff]
        %v2009 = vld [vmem:[%s9 + $0x580] sm:$0xff]
        %v2010 = vld [vmem:[%s9 + $0x588] sm:$0xff]
        %v2011 = vld [vmem:[%s9 + $0x590] sm:$0xff]
        %v2012 = vld [vmem:[%s9 + $0x598] sm:$0xff]
        %v2013 = vld [vmem:[%s9 + $0x5a0] sm:$0xff]
        %v2014 = vld [vmem:[%s9 + $0x5a8] sm:$0xff]
        %v2015 = vld [vmem:[%s9 + $0x5b0] sm:$0xff]
        %v2016 = vld [vmem:[%s9 + $0x5b8] sm:$0xff]
        %v2017 = vld [vmem:[%s9 + $0x5c0] sm:$0xff]
        %v2018 = vld [vmem:[%s9 + $0x5c8] sm:$0xff]
        %v2019 = vld [vmem:[%s9 + $0x5d0] sm:$0xff]
        %v2020 = vld [vmem:[%s9 + $0x5d8] sm:$0xff]
        %v2021 = vld [vmem:[%s9 + $0x5e0] sm:$0xff]
        %v2022 = vld [vmem:[%s9 + $0x5e8] sm:$0xff]
        %v2023 = vld [vmem:[%s9 + $0x5f0] sm:$0xff]
        %v2024 = vld [vmem:[%s9 + $0x5f8] sm:$0xff]
        %v2025 = vld [vmem:[%s9 + $0x600] sm:$0xff]
        %v2026 = vld [vmem:[%s9 + $0x608] sm:$0xff]
        %v2027 = vld [vmem:[%s9 + $0x610] sm:$0xff]
        %v2028 = vld [vmem:[%s9 + $0x618] sm:$0xff]
        %v2029 = vld [vmem:[%s9 + $0x620] sm:$0xff]
        %v2030 = vld [vmem:[%s9 + $0x628] sm:$0xff]
        %v2031 = vld [vmem:[%s9 + $0x630] sm:$0xff]
        %v2032 = vld [vmem:[%s9 + $0x638] sm:$0xff]
        %v2033 = vld [vmem:[%s9 + $0x640] sm:$0xff]
        %v2034 = vld [vmem:[%s9 + $0x648] sm:$0xff]
        %v2035 = vld [vmem:[%s9 + $0x650] sm:$0xff]
        %v2036 = vld [vmem:[%s9 + $0x658] sm:$0xff]
        %v2037 = vld [vmem:[%s9 + $0x660] sm:$0xff]
        %v2038 = vld [vmem:[%s9 + $0x668] sm:$0xff]
        %v2039 = vld [vmem:[%s9 + $0x670] sm:$0xff]
        %v2040 = vld [vmem:[%s9 + $0x678] sm:$0xff]
        %v2041 = vld [vmem:[%s9 + $0x680] sm:$0xff]
        %v2042 = vld [vmem:[%s9 + $0x688] sm:$0xff]
        %v2043 = vld [vmem:[%s9 + $0x690] sm:$0xff]
        %v2044 = vld [vmem:[%s9 + $0x698] sm:$0xff]
        %v2045 = vld [vmem:[%s9 + $0x6a0] sm:$0xff]
        %v2046 = vld [vmem:[%s9 + $0x6a8] sm:$0xff]
        %v2047 = vld [vmem:[%s9 + $0x6b0] sm:$0xff]
        %v2048 = vld [vmem:[%s9 + $0x6b8] sm:$0xff]
        %v2049 = vld [vmem:[%s9 + $0x6c0] sm:$0xff]
        %v2050 = vld [vmem:[%s9 + $0x6c8] sm:$0xff]
        %v2051 = vld [vmem:[%s9 + $0x6d0] sm:$0xff]
        %v2052 = vld [vmem:[%s9 + $0x6d8] sm:$0xff]
        %v2053 = vld [vmem:[%s9 + $0x6e0] sm:$0xff]
        %v2054 = vld [vmem:[%s9 + $0x6e8] sm:$0xff]
        %v2055 = vld [vmem:[%s9 + $0x6f0] sm:$0xff]
        %v2056 = vld [vmem:[%s9 + $0x6f8] sm:$0xff]
        %v2057 = vld [vmem:[%s9 + $0x700] sm:$0xff]
        %v2058 = vld [vmem:[%s9 + $0x708] sm:$0xff]
        %v2059 = vld [vmem:[%s9 + $0x710] sm:$0xff]
        %v2060 = vld [vmem:[%s9 + $0x718] sm:$0xff]
        %v2061 = vld [vmem:[%s9 + $0x720] sm:$0xff]
        %v2062 = vld [vmem:[%s9 + $0x728] sm:$0xff]
        %v2063 = vld [vmem:[%s9 + $0x730] sm:$0xff]
        %v2064 = vld [vmem:[%s9 + $0x738] sm:$0xff]
        %v2065 = vld [vmem:[%s9 + $0x740] sm:$0xff]
        %v2066 = vld [vmem:[%s9 + $0x748] sm:$0xff]
        %v2067 = vld [vmem:[%s9 + $0x750] sm:$0xff]
        %v2068 = vld [vmem:[%s9 + $0x758] sm:$0xff]
        %v2069 = vld [vmem:[%s9 + $0x760] sm:$0xff]
        %v2070 = vld [vmem:[%s9 + $0x768] sm:$0xff]
        %v2071 = vld [vmem:[%s9 + $0x770] sm:$0xff]
        %v2072 = vld [vmem:[%s9 + $0x778] sm:$0xff]
        %v2073 = vld [vmem:[%s9 + $0x780] sm:$0xff]
        %v2074 = vld [vmem:[%s9 + $0x788] sm:$0xff]
        %v2075 = vld [vmem:[%s9 + $0x790] sm:$0xff]
        %v2076 = vld [vmem:[%s9 + $0x798] sm:$0xff]
        %v2077 = vld [vmem:[%s9 + $0x7a0] sm:$0xff]
        %v2078 = vld [vmem:[%s9 + $0x7a8] sm:$0xff]
        %v2079 = vld [vmem:[%s9 + $0x7b0] sm:$0xff]
        %v2080 = vld [vmem:[%s9 + $0x7b8] sm:$0xff]
        %v2081 = vld [vmem:[%s9 + $0x7c0] sm:$0xff]
        %v2082 = vld [vmem:[%s9 + $0x7c8] sm:$0xff]
        %v2083 = vld [vmem:[%s9 + $0x7d0] sm:$0xff]
        %v2084 = vld [vmem:[%s9 + $0x7d8] sm:$0xff]
        %v2085 = vld [vmem:[%s9 + $0x7e0] sm:$0xff]
        %v2086 = vld [vmem:[%s9 + $0x7e8] sm:$0xff]
        %v2087 = vld [vmem:[%s9 + $0x7f0] sm:$0xff]
        %v2088 = vld [vmem:[%s9 + $0x7f8] sm:$0xff]
        %v2089 = vld [vmem:[%s10] sm:$0x1]
        %v2091 = vlaneseq
        %v2092 = vshrl.u32 %v2091, 7
        %v2093 = vsub.s32 0, %v2092
        %v2094 = vrot.slane %v2089, %v2093
        %2096 = vmatprep.subr.mxu0 0.0
        %2097 = vmatpush1.msra.mxu0 %v1833
        %2098 = vmatprep.subr.mxu0 0.0
        %2099 = vmatpush1.msra.mxu0 %v1834
        %2100 = vmatprep.subr.mxu0 0.0
        %2101 = vmatpush1.msra.mxu0 %v1835
        %2102 = vmatprep.subr.mxu0 0.0
        %2103 = vmatpush1.msra.mxu0 %v1836
        %2104 = vmatprep.subr.mxu0 0.0
        %2105 = vmatpush1.msra.mxu0 %v1837
        %2106 = vmatprep.subr.mxu0 0.0
        %2107 = vmatpush1.msra.mxu0 %v1838
        %2108 = vmatprep.subr.mxu0 0.0
        %2109 = vmatpush1.msra.mxu0 %v1839
        %2110 = vmatprep.subr.mxu0 0.0
        %2111 = vmatpush1.msra.mxu0 %v1840
        %2112 = vmatprep.subr.mxu0 0.0
        %2113 = vmatpush1.msra.mxu0 %v1841
        %2114 = vmatprep.subr.mxu0 0.0
        %2115 = vmatpush1.msra.mxu0 %v1842
        %2116 = vmatprep.subr.mxu0 0.0
        %2117 = vmatpush1.msra.mxu0 %v1843
        %2118 = vmatprep.subr.mxu0 0.0
        %2119 = vmatpush1.msra.mxu0 %v1844
        %2120 = vmatprep.subr.mxu0 0.0
        %2121 = vmatpush1.msra.mxu0 %v1845
        %2122 = vmatprep.subr.mxu0 0.0
        %2123 = vmatpush1.msra.mxu0 %v1846
        %2124 = vmatprep.subr.mxu0 0.0
        %2125 = vmatpush1.msra.mxu0 %v1847
        %2126 = vmatprep.subr.mxu0 0.0
        %2127 = vmatpush1.msra.mxu0 %v1848
        %2128 = vmatprep.subr.mxu0 0.0
        %2129 = vmatpush1.msra.mxu0 %v1849
        %2130 = vmatprep.subr.mxu0 0.0
        %2131 = vmatpush1.msra.mxu0 %v1850
        %2132 = vmatprep.subr.mxu0 0.0
        %2133 = vmatpush1.msra.mxu0 %v1851
        %2134 = vmatprep.subr.mxu0 0.0
        %2135 = vmatpush1.msra.mxu0 %v1852
        %2136 = vmatprep.subr.mxu0 0.0
        %2137 = vmatpush1.msra.mxu0 %v1853
        %2138 = vmatprep.subr.mxu0 0.0
        %2139 = vmatpush1.msra.mxu0 %v1854
        %2140 = vmatprep.subr.mxu0 0.0
        %2141 = vmatpush1.msra.mxu0 %v1855
        %2142 = vmatprep.subr.mxu0 0.0
        %2143 = vmatpush1.msra.mxu0 %v1856
        %2144 = vmatprep.subr.mxu0 0.0
        %2145 = vmatpush1.msra.mxu0 %v1857
        %2146 = vmatprep.subr.mxu0 0.0
        %2147 = vmatpush1.msra.mxu0 %v1858
        %2148 = vmatprep.subr.mxu0 0.0
        %2149 = vmatpush1.msra.mxu0 %v1859
        %2150 = vmatprep.subr.mxu0 0.0
        %2151 = vmatpush1.msra.mxu0 %v1860
        %2152 = vmatprep.subr.mxu0 0.0
        %2153 = vmatpush1.msra.mxu0 %v1861
        %2154 = vmatprep.subr.mxu0 0.0
        %2155 = vmatpush1.msra.mxu0 %v1862
        %2156 = vmatprep.subr.mxu0 0.0
        %2157 = vmatpush1.msra.mxu0 %v1863
        %2158 = vmatprep.subr.mxu0 0.0
        %2159 = vmatpush1.msra.mxu0 %v1864
        %2160 = vmatprep.mubr.f32.mxu0 %v1818
        %2161 = vmatmul.mubr.f32.gmra.mrb[0].mxu0 %v1817
        %v2162 = vpop.f32.mrb[0].mxu0
        %v2163 = vadd.f32 %v2094, %v2162
        %v2164 = vpop.f32.mrb[0].mxu0
        %2165 = vdwg.mxu0
        %2166 = vmatprep.subr.mxu0 0.0
        %2167 = vmatpush1.msra.mxu0 %v1865
        %2168 = vmatprep.subr.mxu0 0.0
        %2169 = vmatpush1.msra.mxu0 %v1866
        %2170 = vmatprep.subr.mxu0 0.0
        %2171 = vmatpush1.msra.mxu0 %v1867
        %2172 = vmatprep.subr.mxu0 0.0
        %2173 = vmatpush1.msra.mxu0 %v1868
        %2174 = vmatprep.subr.mxu0 0.0
        %2175 = vmatpush1.msra.mxu0 %v1869
        %2176 = vmatprep.subr.mxu0 0.0
        %2177 = vmatpush1.msra.mxu0 %v1870
        %2178 = vmatprep.subr.mxu0 0.0
        %2179 = vmatpush1.msra.mxu0 %v1871
        %2180 = vmatprep.subr.mxu0 0.0
        %2181 = vmatpush1.msra.mxu0 %v1872
        %2182 = vmatprep.subr.mxu0 0.0
        %2183 = vmatpush1.msra.mxu0 %v1873
        %2184 = vmatprep.subr.mxu0 0.0
        %2185 = vmatpush1.msra.mxu0 %v1874
        %2186 = vmatprep.subr.mxu0 0.0
        %2187 = vmatpush1.msra.mxu0 %v1875
        %2188 = vmatprep.subr.mxu0 0.0
        %2189 = vmatpush1.msra.mxu0 %v1876
        %2190 = vmatprep.subr.mxu0 0.0
        %2191 = vmatpush1.msra.mxu0 %v1877
        %2192 = vmatprep.subr.mxu0 0.0
        %2193 = vmatpush1.msra.mxu0 %v1878
        %2194 = vmatprep.subr.mxu0 0.0
        %2195 = vmatpush1.msra.mxu0 %v1879
        %2196 = vmatprep.subr.mxu0 0.0
        %2197 = vmatpush1.msra.mxu0 %v1880
        %2198 = vmatprep.subr.mxu0 0.0
        %2199 = vmatpush1.msra.mxu0 %v1881
        %2200 = vmatprep.subr.mxu0 0.0
        %2201 = vmatpush1.msra.mxu0 %v1882
        %2202 = vmatprep.subr.mxu0 0.0
        %2203 = vmatpush1.msra.mxu0 %v1883
        %2204 = vmatprep.subr.mxu0 0.0
        %2205 = vmatpush1.msra.mxu0 %v1884
        %2206 = vmatprep.subr.mxu0 0.0
        %2207 = vmatpush1.msra.mxu0 %v1885
        %2208 = vmatprep.subr.mxu0 0.0
        %2209 = vmatpush1.msra.mxu0 %v1886
        %2210 = vmatprep.subr.mxu0 0.0
        %2211 = vmatpush1.msra.mxu0 %v1887
        %2212 = vmatprep.subr.mxu0 0.0
        %2213 = vmatpush1.msra.mxu0 %v1888
        %2214 = vmatprep.subr.mxu0 0.0
        %2215 = vmatpush1.msra.mxu0 %v1889
        %2216 = vmatprep.subr.mxu0 0.0
        %2217 = vmatpush1.msra.mxu0 %v1890
        %2218 = vmatprep.subr.mxu0 0.0
        %2219 = vmatpush1.msra.mxu0 %v1891
        %2220 = vmatprep.subr.mxu0 0.0
        %2221 = vmatpush1.msra.mxu0 %v1892
        %2222 = vmatprep.subr.mxu0 0.0
        %2223 = vmatpush1.msra.mxu0 %v1893
        %2224 = vmatprep.subr.mxu0 0.0
        %2225 = vmatpush1.msra.mxu0 %v1894
        %2226 = vmatprep.subr.mxu0 0.0
        %2227 = vmatpush1.msra.mxu0 %v1895
        %2228 = vmatprep.subr.mxu0 0.0
        %2229 = vmatpush1.msra.mxu0 %v1896
        %2230 = vmatprep.mubr.f32.mxu0 %v1820
        %2231 = vmatmul.mubr.f32.gmra.mrb[0].mxu0 %v1819
        %v2232 = vpop.f32.mrb[0].mxu0
        %v2233 = vadd.f32 %v2163, %v2232
        %v2234 = vpop.f32.mrb[0].mxu0
        %2235 = vdwg.mxu0
        %2236 = vmatprep.subr.mxu0 0.0
        %2237 = vmatpush1.msra.mxu0 %v1897
        %2238 = vmatprep.subr.mxu0 0.0
        %2239 = vmatpush1.msra.mxu0 %v1898
        %2240 = vmatprep.subr.mxu0 0.0
        %2241 = vmatpush1.msra.mxu0 %v1899
        %2242 = vmatprep.subr.mxu0 0.0
        %2243 = vmatpush1.msra.mxu0 %v1900
        %2244 = vmatprep.subr.mxu0 0.0
        %2245 = vmatpush1.msra.mxu0 %v1901
        %2246 = vmatprep.subr.mxu0 0.0
        %2247 = vmatpush1.msra.mxu0 %v1902
        %2248 = vmatprep.subr.mxu0 0.0
        %2249 = vmatpush1.msra.mxu0 %v1903
        %2250 = vmatprep.subr.mxu0 0.0
        %2251 = vmatpush1.msra.mxu0 %v1904
        %2252 = vmatprep.subr.mxu0 0.0
        %2253 = vmatpush1.msra.mxu0 %v1905
        %2254 = vmatprep.subr.mxu0 0.0
        %2255 = vmatpush1.msra.mxu0 %v1906
        %2256 = vmatprep.subr.mxu0 0.0
        %2257 = vmatpush1.msra.mxu0 %v1907
        %2258 = vmatprep.subr.mxu0 0.0
        %2259 = vmatpush1.msra.mxu0 %v1908
        %2260 = vmatprep.subr.mxu0 0.0
        %2261 = vmatpush1.msra.mxu0 %v1909
        %2262 = vmatprep.subr.mxu0 0.0
        %2263 = vmatpush1.msra.mxu0 %v1910
        %2264 = vmatprep.subr.mxu0 0.0
        %2265 = vmatpush1.msra.mxu0 %v1911
        %2266 = vmatprep.subr.mxu0 0.0
        %2267 = vmatpush1.msra.mxu0 %v1912
        %2268 = vmatprep.subr.mxu0 0.0
        %2269 = vmatpush1.msra.mxu0 %v1913
        %2270 = vmatprep.subr.mxu0 0.0
        %2271 = vmatpush1.msra.mxu0 %v1914
        %2272 = vmatprep.subr.mxu0 0.0
        %2273 = vmatpush1.msra.mxu0 %v1915
        %2274 = vmatprep.subr.mxu0 0.0
        %2275 = vmatpush1.msra.mxu0 %v1916
        %2276 = vmatprep.subr.mxu0 0.0
        %2277 = vmatpush1.msra.mxu0 %v1917
        %2278 = vmatprep.subr.mxu0 0.0
        %2279 = vmatpush1.msra.mxu0 %v1918
        %2280 = vmatprep.subr.mxu0 0.0
        %2281 = vmatpush1.msra.mxu0 %v1919
        %2282 = vmatprep.subr.mxu0 0.0
        %2283 = vmatpush1.msra.mxu0 %v1920
        %2284 = vmatprep.subr.mxu0 0.0
        %2285 = vmatpush1.msra.mxu0 %v1921
        %2286 = vmatprep.subr.mxu0 0.0
        %2287 = vmatpush1.msra.mxu0 %v1922
        %2288 = vmatprep.subr.mxu0 0.0
        %2289 = vmatpush1.msra.mxu0 %v1923
        %2290 = vmatprep.subr.mxu0 0.0
        %2291 = vmatpush1.msra.mxu0 %v1924
        %2292 = vmatprep.subr.mxu0 0.0
        %2293 = vmatpush1.msra.mxu0 %v1925
        %2294 = vmatprep.subr.mxu0 0.0
        %2295 = vmatpush1.msra.mxu0 %v1926
        %2296 = vmatprep.subr.mxu0 0.0
        %2297 = vmatpush1.msra.mxu0 %v1927
        %2298 = vmatprep.subr.mxu0 0.0
        %2299 = vmatpush1.msra.mxu0 %v1928
        %2300 = vmatprep.mubr.f32.mxu0 %v1822
        %2301 = vmatmul.mubr.f32.gmra.mrb[0].mxu0 %v1821
        %v2302 = vpop.f32.mrb[0].mxu0
        %v2303 = vadd.f32 %v2233, %v2302
        %v2304 = vpop.f32.mrb[0].mxu0
        %2305 = vdwg.mxu0
        %2306 = vmatprep.subr.mxu0 0.0
        %2307 = vmatpush1.msra.mxu0 %v1929
        %2308 = vmatprep.subr.mxu0 0.0
        %2309 = vmatpush1.msra.mxu0 %v1930
        %2310 = vmatprep.subr.mxu0 0.0
        %2311 = vmatpush1.msra.mxu0 %v1931
        %2312 = vmatprep.subr.mxu0 0.0
        %2313 = vmatpush1.msra.mxu0 %v1932
        %2314 = vmatprep.subr.mxu0 0.0
        %2315 = vmatpush1.msra.mxu0 %v1933
        %2316 = vmatprep.subr.mxu0 0.0
        %2317 = vmatpush1.msra.mxu0 %v1934
        %2318 = vmatprep.subr.mxu0 0.0
        %2319 = vmatpush1.msra.mxu0 %v1935
        %2320 = vmatprep.subr.mxu0 0.0
        %2321 = vmatpush1.msra.mxu0 %v1936
        %2322 = vmatprep.subr.mxu0 0.0
        %2323 = vmatpush1.msra.mxu0 %v1937
        %2324 = vmatprep.subr.mxu0 0.0
        %2325 = vmatpush1.msra.mxu0 %v1938
        %2326 = vmatprep.subr.mxu0 0.0
        %2327 = vmatpush1.msra.mxu0 %v1939
        %2328 = vmatprep.subr.mxu0 0.0
        %2329 = vmatpush1.msra.mxu0 %v1940
        %2330 = vmatprep.subr.mxu0 0.0
        %2331 = vmatpush1.msra.mxu0 %v1941
        %2332 = vmatprep.subr.mxu0 0.0
        %2333 = vmatpush1.msra.mxu0 %v1942
        %2334 = vmatprep.subr.mxu0 0.0
        %2335 = vmatpush1.msra.mxu0 %v1943
        %2336 = vmatprep.subr.mxu0 0.0
        %2337 = vmatpush1.msra.mxu0 %v1944
        %2338 = vmatprep.subr.mxu0 0.0
        %2339 = vmatpush1.msra.mxu0 %v1945
        %2340 = vmatprep.subr.mxu0 0.0
        %2341 = vmatpush1.msra.mxu0 %v1946
        %2342 = vmatprep.subr.mxu0 0.0
        %2343 = vmatpush1.msra.mxu0 %v1947
        %2344 = vmatprep.subr.mxu0 0.0
        %2345 = vmatpush1.msra.mxu0 %v1948
        %2346 = vmatprep.subr.mxu0 0.0
        %2347 = vmatpush1.msra.mxu0 %v1949
        %2348 = vmatprep.subr.mxu0 0.0
        %2349 = vmatpush1.msra.mxu0 %v1950
        %2350 = vmatprep.subr.mxu0 0.0
        %2351 = vmatpush1.msra.mxu0 %v1951
        %2352 = vmatprep.subr.mxu0 0.0
        %2353 = vmatpush1.msra.mxu0 %v1952
        %2354 = vmatprep.subr.mxu0 0.0
        %2355 = vmatpush1.msra.mxu0 %v1953
        %2356 = vmatprep.subr.mxu0 0.0
        %2357 = vmatpush1.msra.mxu0 %v1954
        %2358 = vmatprep.subr.mxu0 0.0
        %2359 = vmatpush1.msra.mxu0 %v1955
        %2360 = vmatprep.subr.mxu0 0.0
        %2361 = vmatpush1.msra.mxu0 %v1956
        %2362 = vmatprep.subr.mxu0 0.0
        %2363 = vmatpush1.msra.mxu0 %v1957
        %2364 = vmatprep.subr.mxu0 0.0
        %2365 = vmatpush1.msra.mxu0 %v1958
        %2366 = vmatprep.subr.mxu0 0.0
        %2367 = vmatpush1.msra.mxu0 %v1959
        %2368 = vmatprep.subr.mxu0 0.0
        %2369 = vmatpush1.msra.mxu0 %v1960
        %2370 = vmatprep.mubr.f32.mxu0 %v1824
        %2371 = vmatmul.mubr.f32.gmra.mrb[0].mxu0 %v1823
        %v2372 = vpop.f32.mrb[0].mxu0
        %v2373 = vadd.f32 %v2303, %v2372
        %v2374 = vpop.f32.mrb[0].mxu0
        %2375 = vdwg.mxu0
        %2376 = vmatprep.subr.mxu0 0.0
        %2377 = vmatpush1.msra.mxu0 %v1961
        %2378 = vmatprep.subr.mxu0 0.0
        %2379 = vmatpush1.msra.mxu0 %v1962
        %2380 = vmatprep.subr.mxu0 0.0
        %2381 = vmatpush1.msra.mxu0 %v1963
        %2382 = vmatprep.subr.mxu0 0.0
        %2383 = vmatpush1.msra.mxu0 %v1964
        %2384 = vmatprep.subr.mxu0 0.0
        %2385 = vmatpush1.msra.mxu0 %v1965
        %2386 = vmatprep.subr.mxu0 0.0
        %2387 = vmatpush1.msra.mxu0 %v1966
        %2388 = vmatprep.subr.mxu0 0.0
        %2389 = vmatpush1.msra.mxu0 %v1967
        %2390 = vmatprep.subr.mxu0 0.0
        %2391 = vmatpush1.msra.mxu0 %v1968
        %2392 = vmatprep.subr.mxu0 0.0
        %2393 = vmatpush1.msra.mxu0 %v1969
        %2394 = vmatprep.subr.mxu0 0.0
        %2395 = vmatpush1.msra.mxu0 %v1970
        %2396 = vmatprep.subr.mxu0 0.0
        %2397 = vmatpush1.msra.mxu0 %v1971
        %2398 = vmatprep.subr.mxu0 0.0
        %2399 = vmatpush1.msra.mxu0 %v1972
        %2400 = vmatprep.subr.mxu0 0.0
        %2401 = vmatpush1.msra.mxu0 %v1973
        %2402 = vmatprep.subr.mxu0 0.0
        %2403 = vmatpush1.msra.mxu0 %v1974
        %2404 = vmatprep.subr.mxu0 0.0
        %2405 = vmatpush1.msra.mxu0 %v1975
        %2406 = vmatprep.subr.mxu0 0.0
        %2407 = vmatpush1.msra.mxu0 %v1976
        %2408 = vmatprep.subr.mxu0 0.0
        %2409 = vmatpush1.msra.mxu0 %v1977
        %2410 = vmatprep.subr.mxu0 0.0
        %2411 = vmatpush1.msra.mxu0 %v1978
        %2412 = vmatprep.subr.mxu0 0.0
        %2413 = vmatpush1.msra.mxu0 %v1979
        %2414 = vmatprep.subr.mxu0 0.0
        %2415 = vmatpush1.msra.mxu0 %v1980
        %2416 = vmatprep.subr.mxu0 0.0
        %2417 = vmatpush1.msra.mxu0 %v1981
        %2418 = vmatprep.subr.mxu0 0.0
        %2419 = vmatpush1.msra.mxu0 %v1982
        %2420 = vmatprep.subr.mxu0 0.0
        %2421 = vmatpush1.msra.mxu0 %v1983
        %2422 = vmatprep.subr.mxu0 0.0
        %2423 = vmatpush1.msra.mxu0 %v1984
        %2424 = vmatprep.subr.mxu0 0.0
        %2425 = vmatpush1.msra.mxu0 %v1985
        %2426 = vmatprep.subr.mxu0 0.0
        %2427 = vmatpush1.msra.mxu0 %v1986
        %2428 = vmatprep.subr.mxu0 0.0
        %2429 = vmatpush1.msra.mxu0 %v1987
        %2430 = vmatprep.subr.mxu0 0.0
        %2431 = vmatpush1.msra.mxu0 %v1988
        %2432 = vmatprep.subr.mxu0 0.0
        %2433 = vmatpush1.msra.mxu0 %v1989
        %2434 = vmatprep.subr.mxu0 0.0
        %2435 = vmatpush1.msra.mxu0 %v1990
        %2436 = vmatprep.subr.mxu0 0.0
        %2437 = vmatpush1.msra.mxu0 %v1991
        %2438 = vmatprep.subr.mxu0 0.0
        %2439 = vmatpush1.msra.mxu0 %v1992
        %2440 = vmatprep.mubr.f32.mxu0 %v1826
        %2441 = vmatmul.mubr.f32.gmra.mrb[0].mxu0 %v1825
        %v2442 = vpop.f32.mrb[0].mxu0
        %v2443 = vadd.f32 %v2373, %v2442
        %v2444 = vpop.f32.mrb[0].mxu0
        %2445 = vdwg.mxu0
        %2446 = vmatprep.subr.mxu0 0.0
        %2447 = vmatpush1.msra.mxu0 %v1993
        %2448 = vmatprep.subr.mxu0 0.0
        %2449 = vmatpush1.msra.mxu0 %v1994
        %2450 = vmatprep.subr.mxu0 0.0
        %2451 = vmatpush1.msra.mxu0 %v1995
        %2452 = vmatprep.subr.mxu0 0.0
        %2453 = vmatpush1.msra.mxu0 %v1996
        %2454 = vmatprep.subr.mxu0 0.0
        %2455 = vmatpush1.msra.mxu0 %v1997
        %2456 = vmatprep.subr.mxu0 0.0
        %2457 = vmatpush1.msra.mxu0 %v1998
        %2458 = vmatprep.subr.mxu0 0.0
        %2459 = vmatpush1.msra.mxu0 %v1999
        %2460 = vmatprep.subr.mxu0 0.0
        %2461 = vmatpush1.msra.mxu0 %v2000
        %2462 = vmatprep.subr.mxu0 0.0
        %2463 = vmatpush1.msra.mxu0 %v2001
        %2464 = vmatprep.subr.mxu0 0.0
        %2465 = vmatpush1.msra.mxu0 %v2002
        %2466 = vmatprep.subr.mxu0 0.0
        %2467 = vmatpush1.msra.mxu0 %v2003
        %2468 = vmatprep.subr.mxu0 0.0
        %2469 = vmatpush1.msra.mxu0 %v2004
        %2470 = vmatprep.subr.mxu0 0.0
        %2471 = vmatpush1.msra.mxu0 %v2005
        %2472 = vmatprep.subr.mxu0 0.0
        %2473 = vmatpush1.msra.mxu0 %v2006
        %2474 = vmatprep.subr.mxu0 0.0
        %2475 = vmatpush1.msra.mxu0 %v2007
        %2476 = vmatprep.subr.mxu0 0.0
        %2477 = vmatpush1.msra.mxu0 %v2008
        %2478 = vmatprep.subr.mxu0 0.0
        %2479 = vmatpush1.msra.mxu0 %v2009
        %2480 = vmatprep.subr.mxu0 0.0
        %2481 = vmatpush1.msra.mxu0 %v2010
        %2482 = vmatprep.subr.mxu0 0.0
        %2483 = vmatpush1.msra.mxu0 %v2011
        %2484 = vmatprep.subr.mxu0 0.0
        %2485 = vmatpush1.msra.mxu0 %v2012
        %2486 = vmatprep.subr.mxu0 0.0
        %2487 = vmatpush1.msra.mxu0 %v2013
        %2488 = vmatprep.subr.mxu0 0.0
        %2489 = vmatpush1.msra.mxu0 %v2014
        %2490 = vmatprep.subr.mxu0 0.0
        %2491 = vmatpush1.msra.mxu0 %v2015
        %2492 = vmatprep.subr.mxu0 0.0
        %2493 = vmatpush1.msra.mxu0 %v2016
        %2494 = vmatprep.subr.mxu0 0.0
        %2495 = vmatpush1.msra.mxu0 %v2017
        %2496 = vmatprep.subr.mxu0 0.0
        %2497 = vmatpush1.msra.mxu0 %v2018
        %2498 = vmatprep.subr.mxu0 0.0
        %2499 = vmatpush1.msra.mxu0 %v2019
        %2500 = vmatprep.subr.mxu0 0.0
        %2501 = vmatpush1.msra.mxu0 %v2020
        %2502 = vmatprep.subr.mxu0 0.0
        %2503 = vmatpush1.msra.mxu0 %v2021
        %2504 = vmatprep.subr.mxu0 0.0
        %2505 = vmatpush1.msra.mxu0 %v2022
        %2506 = vmatprep.subr.mxu0 0.0
        %2507 = vmatpush1.msra.mxu0 %v2023
        %2508 = vmatprep.subr.mxu0 0.0
        %2509 = vmatpush1.msra.mxu0 %v2024
        %2510 = vmatprep.mubr.f32.mxu0 %v1828
        %2511 = vmatmul.mubr.f32.gmra.mrb[0].mxu0 %v1827
        %v2512 = vpop.f32.mrb[0].mxu0
        %v2513 = vadd.f32 %v2443, %v2512
        %v2514 = vpop.f32.mrb[0].mxu0
        %2515 = vdwg.mxu0
        %2516 = vmatprep.subr.mxu0 0.0
        %2517 = vmatpush1.msra.mxu0 %v2025
        %2518 = vmatprep.subr.mxu0 0.0
        %2519 = vmatpush1.msra.mxu0 %v2026
        %2520 = vmatprep.subr.mxu0 0.0
        %2521 = vmatpush1.msra.mxu0 %v2027
        %2522 = vmatprep.subr.mxu0 0.0
        %2523 = vmatpush1.msra.mxu0 %v2028
        %2524 = vmatprep.subr.mxu0 0.0
        %2525 = vmatpush1.msra.mxu0 %v2029
        %2526 = vmatprep.subr.mxu0 0.0
        %2527 = vmatpush1.msra.mxu0 %v2030
        %2528 = vmatprep.subr.mxu0 0.0
        %2529 = vmatpush1.msra.mxu0 %v2031
        %2530 = vmatprep.subr.mxu0 0.0
        %2531 = vmatpush1.msra.mxu0 %v2032
        %2532 = vmatprep.subr.mxu0 0.0
        %2533 = vmatpush1.msra.mxu0 %v2033
        %2534 = vmatprep.subr.mxu0 0.0
        %2535 = vmatpush1.msra.mxu0 %v2034
        %2536 = vmatprep.subr.mxu0 0.0
        %2537 = vmatpush1.msra.mxu0 %v2035
        %2538 = vmatprep.subr.mxu0 0.0
        %2539 = vmatpush1.msra.mxu0 %v2036
        %2540 = vmatprep.subr.mxu0 0.0
        %2541 = vmatpush1.msra.mxu0 %v2037
        %2542 = vmatprep.subr.mxu0 0.0
        %2543 = vmatpush1.msra.mxu0 %v2038
        %2544 = vmatprep.subr.mxu0 0.0
        %2545 = vmatpush1.msra.mxu0 %v2039
        %2546 = vmatprep.subr.mxu0 0.0
        %2547 = vmatpush1.msra.mxu0 %v2040
        %2548 = vmatprep.subr.mxu0 0.0
        %2549 = vmatpush1.msra.mxu0 %v2041
        %2550 = vmatprep.subr.mxu0 0.0
        %2551 = vmatpush1.msra.mxu0 %v2042
        %2552 = vmatprep.subr.mxu0 0.0
        %2553 = vmatpush1.msra.mxu0 %v2043
        %2554 = vmatprep.subr.mxu0 0.0
        %2555 = vmatpush1.msra.mxu0 %v2044
        %2556 = vmatprep.subr.mxu0 0.0
        %2557 = vmatpush1.msra.mxu0 %v2045
        %2558 = vmatprep.subr.mxu0 0.0
        %2559 = vmatpush1.msra.mxu0 %v2046
        %2560 = vmatprep.subr.mxu0 0.0
        %2561 = vmatpush1.msra.mxu0 %v2047
        %2562 = vmatprep.subr.mxu0 0.0
        %2563 = vmatpush1.msra.mxu0 %v2048
        %2564 = vmatprep.subr.mxu0 0.0
        %2565 = vmatpush1.msra.mxu0 %v2049
        %2566 = vmatprep.subr.mxu0 0.0
        %2567 = vmatpush1.msra.mxu0 %v2050
        %2568 = vmatprep.subr.mxu0 0.0
        %2569 = vmatpush1.msra.mxu0 %v2051
        %2570 = vmatprep.subr.mxu0 0.0
        %2571 = vmatpush1.msra.mxu0 %v2052
        %2572 = vmatprep.subr.mxu0 0.0
        %2573 = vmatpush1.msra.mxu0 %v2053
        %2574 = vmatprep.subr.mxu0 0.0
        %2575 = vmatpush1.msra.mxu0 %v2054
        %2576 = vmatprep.subr.mxu0 0.0
        %2577 = vmatpush1.msra.mxu0 %v2055
        %2578 = vmatprep.subr.mxu0 0.0
        %2579 = vmatpush1.msra.mxu0 %v2056
        %2580 = vmatprep.mubr.f32.mxu0 %v1830
        %2581 = vmatmul.mubr.f32.gmra.mrb[0].mxu0 %v1829
        %v2582 = vpop.f32.mrb[0].mxu0
        %v2583 = vadd.f32 %v2513, %v2582
        %v2584 = vpop.f32.mrb[0].mxu0
        %2585 = vdwg.mxu0
        %2586 = vmatprep.subr.mxu0 0.0
        %2587 = vmatpush1.msra.mxu0 %v2057
        %2588 = vmatprep.subr.mxu0 0.0
        %2589 = vmatpush1.msra.mxu0 %v2058
        %2590 = vmatprep.subr.mxu0 0.0
        %2591 = vmatpush1.msra.mxu0 %v2059
        %2592 = vmatprep.subr.mxu0 0.0
        %2593 = vmatpush1.msra.mxu0 %v2060
        %2594 = vmatprep.subr.mxu0 0.0
        %2595 = vmatpush1.msra.mxu0 %v2061
        %2596 = vmatprep.subr.mxu0 0.0
        %2597 = vmatpush1.msra.mxu0 %v2062
        %2598 = vmatprep.subr.mxu0 0.0
        %2599 = vmatpush1.msra.mxu0 %v2063
        %2600 = vmatprep.subr.mxu0 0.0
        %2601 = vmatpush1.msra.mxu0 %v2064
        %2602 = vmatprep.subr.mxu0 0.0
        %2603 = vmatpush1.msra.mxu0 %v2065
        %2604 = vmatprep.subr.mxu0 0.0
        %2605 = vmatpush1.msra.mxu0 %v2066
        %2606 = vmatprep.subr.mxu0 0.0
        %2607 = vmatpush1.msra.mxu0 %v2067
        %2608 = vmatprep.subr.mxu0 0.0
        %2609 = vmatpush1.msra.mxu0 %v2068
        %2610 = vmatprep.subr.mxu0 0.0
        %2611 = vmatpush1.msra.mxu0 %v2069
        %2612 = vmatprep.subr.mxu0 0.0
        %2613 = vmatpush1.msra.mxu0 %v2070
        %2614 = vmatprep.subr.mxu0 0.0
        %2615 = vmatpush1.msra.mxu0 %v2071
        %2616 = vmatprep.subr.mxu0 0.0
        %2617 = vmatpush1.msra.mxu0 %v2072
        %2618 = vmatprep.subr.mxu0 0.0
        %2619 = vmatpush1.msra.mxu0 %v2073
        %2620 = vmatprep.subr.mxu0 0.0
        %2621 = vmatpush1.msra.mxu0 %v2074
        %2622 = vmatprep.subr.mxu0 0.0
        %2623 = vmatpush1.msra.mxu0 %v2075
        %2624 = vmatprep.subr.mxu0 0.0
        %2625 = vmatpush1.msra.mxu0 %v2076
        %2626 = vmatprep.subr.mxu0 0.0
        %2627 = vmatpush1.msra.mxu0 %v2077
        %2628 = vmatprep.subr.mxu0 0.0
        %2629 = vmatpush1.msra.mxu0 %v2078
        %2630 = vmatprep.subr.mxu0 0.0
        %2631 = vmatpush1.msra.mxu0 %v2079
        %2632 = vmatprep.subr.mxu0 0.0
        %2633 = vmatpush1.msra.mxu0 %v2080
        %2634 = vmatprep.subr.mxu0 0.0
        %2635 = vmatpush1.msra.mxu0 %v2081
        %2636 = vmatprep.subr.mxu0 0.0
        %2637 = vmatpush1.msra.mxu0 %v2082
        %2638 = vmatprep.subr.mxu0 0.0
        %2639 = vmatpush1.msra.mxu0 %v2083
        %2640 = vmatprep.subr.mxu0 0.0
        %2641 = vmatpush1.msra.mxu0 %v2084
        %2642 = vmatprep.subr.mxu0 0.0
        %2643 = vmatpush1.msra.mxu0 %v2085
        %2644 = vmatprep.subr.mxu0 0.0
        %2645 = vmatpush1.msra.mxu0 %v2086
        %2646 = vmatprep.subr.mxu0 0.0
        %2647 = vmatpush1.msra.mxu0 %v2087
        %2648 = vmatprep.subr.mxu0 0.0
        %2649 = vmatpush1.msra.mxu0 %v2088
        %2650 = vmatprep.mubr.f32.mxu0 %v1832
        %2651 = vmatmul.mubr.f32.gmra.mrb[0].mxu0 %v1831
        %v2652 = vpop.f32.mrb[0].mxu0
        %v2653 = vadd.f32 %v2583, %v2652
        %v2654 = vpop.f32.mrb[0].mxu0
        %2655 = vdwg.mxu0
        %v2656 = vadd.f32 %v1097, %v2653
        %v2657 = vsel %vm502, %v2656, 0.0
        %2658 = vadd.xlane.f32.xlu0 %v2657
        %v2659 = vpop.xlane.xlu0 %2658
        %v2660 = vmul.f32 %v2659, %v1071
        %v2661 = vsub.f32 %v2656, %v2660
        %v2662 = vmul.f32 %v2661, %v2661
        %v2663 = vsel %vm502, %v2662, 0.0
        %2664 = vadd.xlane.f32.xlu0 %v2663
        %v2665 = vpop.xlane.xlu0 %2664
        %v2666 = vmul.f32 %v2665, %v1071
        %v2667 = vadd.f32 %v2666, 1e-05
        %v2668 = vrsqrt.pop %v2667
        %v2669 = vmul.f32 %v2661, %v2668
        %v2670 = vld [vmem:[%s11] sm:$0x1]
        %v2672 = vlaneseq
        %v2673 = vshrl.u32 %v2672, 7
        %v2674 = vsub.s32 0, %v2673
        %v2675 = vrot.slane %v2670, %v2674
        %v2677 = vmul.f32 %v2669, %v2675
        %v2678 = vld [vmem:[%s12] sm:$0x1]
        %v2680 = vlaneseq
        %v2681 = vshrl.u32 %v2680, 7
        %v2682 = vsub.s32 0, %v2681
        %v2683 = vrot.slane %v2678, %v2682
        %v2685 = vadd.f32 %v2677, %v2683
        %vm2686 = vcmp.ge.f32.partialorder %v2685, 0.0
        %v2687 = vmul.f32 %v2685, 0.01
        %v2688 = vsel %vm2686, %v2685, %v2687
        %v2689 = vld [vmem:[%s13] sm:$0xff]
        %v2690 = vld [vmem:[%s13 + $0x8] sm:$0xff]
        %v2691 = vld [vmem:[%s13 + $0x10] sm:$0xff]
        %v2692 = vld [vmem:[%s13 + $0x18] sm:$0xff]
        %v2693 = vld [vmem:[%s14] sm:$0x1]
        %v2695 = vlaneseq
        %v2696 = vshrl.u32 %v2695, 7
        %v2697 = vsub.s32 0, %v2696
        %v2698 = vrot.slane %v2693, %v2697
        %v2701 = vsel %vm502, %v2688, 0
        %2703 = vmatprep.subr.mxu0 0.0
        %2704 = vmatpush1.msra.mxu0 %v2689
        %2705 = vmatprep.subr.mxu0 0.0
        %2706 = vmatpush1.msra.mxu0 %v2690
        %2707 = vmatprep.subr.mxu0 0.0
        %2708 = vmatpush1.msra.mxu0 %v2691
        %2709 = vmatprep.subr.mxu0 0.0
        %2710 = vmatpush1.msra.mxu0 %v2692
        %2711 = vmatprep.subr.mxu0 0.0
        %2712 = vmatpush1.msra.mxu0 0.0
        %2713 = vmatprep.subr.mxu0 0.0
        %2714 = vmatpush1.msra.mxu0 0.0
        %2715 = vmatprep.subr.mxu0 0.0
        %2716 = vmatpush1.msra.mxu0 0.0
        %2717 = vmatprep.subr.mxu0 0.0
        %2718 = vmatpush1.msra.mxu0 0.0
        %2719 = vmatprep.subr.mxu0 0.0
        %2720 = vmatpush1.msra.mxu0 0.0
        %2721 = vmatprep.subr.mxu0 0.0
        %2722 = vmatpush1.msra.mxu0 0.0
        %2723 = vmatprep.subr.mxu0 0.0
        %2724 = vmatpush1.msra.mxu0 0.0
        %2725 = vmatprep.subr.mxu0 0.0
        %2726 = vmatpush1.msra.mxu0 0.0
        %2727 = vmatprep.subr.mxu0 0.0
        %2728 = vmatpush1.msra.mxu0 0.0
        %2729 = vmatprep.subr.mxu0 0.0
        %2730 = vmatpush1.msra.mxu0 0.0
        %2731 = vmatprep.subr.mxu0 0.0
        %2732 = vmatpush1.msra.mxu0 0.0
        %2733 = vmatprep.subr.mxu0 0.0
        %2734 = vmatpush1.msra.mxu0 0.0
        %2735 = vmatprep.subr.mxu0 0.0
        %2736 = vmatpush1.msra.mxu0 0.0
        %2737 = vmatprep.subr.mxu0 0.0
        %2738 = vmatpush1.msra.mxu0 0.0
        %2739 = vmatprep.subr.mxu0 0.0
        %2740 = vmatpush1.msra.mxu0 0.0
        %2741 = vmatprep.subr.mxu0 0.0
        %2742 = vmatpush1.msra.mxu0 0.0
        %2743 = vmatprep.subr.mxu0 0.0
        %2744 = vmatpush1.msra.mxu0 0.0
        %2745 = vmatprep.subr.mxu0 0.0
        %2746 = vmatpush1.msra.mxu0 0.0
        %2747 = vmatprep.subr.mxu0 0.0
        %2748 = vmatpush1.msra.mxu0 0.0
        %2749 = vmatprep.subr.mxu0 0.0
        %2750 = vmatpush1.msra.mxu0 0.0
        %2751 = vmatprep.subr.mxu0 0.0
        %2752 = vmatpush1.msra.mxu0 0.0
        %2753 = vmatprep.subr.mxu0 0.0
        %2754 = vmatpush1.msra.mxu0 0.0
        %2755 = vmatprep.subr.mxu0 0.0
        %2756 = vmatpush1.msra.mxu0 0.0
        %2757 = vmatprep.subr.mxu0 0.0
        %2758 = vmatpush1.msra.mxu0 0.0
        %2759 = vmatprep.subr.mxu0 0.0
        %2760 = vmatpush1.msra.mxu0 0.0
        %2761 = vmatprep.subr.mxu0 0.0
        %2762 = vmatpush1.msra.mxu0 0.0
        %2763 = vmatprep.subr.mxu0 0.0
        %2764 = vmatpush1.msra.mxu0 0.0
        %2765 = vmatprep.subr.mxu0 0.0
        %2766 = vmatpush1.msra.mxu0 0.0
        %2767 = vmatprep.mubr.f32.mxu0 0.0
        %2768 = vmatmul.mubr.f32.gmra.mrb[0].mxu0 %v2701
        %v2769 = vpop.f32.mrb[0].mxu0
        %v2770 = vadd.f32 %v2698, %v2769
        %v2771 = vpop.f32.mrb[0].mxu0
        %2772 = vdwg.mxu0
        %2773 = vst.msk [vmem:[%s485] sm:$0xff] %vm659, %v2770
        %s2774 = sand.u32 %s357, 1
        %s2775 = scalar_lea.sflag [#allocation3], %s2774
        %s2776 = sand.u32 %s357, 1
        %s2777 = smul.addr %s2776, 8
        %s2778 = scalar_lea.vmem [#allocation2], %s2777
        // Predicated region
        $region81: #{tpu_custom_call.1} parent=79 // pred_check
          %p2779 = pneg %p367
        $region82: #{tpu_custom_call.1} parent=79 // pred_check_branch
          %2781 = sbr.rel (%p2779) target = $region84
        $region83: #{tpu_custom_call.1} parent=79 // pred_region
          %s2783 = ssub.s32 128, 128
          %2784 = vsyncadd %s2775, %s2783
          %s2785 = smul.addr %s29, 128
          %s2786 = scalar_lea.hbm %s15, %s2785
          %s2788 = sshll.u32 %s2778, 4
          %s2789 = int_to_ptr.vmem [resolvable:$true] %s2788
          %2791 = dma.vmem_to_hbm [thread:$0]  %s2789, 128, %s2786, %s2775
        $region84: #{tpu_custom_call.1} parent=79 // pred_fallthru
          _
      $region80: #{tpu_custom_call.1} parent=5 // pred_fallthru
        _
      %p2792 = scmp.le.s32.totalorder 2, %s24
      // Predicated region
      $region85: #{tpu_custom_call.1} parent=5 // pred_check
        %p2793 = pneg %p2792
      $region86: #{tpu_custom_call.1} parent=5 // pred_check_branch
        %2795 = sbr.rel (%p2793) target = $region88
      $region87: #{tpu_custom_call.1} parent=5 // pred_region
        %s2796 = ssub.s32 %s24, 2
        // Predicated region
        $region89: #{tpu_custom_call.1} parent=87 // pred_check
          %p2797 = pneg %p373
        $region90: #{tpu_custom_call.1} parent=87 // pred_check_branch
          %2799 = sbr.rel (%p2797) target = $region92
        $region91: #{tpu_custom_call.1} parent=87 // pred_region
          %s2800 = sand.u32 %s358, 1
          %s2801 = scalar_lea.sflag [#allocation3], %s2800
          %s2802 = sand.u32 %s358, 1
          %s2803 = smul.addr %s2802, 8
          %s2804 = scalar_lea.vmem [#allocation2], %s2803
          %2805 = dma.done %s2801, 128
        $region92: #{tpu_custom_call.1} parent=87 // pred_fallthru
          _
      $region88: #{tpu_custom_call.1} parent=5 // pred_fallthru
        _
    $region6: #{tpu_custom_call.1} parent=1 // loop_footer
      %s28 = sadd.s32 1, %s24
    $region7: #{tpu_custom_call.1} parent=1 // loop_footer_branch
      %23 = sbr.rel target = $region3
    $region8: #{tpu_custom_call.1} parent=1 // loop_exit
      _
    %2806 = vsyncpa [#allocation3], 1
    %s2807 = scalar_lea.sflag [#allocation3], 1
    %2808 = vsyncpa %s2807, 1

</llo_original>
